<compile_context>
chip_gen: v6e
topology: v6e:2x2x1
jax: 0.10.0
libtpu: 0.0.40
codegen_flags: <defaults>
</compile_context>

<pallas_src>
import functools

import numpy as np
import jax
import jax.numpy as jnp
from jax.experimental import pallas as pl
from jax.experimental.pallas import tpu as pltpu

# ---- module configuration (MNIST branch of GenerativeClassifier.__init__) ----
N_CLASSES = 10
DIMS = (28, 28)
NDIM_TOT = int(np.prod(DIMS))        # 784
MU_INIT = 5.0                        # args['model']['mu_init']
# mu_empirical = False, wim = False, feed_forward = False (default INN path)

C_PAD = 128                          # class axis padded to one full lane register
NEG = -1e30                          # masking value for padded class lanes
TILE_B_MAX = 1024                    # ~3.2 MiB z tile; double-buffered this stays
                                     # well inside the scoped-VMEM default on
                                     # v5e (16 MiB) / v6e (32 MiB) / v7x (32 MiB)


def init_mu_phi():
    """Deterministic parameter init, mirrors the PyTorch __init__."""
    init_scale = MU_INIT / np.sqrt(2 * NDIM_TOT // N_CLASSES)
    mu = np.zeros((N_CLASSES, NDIM_TOT), dtype=np.float32)
    for k in range(NDIM_TOT // N_CLASSES):
        mu[:, N_CLASSES * k:N_CLASSES * (k + 1)] = init_scale * np.eye(N_CLASSES)
    phi = np.zeros((N_CLASSES,), dtype=np.float32)
    return jnp.asarray(mu), jnp.asarray(phi)


def _round_up(x, m):
    return ((x + m - 1) // m) * m


def _gen_cls_kernel(z_ref, lbl_ref, muT_ref, nhmusq_ref, logwy_ref, out_ref,
                    *, n_classes, inv_ndim):
    z = z_ref[...]                     # (TB, 784)  f32
    labels = lbl_ref[...]              # (TB, 1)    int32
    neg_half_musq = nhmusq_ref[...]    # (1, 128)   f32  (-0.5*||mu_j||^2, pad lanes 0)
    log_wy = logwy_ref[...]            # (1, 128)   f32  (log_softmax(phi), pad lanes NEG)

    # logits_ij = -0.5 * ||z_i - mu_j||^2 = z_i.mu_j - 0.5||z_i||^2 - 0.5||mu_j||^2
    # NOTE: this expansion is cancellation-prone, so keep HIGHEST here; on
    # v5e it can be relaxed to Precision.HIGH after re-validating tolerances.
    z_mu = jnp.dot(z, muT_ref[...], preferred_element_type=jnp.float32,
                   precision=jax.lax.Precision.HIGHEST)               # (TB, 128), MXU
    z_sq = jnp.sum(z * z, axis=1, keepdims=True)                      # (TB, 1)
    logits = z_mu - 0.5 * z_sq + neg_half_musq                        # (TB, 128)

    # masked logsumexp over classes; padded lanes are killed by log_wy == NEG
    # (exp underflows to exactly 0).
    t = logits + log_wy
    t_max = jnp.max(t, axis=1, keepdims=True)
    lse = jnp.log(jnp.sum(jnp.exp(t - t_max), axis=1, keepdims=True)) + t_max

    lane = jax.lax.broadcasted_iota(jnp.int32, logits.shape, 1)       # (TB, 128)
    onehot = lane == labels                                           # (TB, 128) bool

    # Single masked reduce gives both class-conditional losses:
    #   0.5*zz[label] = -logits[label]            ->  L_cNLL = -sel_logit / ndim
    #   log_softmax(t)[label] - log_wy[label]
    #     = logits[label] - lse                   ->  L_y    =  sel_logit - lse
    sel_logit = jnp.sum(jnp.where(onehot, logits, 0.0),
                        axis=1, keepdims=True)                        # (TB, 1)

    # jac == 0 for the identity-flatten stand-in INN (see TODO in the wrapper).
    l_x = -lse * inv_ndim                                             # (TB, 1)
    l_cnll = -sel_logit * inv_ndim                                    # (TB, 1)
    l_y = sel_logit - lse                                             # (TB, 1)

    # Single lane-dense output: lanes [0, n_classes) = logits,
    # lane n_classes = L_x, +1 = L_cNLL, +2 = L_y, rest = 0.
    out_ref[...] = jnp.where(lane < n_classes, logits,
                   jnp.where(lane == n_classes, l_x,
                   jnp.where(lane == n_classes + 1, l_cnll,
                   jnp.where(lane == n_classes + 2, l_y, 0.0))))


@functools.partial(jax.jit, static_argnames=("loss_mean",))
def generative_classifier_forward(x, y, mu, phi, loss_mean=True):
    B = x.shape[0]
    # TODO(synk): the invertible network (FrEIA coupling INN from inn_architecture)
    # and its log-Jacobian are external modules not provided here; the stand-in is
    # the identity flatten with jac = 0.  When the real INN is wired in, deliver
    # jac as an extra lane of the packed (B, 128) output instead of a (B, 1) block.
    z = x.reshape(B, NDIM_TOT).astype(jnp.float32)

    # TODO(synk): the kernel assumes hard (one-hot) targets; the torch module also
    # accepts label-smoothed y, in which case L_y needs the soft targets themselves.
    labels = jnp.argmax(y, axis=1).astype(jnp.int32)[:, None]         # (B, 1)

    # Batch-independent parameter prep, hoisted out of the kernel (tiny arrays).
    muT_p = jnp.zeros((NDIM_TOT, C_PAD), jnp.float32).at[:, :N_CLASSES].set(mu.T)
    nhmusq_p = jnp.zeros((1, C_PAD), jnp.float32).at[0, :N_CLASSES].set(
        -0.5 * jnp.sum(mu * mu, axis=1))
    logwy_p = jnp.full((1, C_PAD), NEG, jnp.float32).at[0, :N_CLASSES].set(
        jax.nn.log_softmax(phi))

    # Batch tiling: largest multiple-of-8 tile up to TILE_B_MAX; pad B up to a
    # tile multiple (padded rows are discarded after the call).
    tb = min(TILE_B_MAX, _round_up(B, 8))
    b_pad = _round_up(B, tb)
    z_p, lbl_p = z, labels
    if b_pad != B:
        z_p = jnp.pad(z, ((0, b_pad - B), (0, 0)))
        lbl_p = jnp.pad(labels, ((0, b_pad - B), (0, 0)))
    grid = (b_pad // tb,)

    kernel = functools.partial(_gen_cls_kernel,
                               n_classes=N_CLASSES, inv_ndim=1.0 / NDIM_TOT)

    packed = pl.pallas_call(
        kernel,
        out_shape=jax.ShapeDtypeStruct((b_pad, C_PAD), jnp.float32),
        grid=grid,
        in_specs=[
            pl.BlockSpec((tb, NDIM_TOT), lambda i: (i, 0)),     # z, batch-tiled
            pl.BlockSpec((tb, 1), lambda i: (i, 0)),            # labels, batch-tiled
            pl.BlockSpec((NDIM_TOT, C_PAD), lambda i: (0, 0)),  # mu^T, resident
            pl.BlockSpec((1, C_PAD), lambda i: (0, 0)),         # -0.5*||mu||^2
            pl.BlockSpec((1, C_PAD), lambda i: (0, 0)),         # log_softmax(phi)
        ],
        out_specs=pl.BlockSpec((tb, C_PAD), lambda i: (i, 0)),
        compiler_params=pltpu.CompilerParams(
            dimension_semantics=("parallel",)),
    )(z_p, lbl_p, muT_p, nhmusq_p, logwy_p)

    packed = packed[:B]
    logits = packed[:, :N_CLASSES]
    L_x = packed[:, N_CLASSES]
    L_cNLL = packed[:, N_CLASSES + 1]
    L_y = packed[:, N_CLASSES + 2]
    acc = jnp.mean(
        (jnp.argmax(y, axis=1) == jnp.argmax(logits, axis=1)).astype(jnp.float32))

    losses = {
        "L_x_tr": L_x,
        "logits_tr": logits,
        "L_cNLL_tr": L_cNLL,
        "L_y_tr": L_y,
        "acc_tr": acc,
    }
    if loss_mean:
        losses = {k: jnp.mean(v) for k, v in losses.items()}
    return losses


def reference_forward(x, y, mu, phi, loss_mean=True):
    """Pure-JAX reference replicating the PyTorch forward semantics."""
    B = x.shape[0]
    z = x.reshape(B, NDIM_TOT).astype(jnp.float32)
    jac = jnp.zeros((B,), jnp.float32)
    zz = (-2.0 * jnp.dot(z, mu.T, precision=jax.lax.Precision.HIGHEST)
          + jnp.sum(z ** 2, axis=1, keepdims=True)
          + jnp.sum(mu ** 2, axis=1)[None, :])
    log_wy = jax.nn.log_softmax(phi)[None, :]
    logits = -0.5 * zz
    L_x = (-jax.scipy.special.logsumexp(logits + log_wy, axis=1) - jac) / NDIM_TOT
    L_cNLL = (0.5 * jnp.sum(zz * jnp.round(y), axis=1) - jac) / NDIM_TOT
    L_y = jnp.sum((jax.nn.log_softmax(logits + log_wy, axis=1) - log_wy) * y, axis=1)
    acc = jnp.mean(
        (jnp.argmax(y, axis=1) == jnp.argmax(logits, axis=1)).astype(jnp.float32))
    losses = {"L_x_tr": L_x, "logits_tr": logits, "L_cNLL_tr": L_cNLL,
              "L_y_tr": L_y, "acc_tr": acc}
    if loss_mean:
        losses = {k: jnp.mean(v) for k, v in losses.items()}
    return losses


if __name__ == "__main__":
    key = jax.random.PRNGKey(0)
    kx, kl = jax.random.split(key)

    B = 8
    x = jax.random.normal(kx, (B, 1, 28, 28), dtype=jnp.float32)  # NCHW, MNIST-shaped
    labels = jax.random.randint(kl, (B,), 0, N_CLASSES)
    y = jax.nn.one_hot(labels, N_CLASSES, dtype=jnp.float32)

    mu, phi = init_mu_phi()

    out = generative_classifier_forward(x, y, mu, phi, loss_mean=True)
    out = jax.block_until_ready(out)

    ref = reference_forward(x, y, mu, phi, loss_mean=True)
    for k in ["L_x_tr", "logits_tr", "L_cNLL_tr", "L_y_tr", "acc_tr"]:
        np.testing.assert_allclose(np.asarray(out[k]), np.asarray(ref[k]),
                                   rtol=1e-5, atol=1e-3)

    print("KERNEL_OK")
</pallas_src>

<mosaic_0001>
module attributes {stable_mosaic.version = 11 : i64} {
  func.func @_gen_cls_kernel(%arg0: i32, %arg1: memref<8x784xf32, #tpu.memory_space<vmem>>, %arg2: memref<8x1xi32, #tpu.memory_space<vmem>>, %arg3: memref<784x128xf32, #tpu.memory_space<vmem>>, %arg4: memref<1x128xf32, #tpu.memory_space<vmem>>, %arg5: memref<1x128xf32, #tpu.memory_space<vmem>>, %arg6: memref<8x128xf32, #tpu.memory_space<vmem>>) attributes {dimension_semantics = [#tpu.dimension_semantics<parallel>], iteration_bounds = array<i64: 1>, scalar_prefetch = 0 : i64, scratch_operands = 0 : i64, tpu.core_type = #tpu.core_type<tc>, window_params = [{transform_indices = @transform_0, window_bounds = array<i64: 8, 784>}, {transform_indices = @transform_1, window_bounds = array<i64: 8, 1>}, {pipeline_mode = #tpu.pipeline_mode<synchronous>, transform_indices = @transform_2, window_bounds = array<i64: 784, 128>}, {pipeline_mode = #tpu.pipeline_mode<synchronous>, transform_indices = @transform_3, window_bounds = array<i64: 1, 128>}, {pipeline_mode = #tpu.pipeline_mode<synchronous>, transform_indices = @transform_4, window_bounds = array<i64: 1, 128>}, {transform_indices = @transform_5, window_bounds = array<i64: 8, 128>}]} {
    %c0 = arith.constant 0 : index
    %c0_0 = arith.constant 0 : index
    %0 = vector.load %arg1[%c0, %c0_0] : memref<8x784xf32, #tpu.memory_space<vmem>>, vector<8x784xf32>
    %c0_1 = arith.constant 0 : index
    %c0_2 = arith.constant 0 : index
    %1 = vector.load %arg2[%c0_1, %c0_2] : memref<8x1xi32, #tpu.memory_space<vmem>>, vector<8x1xi32>
    %c0_3 = arith.constant 0 : index
    %c0_4 = arith.constant 0 : index
    %2 = vector.load %arg4[%c0_3, %c0_4] : memref<1x128xf32, #tpu.memory_space<vmem>>, vector<1x128xf32>
    %c0_5 = arith.constant 0 : index
    %c0_6 = arith.constant 0 : index
    %3 = vector.load %arg5[%c0_5, %c0_6] : memref<1x128xf32, #tpu.memory_space<vmem>>, vector<1x128xf32>
    %c0_7 = arith.constant 0 : index
    %c0_8 = arith.constant 0 : index
    %4 = vector.load %arg3[%c0_7, %c0_8] : memref<784x128xf32, #tpu.memory_space<vmem>>, vector<784x128xf32>
    %cst = arith.constant dense<0.000000e+00> : vector<8x128xf32>
    %5 = tpu.matmul %0, %4, %cst {dimension_numbers = #tpu.dot_dimension_numbers<[1], [0], [0], [1], [0, 0, 1, 1], [], []>, precision = #tpu.contract_precision<fp32>} : vector<8x784xf32>, vector<784x128xf32>, vector<8x128xf32> -> vector<8x128xf32>
    %6 = arith.mulf %0, %0 : vector<8x784xf32>
    %cst_9 = arith.constant dense<0.000000e+00> : vector<8xf32>
    %7 = vector.multi_reduction <add>, %6, %cst_9 [1] : vector<8x784xf32> to vector<8xf32>
    %8 = vector.shape_cast %7 : vector<8xf32> to vector<8x1xf32>
    %cst_10 = arith.constant 5.000000e-01 : f32
    %9 = vector.broadcast %cst_10 : f32 to vector<8x1xf32>
    %10 = arith.mulf %9, %8 : vector<8x1xf32>
    %11 = vector.broadcast %10 : vector<8x1xf32> to vector<8x128xf32>
    %12 = arith.subf %5, %11 : vector<8x128xf32>
    %13 = vector.broadcast %2 : vector<1x128xf32> to vector<8x128xf32>
    %14 = arith.addf %12, %13 : vector<8x128xf32>
    %15 = vector.broadcast %3 : vector<1x128xf32> to vector<8x128xf32>
    %16 = arith.addf %14, %15 : vector<8x128xf32>
    %cst_11 = arith.constant dense<0xFF800000> : vector<8xf32>
    %17 = vector.multi_reduction <maximumf>, %16, %cst_11 [1] : vector<8x128xf32> to vector<8xf32>
    %18 = vector.shape_cast %17 : vector<8xf32> to vector<8x1xf32>
    %19 = vector.broadcast %18 : vector<8x1xf32> to vector<8x128xf32>
    %20 = arith.subf %16, %19 : vector<8x128xf32>
    %21 = math.exp %20 : vector<8x128xf32>
    %cst_12 = arith.constant dense<0.000000e+00> : vector<8xf32>
    %22 = vector.multi_reduction <add>, %21, %cst_12 [1] : vector<8x128xf32> to vector<8xf32>
    %23 = vector.shape_cast %22 : vector<8xf32> to vector<8x1xf32>
    %24 = math.log %23 : vector<8x1xf32>
    %25 = arith.addf %24, %18 : vector<8x1xf32>
    %26 = tpu.iota {dimensions = array<i32: 1>} : vector<8x128xi32>
    %27 = vector.broadcast %1 : vector<8x1xi32> to vector<8x128xi32>
    %28 = arith.cmpi eq, %26, %27 : vector<8x128xi32>
    %cst_13 = arith.constant 0.000000e+00 : f32
    %29 = vector.broadcast %cst_13 : f32 to vector<8x128xf32>
    %30 = arith.select %28, %14, %29 : vector<8x128xi1>, vector<8x128xf32>
    %cst_14 = arith.constant dense<0.000000e+00> : vector<8xf32>
    %31 = vector.multi_reduction <add>, %30, %cst_14 [1] : vector<8x128xf32> to vector<8xf32>
    %32 = vector.shape_cast %31 : vector<8xf32> to vector<8x1xf32>
    %cst_15 = arith.constant 0.000000e+00 : f32
    %33 = vector.broadcast %cst_15 : f32 to vector<8x1xf32>
    %34 = arith.subf %33, %25 : vector<8x1xf32>
    %cst_16 = arith.constant 0.00127551018 : f32
    %35 = vector.broadcast %cst_16 : f32 to vector<8x1xf32>
    %36 = arith.mulf %34, %35 : vector<8x1xf32>
    %cst_17 = arith.constant 0.000000e+00 : f32
    %37 = vector.broadcast %cst_17 : f32 to vector<8x1xf32>
    %38 = arith.subf %37, %32 : vector<8x1xf32>
    %cst_18 = arith.constant 0.00127551018 : f32
    %39 = vector.broadcast %cst_18 : f32 to vector<8x1xf32>
    %40 = arith.mulf %38, %39 : vector<8x1xf32>
    %41 = arith.subf %32, %25 : vector<8x1xf32>
    %c10_i32 = arith.constant 10 : i32
    %42 = vector.broadcast %c10_i32 : i32 to vector<8x128xi32>
    %43 = arith.cmpi slt, %26, %42 : vector<8x128xi32>
    %c10_i32_19 = arith.constant 10 : i32
    %44 = vector.broadcast %c10_i32_19 : i32 to vector<8x128xi32>
    %45 = arith.cmpi eq, %26, %44 : vector<8x128xi32>
    %c11_i32 = arith.constant 11 : i32
    %46 = vector.broadcast %c11_i32 : i32 to vector<8x128xi32>
    %47 = arith.cmpi eq, %26, %46 : vector<8x128xi32>
    %c12_i32 = arith.constant 12 : i32
    %48 = vector.broadcast %c12_i32 : i32 to vector<8x128xi32>
    %49 = arith.cmpi eq, %26, %48 : vector<8x128xi32>
    %cst_20 = arith.constant 0.000000e+00 : f32
    %50 = vector.shape_cast %41 : vector<8x1xf32> to vector<8x1xf32>
    %51 = vector.broadcast %50 : vector<8x1xf32> to vector<8x128xf32>
    %52 = vector.broadcast %cst_20 : f32 to vector<8x128xf32>
    %53 = arith.select %49, %51, %52 : vector<8x128xi1>, vector<8x128xf32>
    %54 = vector.shape_cast %40 : vector<8x1xf32> to vector<8x1xf32>
    %55 = vector.broadcast %54 : vector<8x1xf32> to vector<8x128xf32>
    %56 = arith.select %47, %55, %53 : vector<8x128xi1>, vector<8x128xf32>
    %57 = vector.shape_cast %36 : vector<8x1xf32> to vector<8x1xf32>
    %58 = vector.broadcast %57 : vector<8x1xf32> to vector<8x128xf32>
    %59 = arith.select %45, %58, %56 : vector<8x128xi1>, vector<8x128xf32>
    %60 = arith.select %43, %14, %59 : vector<8x128xi1>, vector<8x128xf32>
    %c0_21 = arith.constant 0 : index
    %c0_22 = arith.constant 0 : index
    %61 = vector.load %arg6[%c0_21, %c0_22] : memref<8x128xf32, #tpu.memory_space<vmem>>, vector<8x128xf32>
    tpu.vector_store %arg6[%c0_21, %c0_22], %60 {strides = array<i32>} : memref<8x128xf32, #tpu.memory_space<vmem>>, vector<8x128xf32>,
    return
  }
  func.func @transform_0(%arg0: i32) -> (i32, i32) {
    %c0_i32 = arith.constant 0 : i32
    %c0_i32_0 = arith.constant 0 : i32
    return %arg0, %c0_i32 : i32, i32
  }
  func.func @transform_1(%arg0: i32) -> (i32, i32) {
    %c0_i32 = arith.constant 0 : i32
    %c0_i32_0 = arith.constant 0 : i32
    return %arg0, %c0_i32 : i32, i32
  }
  func.func @transform_2(%arg0: i32) -> (i32, i32) {
    %c0_i32 = arith.constant 0 : i32
    %c0_i32_0 = arith.constant 0 : i32
    %c0_i32_1 = arith.constant 0 : i32
    return %c0_i32, %c0_i32_0 : i32, i32
  }
  func.func @transform_3(%arg0: i32) -> (i32, i32) {
    %c0_i32 = arith.constant 0 : i32
    %c0_i32_0 = arith.constant 0 : i32
    %c0_i32_1 = arith.constant 0 : i32
    return %c0_i32, %c0_i32_0 : i32, i32
  }
  func.func @transform_4(%arg0: i32) -> (i32, i32) {
    %c0_i32 = arith.constant 0 : i32
    %c0_i32_0 = arith.constant 0 : i32
    %c0_i32_1 = arith.constant 0 : i32
    return %c0_i32, %c0_i32_0 : i32, i32
  }
  func.func @transform_5(%arg0: i32) -> (i32, i32) {
    %c0_i32 = arith.constant 0 : i32
    %c0_i32_0 = arith.constant 0 : i32
    return %arg0, %c0_i32 : i32, i32
  }
}

</mosaic_0001>

<llo_original>
// kernel: generative_classifier_forward.1
$region0: #{generative_classifier_forward.1}
  #allocation0 [shape = 'u32[]', space=smem, size = 0x4, offset = 0x4, fixed_abs, tag = 'smem constant byte address 0x4 - core index']
  #allocation1 [shape = 'u32[144,128]{1,0:T(1,128)}', space=vmem, size = 0x12000, scoped, tag = 'internal scratch']
  %s0 = inlined_call_operand.vmem [shape: f32[8,784], index: 0, kind: input, shape index: {}]
  %s1 = inlined_call_operand.vmem [shape: s32[8,1], index: 1, kind: input, shape index: {}]
  %s2 = inlined_call_operand.vmem [shape: f32[784,128], index: 2, kind: input, shape index: {}]
  %s3 = inlined_call_operand.vmem [shape: f32[1,128], index: 3, kind: input, shape index: {}]
  %s4 = inlined_call_operand.vmem [shape: f32[1,128], index: 4, kind: input, shape index: {}]
  %s5 = inlined_call_operand.vmem [shape: f32[8,128], index: 5, kind: output, shape index: {}]
  %s6 = sld [smem:[#allocation0]]
  $region30: #{generative_classifier_forward.1} parent=0
    _
  %s8 = ssub.s32 1, %s6
  %s9 = scalar_select 0, %s8, %s6
  // Predicated region
  $region2: #{generative_classifier_forward.1} parent=0 // pred_check
    _
  $region3: #{generative_classifier_forward.1} parent=0 // pred_check_branch
    %11 = sbr.rel (0) target = $region5
  $region4: #{generative_classifier_forward.1} parent=0 // pred_region
    _
  $region5: #{generative_classifier_forward.1} parent=0 // pred_fallthru
    _
  // Predicated region
  $region6: #{generative_classifier_forward.1} parent=0 // pred_check
    _
  $region7: #{generative_classifier_forward.1} parent=0 // pred_check_branch
    %13 = sbr.rel (0) target = $region9
  $region8: #{generative_classifier_forward.1} parent=0 // pred_region
    _
  $region9: #{generative_classifier_forward.1} parent=0 // pred_fallthru
    _
  // Predicated region
  $region10: #{generative_classifier_forward.1} parent=0 // pred_check
    _
  $region11: #{generative_classifier_forward.1} parent=0 // pred_check_branch
    %15 = sbr.rel (0) target = $region13
  $region12: #{generative_classifier_forward.1} parent=0 // pred_region
    _
  $region13: #{generative_classifier_forward.1} parent=0 // pred_fallthru
    _
  // Predicated region
  $region14: #{generative_classifier_forward.1} parent=0 // pred_check
    _
  $region15: #{generative_classifier_forward.1} parent=0 // pred_check_branch
    %17 = sbr.rel (0) target = $region17
  $region16: #{generative_classifier_forward.1} parent=0 // pred_region
    _
  $region17: #{generative_classifier_forward.1} parent=0 // pred_fallthru
    _
  // Predicated region
  $region18: #{generative_classifier_forward.1} parent=0 // pred_check
    _
  $region19: #{generative_classifier_forward.1} parent=0 // pred_check_branch
    %19 = sbr.rel (0) target = $region21
  $region20: #{generative_classifier_forward.1} parent=0 // pred_region
    _
  $region21: #{generative_classifier_forward.1} parent=0 // pred_fallthru
    _
  %v20 = vld [vmem:[%s0] sm:$0xff]
  %v21 = vld [vmem:[%s0 + $0x8] sm:$0xff]
  %v22 = vld [vmem:[%s0 + $0x10] sm:$0xff]
  %v23 = vld [vmem:[%s0 + $0x18] sm:$0xff]
  %v24 = vld [vmem:[%s0 + $0x20] sm:$0xff]
  %v25 = vld [vmem:[%s0 + $0x28] sm:$0xff]
  %v26 = vld [vmem:[%s0 + $0x30] sm:$0xff]
  %v27 = vld [vmem:[%s1] sm:$0xff]
  %v28 = vld [vmem:[%s3] sm:$0x1]
  %v29 = vld [vmem:[%s4] sm:$0x1]
  %v30 = vld [vmem:[%s2] sm:$0xff]
  %v31 = vld [vmem:[%s2 + $0x8] sm:$0xff]
  %v32 = vld [vmem:[%s2 + $0x10] sm:$0xff]
  %v33 = vld [vmem:[%s2 + $0x18] sm:$0xff]
  %v34 = vld [vmem:[%s2 + $0x20] sm:$0xff]
  %v35 = vld [vmem:[%s2 + $0x28] sm:$0xff]
  %v36 = vld [vmem:[%s2 + $0x30] sm:$0xff]
  %v37 = vld [vmem:[%s2 + $0x38] sm:$0xff]
  %v38 = vld [vmem:[%s2 + $0x40] sm:$0xff]
  %v39 = vld [vmem:[%s2 + $0x48] sm:$0xff]
  %v40 = vld [vmem:[%s2 + $0x50] sm:$0xff]
  %v41 = vld [vmem:[%s2 + $0x58] sm:$0xff]
  %v42 = vld [vmem:[%s2 + $0x60] sm:$0xff]
  %v43 = vld [vmem:[%s2 + $0x68] sm:$0xff]
  %v44 = vld [vmem:[%s2 + $0x70] sm:$0xff]
  %v45 = vld [vmem:[%s2 + $0x78] sm:$0xff]
  %v46 = vld [vmem:[%s2 + $0x80] sm:$0xff]
  %v47 = vld [vmem:[%s2 + $0x88] sm:$0xff]
  %v48 = vld [vmem:[%s2 + $0x90] sm:$0xff]
  %v49 = vld [vmem:[%s2 + $0x98] sm:$0xff]
  %v50 = vld [vmem:[%s2 + $0xa0] sm:$0xff]
  %v51 = vld [vmem:[%s2 + $0xa8] sm:$0xff]
  %v52 = vld [vmem:[%s2 + $0xb0] sm:$0xff]
  %v53 = vld [vmem:[%s2 + $0xb8] sm:$0xff]
  %v54 = vld [vmem:[%s2 + $0xc0] sm:$0xff]
  %v55 = vld [vmem:[%s2 + $0xc8] sm:$0xff]
  %v56 = vld [vmem:[%s2 + $0xd0] sm:$0xff]
  %v57 = vld [vmem:[%s2 + $0xd8] sm:$0xff]
  %v58 = vld [vmem:[%s2 + $0xe0] sm:$0xff]
  %v59 = vld [vmem:[%s2 + $0xe8] sm:$0xff]
  %v60 = vld [vmem:[%s2 + $0xf0] sm:$0xff]
  %v61 = vld [vmem:[%s2 + $0xf8] sm:$0xff]
  %v62 = vld [vmem:[%s2 + $0x100] sm:$0xff]
  %v63 = vld [vmem:[%s2 + $0x108] sm:$0xff]
  %v64 = vld [vmem:[%s2 + $0x110] sm:$0xff]
  %v65 = vld [vmem:[%s2 + $0x118] sm:$0xff]
  %v66 = vld [vmem:[%s2 + $0x120] sm:$0xff]
  %v67 = vld [vmem:[%s2 + $0x128] sm:$0xff]
  %v68 = vld [vmem:[%s2 + $0x130] sm:$0xff]
  %v69 = vld [vmem:[%s2 + $0x138] sm:$0xff]
  %v70 = vld [vmem:[%s2 + $0x140] sm:$0xff]
  %v71 = vld [vmem:[%s2 + $0x148] sm:$0xff]
  %v72 = vld [vmem:[%s2 + $0x150] sm:$0xff]
  %v73 = vld [vmem:[%s2 + $0x158] sm:$0xff]
  %v74 = vld [vmem:[%s2 + $0x160] sm:$0xff]
  %v75 = vld [vmem:[%s2 + $0x168] sm:$0xff]
  %v76 = vld [vmem:[%s2 + $0x170] sm:$0xff]
  %v77 = vld [vmem:[%s2 + $0x178] sm:$0xff]
  %v78 = vld [vmem:[%s2 + $0x180] sm:$0xff]
  %v79 = vld [vmem:[%s2 + $0x188] sm:$0xff]
  %v80 = vld [vmem:[%s2 + $0x190] sm:$0xff]
  %v81 = vld [vmem:[%s2 + $0x198] sm:$0xff]
  %v82 = vld [vmem:[%s2 + $0x1a0] sm:$0xff]
  %v83 = vld [vmem:[%s2 + $0x1a8] sm:$0xff]
  %v84 = vld [vmem:[%s2 + $0x1b0] sm:$0xff]
  %v85 = vld [vmem:[%s2 + $0x1b8] sm:$0xff]
  %v86 = vld [vmem:[%s2 + $0x1c0] sm:$0xff]
  %v87 = vld [vmem:[%s2 + $0x1c8] sm:$0xff]
  %v88 = vld [vmem:[%s2 + $0x1d0] sm:$0xff]
  %v89 = vld [vmem:[%s2 + $0x1d8] sm:$0xff]
  %v90 = vld [vmem:[%s2 + $0x1e0] sm:$0xff]
  %v91 = vld [vmem:[%s2 + $0x1e8] sm:$0xff]
  %v92 = vld [vmem:[%s2 + $0x1f0] sm:$0xff]
  %v93 = vld [vmem:[%s2 + $0x1f8] sm:$0xff]
  %v94 = vld [vmem:[%s2 + $0x200] sm:$0xff]
  %v95 = vld [vmem:[%s2 + $0x208] sm:$0xff]
  %v96 = vld [vmem:[%s2 + $0x210] sm:$0xff]
  %v97 = vld [vmem:[%s2 + $0x218] sm:$0xff]
  %v98 = vld [vmem:[%s2 + $0x220] sm:$0xff]
  %v99 = vld [vmem:[%s2 + $0x228] sm:$0xff]
  %v100 = vld [vmem:[%s2 + $0x230] sm:$0xff]
  %v101 = vld [vmem:[%s2 + $0x238] sm:$0xff]
  %v102 = vld [vmem:[%s2 + $0x240] sm:$0xff]
  %v103 = vld [vmem:[%s2 + $0x248] sm:$0xff]
  %v104 = vld [vmem:[%s2 + $0x250] sm:$0xff]
  %v105 = vld [vmem:[%s2 + $0x258] sm:$0xff]
  %v106 = vld [vmem:[%s2 + $0x260] sm:$0xff]
  %v107 = vld [vmem:[%s2 + $0x268] sm:$0xff]
  %v108 = vld [vmem:[%s2 + $0x270] sm:$0xff]
  %v109 = vld [vmem:[%s2 + $0x278] sm:$0xff]
  %v110 = vld [vmem:[%s2 + $0x280] sm:$0xff]
  %v111 = vld [vmem:[%s2 + $0x288] sm:$0xff]
  %v112 = vld [vmem:[%s2 + $0x290] sm:$0xff]
  %v113 = vld [vmem:[%s2 + $0x298] sm:$0xff]
  %v114 = vld [vmem:[%s2 + $0x2a0] sm:$0xff]
  %v115 = vld [vmem:[%s2 + $0x2a8] sm:$0xff]
  %v116 = vld [vmem:[%s2 + $0x2b0] sm:$0xff]
  %v117 = vld [vmem:[%s2 + $0x2b8] sm:$0xff]
  %v118 = vld [vmem:[%s2 + $0x2c0] sm:$0xff]
  %v119 = vld [vmem:[%s2 + $0x2c8] sm:$0xff]
  %v120 = vld [vmem:[%s2 + $0x2d0] sm:$0xff]
  %v121 = vld [vmem:[%s2 + $0x2d8] sm:$0xff]
  %v122 = vld [vmem:[%s2 + $0x2e0] sm:$0xff]
  %v123 = vld [vmem:[%s2 + $0x2e8] sm:$0xff]
  %v124 = vld [vmem:[%s2 + $0x2f0] sm:$0xff]
  %v125 = vld [vmem:[%s2 + $0x2f8] sm:$0xff]
  %v126 = vld [vmem:[%s2 + $0x300] sm:$0xff]
  %v127 = vld [vmem:[%s2 + $0x308] sm:$0xff]
  %vm128 = vcmask 130048
  %v130 = vsel %vm128, %v26, 0
  %132 = vmatprep.subr.mxu0 0.0
  %v133 = vand.u32 %v45, 4294901760
  %134 = vmatpush1.msra.mxu0 %v133
  %135 = vmatprep.subr.mxu0 0.0
  %v136 = vand.u32 %v44, 4294901760
  %137 = vmatpush1.msra.mxu0 %v136
  %138 = vmatprep.subr.mxu0 0.0
  %v139 = vand.u32 %v43, 4294901760
  %140 = vmatpush1.msra.mxu0 %v139
  %141 = vmatprep.subr.mxu0 0.0
  %v142 = vand.u32 %v42, 4294901760
  %143 = vmatpush1.msra.mxu0 %v142
  %144 = vmatprep.subr.mxu0 0.0
  %v145 = vand.u32 %v41, 4294901760
  %146 = vmatpush1.msra.mxu0 %v145
  %147 = vmatprep.subr.mxu0 0.0
  %v148 = vand.u32 %v40, 4294901760
  %149 = vmatpush1.msra.mxu0 %v148
  %150 = vmatprep.subr.mxu0 0.0
  %v151 = vand.u32 %v39, 4294901760
  %152 = vmatpush1.msra.mxu0 %v151
  %153 = vmatprep.subr.mxu0 0.0
  %v154 = vand.u32 %v38, 4294901760
  %155 = vmatpush1.msra.mxu0 %v154
  %156 = vmatprep.subr.mxu0 0.0
  %v157 = vand.u32 %v37, 4294901760
  %158 = vmatpush1.msra.mxu0 %v157
  %159 = vmatprep.subr.mxu0 0.0
  %v160 = vand.u32 %v36, 4294901760
  %161 = vmatpush1.msra.mxu0 %v160
  %162 = vmatprep.subr.mxu0 0.0
  %v163 = vand.u32 %v35, 4294901760
  %164 = vmatpush1.msra.mxu0 %v163
  %165 = vmatprep.subr.mxu0 0.0
  %v166 = vand.u32 %v34, 4294901760
  %167 = vmatpush1.msra.mxu0 %v166
  %168 = vmatprep.subr.mxu0 0.0
  %v169 = vand.u32 %v33, 4294901760
  %170 = vmatpush1.msra.mxu0 %v169
  %171 = vmatprep.subr.mxu0 0.0
  %v172 = vand.u32 %v32, 4294901760
  %173 = vmatpush1.msra.mxu0 %v172
  %174 = vmatprep.subr.mxu0 0.0
  %v175 = vand.u32 %v31, 4294901760
  %176 = vmatpush1.msra.mxu0 %v175
  %177 = vmatprep.subr.mxu0 0.0
  %v178 = vand.u32 %v30, 4294901760
  %179 = vmatpush1.msra.mxu0 %v178
  %180 = vmatprep.subr.mxu0 0.0
  %v181 = vand.u32 %v61, 4294901760
  %182 = vmatpush2.msra.mxu0 %v181
  %183 = vmatprep.subr.mxu0 0.0
  %v184 = vand.u32 %v60, 4294901760
  %185 = vmatpush2.msra.mxu0 %v184
  %186 = vmatprep.subr.mxu0 0.0
  %v187 = vand.u32 %v59, 4294901760
  %188 = vmatpush2.msra.mxu0 %v187
  %189 = vmatprep.subr.mxu0 0.0
  %v190 = vand.u32 %v58, 4294901760
  %191 = vmatpush2.msra.mxu0 %v190
  %192 = vmatprep.subr.mxu0 0.0
  %v193 = vand.u32 %v57, 4294901760
  %194 = vmatpush2.msra.mxu0 %v193
  %195 = vmatprep.subr.mxu0 0.0
  %v196 = vand.u32 %v56, 4294901760
  %197 = vmatpush2.msra.mxu0 %v196
  %198 = vmatprep.subr.mxu0 0.0
  %v199 = vand.u32 %v55, 4294901760
  %200 = vmatpush2.msra.mxu0 %v199
  %201 = vmatprep.subr.mxu0 0.0
  %v202 = vand.u32 %v54, 4294901760
  %203 = vmatpush2.msra.mxu0 %v202
  %204 = vmatprep.subr.mxu0 0.0
  %v205 = vand.u32 %v53, 4294901760
  %206 = vmatpush2.msra.mxu0 %v205
  %207 = vmatprep.subr.mxu0 0.0
  %v208 = vand.u32 %v52, 4294901760
  %209 = vmatpush2.msra.mxu0 %v208
  %210 = vmatprep.subr.mxu0 0.0
  %v211 = vand.u32 %v51, 4294901760
  %212 = vmatpush2.msra.mxu0 %v211
  %213 = vmatprep.subr.mxu0 0.0
  %v214 = vand.u32 %v50, 4294901760
  %215 = vmatpush2.msra.mxu0 %v214
  %216 = vmatprep.subr.mxu0 0.0
  %v217 = vand.u32 %v49, 4294901760
  %218 = vmatpush2.msra.mxu0 %v217
  %219 = vmatprep.subr.mxu0 0.0
  %v220 = vand.u32 %v48, 4294901760
  %221 = vmatpush2.msra.mxu0 %v220
  %222 = vmatprep.subr.mxu0 0.0
  %v223 = vand.u32 %v47, 4294901760
  %224 = vmatpush2.msra.mxu0 %v223
  %225 = vmatprep.subr.mxu0 0.0
  %v226 = vand.u32 %v46, 4294901760
  %227 = vmatpush2.msra.mxu0 %v226
  %v228 = vand.u32 %v21, 4294901760
  %v229 = vsub.f32 %v21, %v228
  %v230 = vand.u32 %v229, 4294901760
  %v231 = vsub.f32 %v229, %v230
  %v232 = vand.u32 %v231, 4294901760
  %233 = vmatprep.mubr.f32.mxu0 %v232
  %v234 = vand.u32 %v20, 4294901760
  %v235 = vsub.f32 %v20, %v234
  %v236 = vand.u32 %v235, 4294901760
  %v237 = vsub.f32 %v235, %v236
  %v238 = vand.u32 %v237, 4294901760
  %239 = vmatmul.mubr.f32.gmra.mxu0 %v238
  %v240 = vpop.f32.mrf.mxu0
  %v241 = vadd.f32 0.0, %v240
  %v242 = vpop.f32.mrf.mxu0
  %243 = vdwg.mxu0
  %244 = vmatprep.subr.mxu0 0.0
  %v245 = vand.u32 %v45, 4294901760
  %v246 = vsub.f32 %v45, %v245
  %v247 = vand.u32 %v246, 4294901760
  %v248 = vsub.f32 %v246, %v247
  %v249 = vand.u32 %v248, 4294901760
  %250 = vmatpush1.msra.mxu0 %v249
  %251 = vmatprep.subr.mxu0 0.0
  %v252 = vand.u32 %v44, 4294901760
  %v253 = vsub.f32 %v44, %v252
  %v254 = vand.u32 %v253, 4294901760
  %v255 = vsub.f32 %v253, %v254
  %v256 = vand.u32 %v255, 4294901760
  %257 = vmatpush1.msra.mxu0 %v256
  %258 = vmatprep.subr.mxu0 0.0
  %v259 = vand.u32 %v43, 4294901760
  %v260 = vsub.f32 %v43, %v259
  %v261 = vand.u32 %v260, 4294901760
  %v262 = vsub.f32 %v260, %v261
  %v263 = vand.u32 %v262, 4294901760
  %264 = vmatpush1.msra.mxu0 %v263
  %265 = vmatprep.subr.mxu0 0.0
  %v266 = vand.u32 %v42, 4294901760
  %v267 = vsub.f32 %v42, %v266
  %v268 = vand.u32 %v267, 4294901760
  %v269 = vsub.f32 %v267, %v268
  %v270 = vand.u32 %v269, 4294901760
  %271 = vmatpush1.msra.mxu0 %v270
  %272 = vmatprep.subr.mxu0 0.0
  %v273 = vand.u32 %v41, 4294901760
  %v274 = vsub.f32 %v41, %v273
  %v275 = vand.u32 %v274, 4294901760
  %v276 = vsub.f32 %v274, %v275
  %v277 = vand.u32 %v276, 4294901760
  %278 = vmatpush1.msra.mxu0 %v277
  %279 = vmatprep.subr.mxu0 0.0
  %v280 = vand.u32 %v40, 4294901760
  %v281 = vsub.f32 %v40, %v280
  %v282 = vand.u32 %v281, 4294901760
  %v283 = vsub.f32 %v281, %v282
  %v284 = vand.u32 %v283, 4294901760
  %285 = vmatpush1.msra.mxu0 %v284
  %286 = vmatprep.subr.mxu0 0.0
  %v287 = vand.u32 %v39, 4294901760
  %v288 = vsub.f32 %v39, %v287
  %v289 = vand.u32 %v288, 4294901760
  %v290 = vsub.f32 %v288, %v289
  %v291 = vand.u32 %v290, 4294901760
  %292 = vmatpush1.msra.mxu0 %v291
  %293 = vmatprep.subr.mxu0 0.0
  %v294 = vand.u32 %v38, 4294901760
  %v295 = vsub.f32 %v38, %v294
  %v296 = vand.u32 %v295, 4294901760
  %v297 = vsub.f32 %v295, %v296
  %v298 = vand.u32 %v297, 4294901760
  %299 = vmatpush1.msra.mxu0 %v298
  %300 = vmatprep.subr.mxu0 0.0
  %v301 = vand.u32 %v37, 4294901760
  %v302 = vsub.f32 %v37, %v301
  %v303 = vand.u32 %v302, 4294901760
  %v304 = vsub.f32 %v302, %v303
  %v305 = vand.u32 %v304, 4294901760
  %306 = vmatpush1.msra.mxu0 %v305
  %307 = vmatprep.subr.mxu0 0.0
  %v308 = vand.u32 %v36, 4294901760
  %v309 = vsub.f32 %v36, %v308
  %v310 = vand.u32 %v309, 4294901760
  %v311 = vsub.f32 %v309, %v310
  %v312 = vand.u32 %v311, 4294901760
  %313 = vmatpush1.msra.mxu0 %v312
  %314 = vmatprep.subr.mxu0 0.0
  %v315 = vand.u32 %v35, 4294901760
  %v316 = vsub.f32 %v35, %v315
  %v317 = vand.u32 %v316, 4294901760
  %v318 = vsub.f32 %v316, %v317
  %v319 = vand.u32 %v318, 4294901760
  %320 = vmatpush1.msra.mxu0 %v319
  %321 = vmatprep.subr.mxu0 0.0
  %v322 = vand.u32 %v34, 4294901760
  %v323 = vsub.f32 %v34, %v322
  %v324 = vand.u32 %v323, 4294901760
  %v325 = vsub.f32 %v323, %v324
  %v326 = vand.u32 %v325, 4294901760
  %327 = vmatpush1.msra.mxu0 %v326
  %328 = vmatprep.subr.mxu0 0.0
  %v329 = vand.u32 %v33, 4294901760
  %v330 = vsub.f32 %v33, %v329
  %v331 = vand.u32 %v330, 4294901760
  %v332 = vsub.f32 %v330, %v331
  %v333 = vand.u32 %v332, 4294901760
  %334 = vmatpush1.msra.mxu0 %v333
  %335 = vmatprep.subr.mxu0 0.0
  %v336 = vand.u32 %v32, 4294901760
  %v337 = vsub.f32 %v32, %v336
  %v338 = vand.u32 %v337, 4294901760
  %v339 = vsub.f32 %v337, %v338
  %v340 = vand.u32 %v339, 4294901760
  %341 = vmatpush1.msra.mxu0 %v340
  %342 = vmatprep.subr.mxu0 0.0
  %v343 = vand.u32 %v31, 4294901760
  %v344 = vsub.f32 %v31, %v343
  %v345 = vand.u32 %v344, 4294901760
  %v346 = vsub.f32 %v344, %v345
  %v347 = vand.u32 %v346, 4294901760
  %348 = vmatpush1.msra.mxu0 %v347
  %349 = vmatprep.subr.mxu0 0.0
  %v350 = vand.u32 %v30, 4294901760
  %v351 = vsub.f32 %v30, %v350
  %v352 = vand.u32 %v351, 4294901760
  %v353 = vsub.f32 %v351, %v352
  %v354 = vand.u32 %v353, 4294901760
  %355 = vmatpush1.msra.mxu0 %v354
  %356 = vmatprep.subr.mxu0 0.0
  %v357 = vand.u32 %v61, 4294901760
  %v358 = vsub.f32 %v61, %v357
  %v359 = vand.u32 %v358, 4294901760
  %v360 = vsub.f32 %v358, %v359
  %v361 = vand.u32 %v360, 4294901760
  %362 = vmatpush2.msra.mxu0 %v361
  %363 = vmatprep.subr.mxu0 0.0
  %v364 = vand.u32 %v60, 4294901760
  %v365 = vsub.f32 %v60, %v364
  %v366 = vand.u32 %v365, 4294901760
  %v367 = vsub.f32 %v365, %v366
  %v368 = vand.u32 %v367, 4294901760
  %369 = vmatpush2.msra.mxu0 %v368
  %370 = vmatprep.subr.mxu0 0.0
  %v371 = vand.u32 %v59, 4294901760
  %v372 = vsub.f32 %v59, %v371
  %v373 = vand.u32 %v372, 4294901760
  %v374 = vsub.f32 %v372, %v373
  %v375 = vand.u32 %v374, 4294901760
  %376 = vmatpush2.msra.mxu0 %v375
  %377 = vmatprep.subr.mxu0 0.0
  %v378 = vand.u32 %v58, 4294901760
  %v379 = vsub.f32 %v58, %v378
  %v380 = vand.u32 %v379, 4294901760
  %v381 = vsub.f32 %v379, %v380
  %v382 = vand.u32 %v381, 4294901760
  %383 = vmatpush2.msra.mxu0 %v382
  %384 = vmatprep.subr.mxu0 0.0
  %v385 = vand.u32 %v57, 4294901760
  %v386 = vsub.f32 %v57, %v385
  %v387 = vand.u32 %v386, 4294901760
  %v388 = vsub.f32 %v386, %v387
  %v389 = vand.u32 %v388, 4294901760
  %390 = vmatpush2.msra.mxu0 %v389
  %391 = vmatprep.subr.mxu0 0.0
  %v392 = vand.u32 %v56, 4294901760
  %v393 = vsub.f32 %v56, %v392
  %v394 = vand.u32 %v393, 4294901760
  %v395 = vsub.f32 %v393, %v394
  %v396 = vand.u32 %v395, 4294901760
  %397 = vmatpush2.msra.mxu0 %v396
  %398 = vmatprep.subr.mxu0 0.0
  %v399 = vand.u32 %v55, 4294901760
  %v400 = vsub.f32 %v55, %v399
  %v401 = vand.u32 %v400, 4294901760
  %v402 = vsub.f32 %v400, %v401
  %v403 = vand.u32 %v402, 4294901760
  %404 = vmatpush2.msra.mxu0 %v403
  %405 = vmatprep.subr.mxu0 0.0
  %v406 = vand.u32 %v54, 4294901760
  %v407 = vsub.f32 %v54, %v406
  %v408 = vand.u32 %v407, 4294901760
  %v409 = vsub.f32 %v407, %v408
  %v410 = vand.u32 %v409, 4294901760
  %411 = vmatpush2.msra.mxu0 %v410
  %412 = vmatprep.subr.mxu0 0.0
  %v413 = vand.u32 %v53, 4294901760
  %v414 = vsub.f32 %v53, %v413
  %v415 = vand.u32 %v414, 4294901760
  %v416 = vsub.f32 %v414, %v415
  %v417 = vand.u32 %v416, 4294901760
  %418 = vmatpush2.msra.mxu0 %v417
  %419 = vmatprep.subr.mxu0 0.0
  %v420 = vand.u32 %v52, 4294901760
  %v421 = vsub.f32 %v52, %v420
  %v422 = vand.u32 %v421, 4294901760
  %v423 = vsub.f32 %v421, %v422
  %v424 = vand.u32 %v423, 4294901760
  %425 = vmatpush2.msra.mxu0 %v424
  %426 = vmatprep.subr.mxu0 0.0
  %v427 = vand.u32 %v51, 4294901760
  %v428 = vsub.f32 %v51, %v427
  %v429 = vand.u32 %v428, 4294901760
  %v430 = vsub.f32 %v428, %v429
  %v431 = vand.u32 %v430, 4294901760
  %432 = vmatpush2.msra.mxu0 %v431
  %433 = vmatprep.subr.mxu0 0.0
  %v434 = vand.u32 %v50, 4294901760
  %v435 = vsub.f32 %v50, %v434
  %v436 = vand.u32 %v435, 4294901760
  %v437 = vsub.f32 %v435, %v436
  %v438 = vand.u32 %v437, 4294901760
  %439 = vmatpush2.msra.mxu0 %v438
  %440 = vmatprep.subr.mxu0 0.0
  %v441 = vand.u32 %v49, 4294901760
  %v442 = vsub.f32 %v49, %v441
  %v443 = vand.u32 %v442, 4294901760
  %v444 = vsub.f32 %v442, %v443
  %v445 = vand.u32 %v444, 4294901760
  %446 = vmatpush2.msra.mxu0 %v445
  %447 = vmatprep.subr.mxu0 0.0
  %v448 = vand.u32 %v48, 4294901760
  %v449 = vsub.f32 %v48, %v448
  %v450 = vand.u32 %v449, 4294901760
  %v451 = vsub.f32 %v449, %v450
  %v452 = vand.u32 %v451, 4294901760
  %453 = vmatpush2.msra.mxu0 %v452
  %454 = vmatprep.subr.mxu0 0.0
  %v455 = vand.u32 %v47, 4294901760
  %v456 = vsub.f32 %v47, %v455
  %v457 = vand.u32 %v456, 4294901760
  %v458 = vsub.f32 %v456, %v457
  %v459 = vand.u32 %v458, 4294901760
  %460 = vmatpush2.msra.mxu0 %v459
  %461 = vmatprep.subr.mxu0 0.0
  %v462 = vand.u32 %v46, 4294901760
  %v463 = vsub.f32 %v46, %v462
  %v464 = vand.u32 %v463, 4294901760
  %v465 = vsub.f32 %v463, %v464
  %v466 = vand.u32 %v465, 4294901760
  %467 = vmatpush2.msra.mxu0 %v466
  %v468 = vand.u32 %v21, 4294901760
  %469 = vmatprep.mubr.f32.mxu0 %v468
  %v470 = vand.u32 %v20, 4294901760
  %471 = vmatmul.mubr.f32.gmra.mxu0 %v470
  %v472 = vpop.f32.mrf.mxu0
  %v473 = vadd.f32 %v241, %v472
  %v474 = vpop.f32.mrf.mxu0
  %475 = vdwg.mxu0
  %476 = vmatprep.subr.mxu0 0.0
  %v477 = vand.u32 %v45, 4294901760
  %v478 = vsub.f32 %v45, %v477
  %479 = vmatpush1.msra.mxu0 %v478
  %480 = vmatprep.subr.mxu0 0.0
  %v481 = vand.u32 %v44, 4294901760
  %v482 = vsub.f32 %v44, %v481
  %483 = vmatpush1.msra.mxu0 %v482
  %484 = vmatprep.subr.mxu0 0.0
  %v485 = vand.u32 %v43, 4294901760
  %v486 = vsub.f32 %v43, %v485
  %487 = vmatpush1.msra.mxu0 %v486
  %488 = vmatprep.subr.mxu0 0.0
  %v489 = vand.u32 %v42, 4294901760
  %v490 = vsub.f32 %v42, %v489
  %491 = vmatpush1.msra.mxu0 %v490
  %492 = vmatprep.subr.mxu0 0.0
  %v493 = vand.u32 %v41, 4294901760
  %v494 = vsub.f32 %v41, %v493
  %495 = vmatpush1.msra.mxu0 %v494
  %496 = vmatprep.subr.mxu0 0.0
  %v497 = vand.u32 %v40, 4294901760
  %v498 = vsub.f32 %v40, %v497
  %499 = vmatpush1.msra.mxu0 %v498
  %500 = vmatprep.subr.mxu0 0.0
  %v501 = vand.u32 %v39, 4294901760
  %v502 = vsub.f32 %v39, %v501
  %503 = vmatpush1.msra.mxu0 %v502
  %504 = vmatprep.subr.mxu0 0.0
  %v505 = vand.u32 %v38, 4294901760
  %v506 = vsub.f32 %v38, %v505
  %507 = vmatpush1.msra.mxu0 %v506
  %508 = vmatprep.subr.mxu0 0.0
  %v509 = vand.u32 %v37, 4294901760
  %v510 = vsub.f32 %v37, %v509
  %511 = vmatpush1.msra.mxu0 %v510
  %512 = vmatprep.subr.mxu0 0.0
  %v513 = vand.u32 %v36, 4294901760
  %v514 = vsub.f32 %v36, %v513
  %515 = vmatpush1.msra.mxu0 %v514
  %516 = vmatprep.subr.mxu0 0.0
  %v517 = vand.u32 %v35, 4294901760
  %v518 = vsub.f32 %v35, %v517
  %519 = vmatpush1.msra.mxu0 %v518
  %520 = vmatprep.subr.mxu0 0.0
  %v521 = vand.u32 %v34, 4294901760
  %v522 = vsub.f32 %v34, %v521
  %523 = vmatpush1.msra.mxu0 %v522
  %524 = vmatprep.subr.mxu0 0.0
  %v525 = vand.u32 %v33, 4294901760
  %v526 = vsub.f32 %v33, %v525
  %527 = vmatpush1.msra.mxu0 %v526
  %528 = vmatprep.subr.mxu0 0.0
  %v529 = vand.u32 %v32, 4294901760
  %v530 = vsub.f32 %v32, %v529
  %531 = vmatpush1.msra.mxu0 %v530
  %532 = vmatprep.subr.mxu0 0.0
  %v533 = vand.u32 %v31, 4294901760
  %v534 = vsub.f32 %v31, %v533
  %535 = vmatpush1.msra.mxu0 %v534
  %536 = vmatprep.subr.mxu0 0.0
  %v537 = vand.u32 %v30, 4294901760
  %v538 = vsub.f32 %v30, %v537
  %539 = vmatpush1.msra.mxu0 %v538
  %540 = vmatprep.subr.mxu0 0.0
  %v541 = vand.u32 %v61, 4294901760
  %v542 = vsub.f32 %v61, %v541
  %543 = vmatpush2.msra.mxu0 %v542
  %544 = vmatprep.subr.mxu0 0.0
  %v545 = vand.u32 %v60, 4294901760
  %v546 = vsub.f32 %v60, %v545
  %547 = vmatpush2.msra.mxu0 %v546
  %548 = vmatprep.subr.mxu0 0.0
  %v549 = vand.u32 %v59, 4294901760
  %v550 = vsub.f32 %v59, %v549
  %551 = vmatpush2.msra.mxu0 %v550
  %552 = vmatprep.subr.mxu0 0.0
  %v553 = vand.u32 %v58, 4294901760
  %v554 = vsub.f32 %v58, %v553
  %555 = vmatpush2.msra.mxu0 %v554
  %556 = vmatprep.subr.mxu0 0.0
  %v557 = vand.u32 %v57, 4294901760
  %v558 = vsub.f32 %v57, %v557
  %559 = vmatpush2.msra.mxu0 %v558
  %560 = vmatprep.subr.mxu0 0.0
  %v561 = vand.u32 %v56, 4294901760
  %v562 = vsub.f32 %v56, %v561
  %563 = vmatpush2.msra.mxu0 %v562
  %564 = vmatprep.subr.mxu0 0.0
  %v565 = vand.u32 %v55, 4294901760
  %v566 = vsub.f32 %v55, %v565
  %567 = vmatpush2.msra.mxu0 %v566
  %568 = vmatprep.subr.mxu0 0.0
  %v569 = vand.u32 %v54, 4294901760
  %v570 = vsub.f32 %v54, %v569
  %571 = vmatpush2.msra.mxu0 %v570
  %572 = vmatprep.subr.mxu0 0.0
  %v573 = vand.u32 %v53, 4294901760
  %v574 = vsub.f32 %v53, %v573
  %575 = vmatpush2.msra.mxu0 %v574
  %576 = vmatprep.subr.mxu0 0.0
  %v577 = vand.u32 %v52, 4294901760
  %v578 = vsub.f32 %v52, %v577
  %579 = vmatpush2.msra.mxu0 %v578
  %580 = vmatprep.subr.mxu0 0.0
  %v581 = vand.u32 %v51, 4294901760
  %v582 = vsub.f32 %v51, %v581
  %583 = vmatpush2.msra.mxu0 %v582
  %584 = vmatprep.subr.mxu0 0.0
  %v585 = vand.u32 %v50, 4294901760
  %v586 = vsub.f32 %v50, %v585
  %587 = vmatpush2.msra.mxu0 %v586
  %588 = vmatprep.subr.mxu0 0.0
  %v589 = vand.u32 %v49, 4294901760
  %v590 = vsub.f32 %v49, %v589
  %591 = vmatpush2.msra.mxu0 %v590
  %592 = vmatprep.subr.mxu0 0.0
  %v593 = vand.u32 %v48, 4294901760
  %v594 = vsub.f32 %v48, %v593
  %595 = vmatpush2.msra.mxu0 %v594
  %596 = vmatprep.subr.mxu0 0.0
  %v597 = vand.u32 %v47, 4294901760
  %v598 = vsub.f32 %v47, %v597
  %599 = vmatpush2.msra.mxu0 %v598
  %600 = vmatprep.subr.mxu0 0.0
  %v601 = vand.u32 %v46, 4294901760
  %v602 = vsub.f32 %v46, %v601
  %603 = vmatpush2.msra.mxu0 %v602
  %v604 = vand.u32 %v21, 4294901760
  %v605 = vsub.f32 %v21, %v604
  %606 = vmatprep.mubr.f32.mxu0 %v605
  %v607 = vand.u32 %v20, 4294901760
  %v608 = vsub.f32 %v20, %v607
  %609 = vmatmul.mubr.f32.gmra.mxu0 %v608
  %v610 = vpop.f32.mrf.mxu0
  %v611 = vadd.f32 %v473, %v610
  %v612 = vpop.f32.mrf.mxu0
  %613 = vdwg.mxu0
  %614 = vmatprep.subr.mxu0 0.0
  %v615 = vand.u32 %v45, 4294901760
  %616 = vmatpush1.msra.mxu0 %v615
  %617 = vmatprep.subr.mxu0 0.0
  %v618 = vand.u32 %v44, 4294901760
  %619 = vmatpush1.msra.mxu0 %v618
  %620 = vmatprep.subr.mxu0 0.0
  %v621 = vand.u32 %v43, 4294901760
  %622 = vmatpush1.msra.mxu0 %v621
  %623 = vmatprep.subr.mxu0 0.0
  %v624 = vand.u32 %v42, 4294901760
  %625 = vmatpush1.msra.mxu0 %v624
  %626 = vmatprep.subr.mxu0 0.0
  %v627 = vand.u32 %v41, 4294901760
  %628 = vmatpush1.msra.mxu0 %v627
  %629 = vmatprep.subr.mxu0 0.0
  %v630 = vand.u32 %v40, 4294901760
  %631 = vmatpush1.msra.mxu0 %v630
  %632 = vmatprep.subr.mxu0 0.0
  %v633 = vand.u32 %v39, 4294901760
  %634 = vmatpush1.msra.mxu0 %v633
  %635 = vmatprep.subr.mxu0 0.0
  %v636 = vand.u32 %v38, 4294901760
  %637 = vmatpush1.msra.mxu0 %v636
  %638 = vmatprep.subr.mxu0 0.0
  %v639 = vand.u32 %v37, 4294901760
  %640 = vmatpush1.msra.mxu0 %v639
  %641 = vmatprep.subr.mxu0 0.0
  %v642 = vand.u32 %v36, 4294901760
  %643 = vmatpush1.msra.mxu0 %v642
  %644 = vmatprep.subr.mxu0 0.0
  %v645 = vand.u32 %v35, 4294901760
  %646 = vmatpush1.msra.mxu0 %v645
  %647 = vmatprep.subr.mxu0 0.0
  %v648 = vand.u32 %v34, 4294901760
  %649 = vmatpush1.msra.mxu0 %v648
  %650 = vmatprep.subr.mxu0 0.0
  %v651 = vand.u32 %v33, 4294901760
  %652 = vmatpush1.msra.mxu0 %v651
  %653 = vmatprep.subr.mxu0 0.0
  %v654 = vand.u32 %v32, 4294901760
  %655 = vmatpush1.msra.mxu0 %v654
  %656 = vmatprep.subr.mxu0 0.0
  %v657 = vand.u32 %v31, 4294901760
  %658 = vmatpush1.msra.mxu0 %v657
  %659 = vmatprep.subr.mxu0 0.0
  %v660 = vand.u32 %v30, 4294901760
  %661 = vmatpush1.msra.mxu0 %v660
  %662 = vmatprep.subr.mxu0 0.0
  %v663 = vand.u32 %v61, 4294901760
  %664 = vmatpush2.msra.mxu0 %v663
  %665 = vmatprep.subr.mxu0 0.0
  %v666 = vand.u32 %v60, 4294901760
  %667 = vmatpush2.msra.mxu0 %v666
  %668 = vmatprep.subr.mxu0 0.0
  %v669 = vand.u32 %v59, 4294901760
  %670 = vmatpush2.msra.mxu0 %v669
  %671 = vmatprep.subr.mxu0 0.0
  %v672 = vand.u32 %v58, 4294901760
  %673 = vmatpush2.msra.mxu0 %v672
  %674 = vmatprep.subr.mxu0 0.0
  %v675 = vand.u32 %v57, 4294901760
  %676 = vmatpush2.msra.mxu0 %v675
  %677 = vmatprep.subr.mxu0 0.0
  %v678 = vand.u32 %v56, 4294901760
  %679 = vmatpush2.msra.mxu0 %v678
  %680 = vmatprep.subr.mxu0 0.0
  %v681 = vand.u32 %v55, 4294901760
  %682 = vmatpush2.msra.mxu0 %v681
  %683 = vmatprep.subr.mxu0 0.0
  %v684 = vand.u32 %v54, 4294901760
  %685 = vmatpush2.msra.mxu0 %v684
  %686 = vmatprep.subr.mxu0 0.0
  %v687 = vand.u32 %v53, 4294901760
  %688 = vmatpush2.msra.mxu0 %v687
  %689 = vmatprep.subr.mxu0 0.0
  %v690 = vand.u32 %v52, 4294901760
  %691 = vmatpush2.msra.mxu0 %v690
  %692 = vmatprep.subr.mxu0 0.0
  %v693 = vand.u32 %v51, 4294901760
  %694 = vmatpush2.msra.mxu0 %v693
  %695 = vmatprep.subr.mxu0 0.0
  %v696 = vand.u32 %v50, 4294901760
  %697 = vmatpush2.msra.mxu0 %v696
  %698 = vmatprep.subr.mxu0 0.0
  %v699 = vand.u32 %v49, 4294901760
  %700 = vmatpush2.msra.mxu0 %v699
  %701 = vmatprep.subr.mxu0 0.0
  %v702 = vand.u32 %v48, 4294901760
  %703 = vmatpush2.msra.mxu0 %v702
  %704 = vmatprep.subr.mxu0 0.0
  %v705 = vand.u32 %v47, 4294901760
  %706 = vmatpush2.msra.mxu0 %v705
  %707 = vmatprep.subr.mxu0 0.0
  %v708 = vand.u32 %v46, 4294901760
  %709 = vmatpush2.msra.mxu0 %v708
  %v710 = vand.u32 %v21, 4294901760
  %v711 = vsub.f32 %v21, %v710
  %v712 = vand.u32 %v711, 4294901760
  %713 = vmatprep.mubr.f32.mxu0 %v712
  %v714 = vand.u32 %v20, 4294901760
  %v715 = vsub.f32 %v20, %v714
  %v716 = vand.u32 %v715, 4294901760
  %717 = vmatmul.mubr.f32.gmra.mxu0 %v716
  %v718 = vpop.f32.mrf.mxu0
  %v719 = vadd.f32 %v611, %v718
  %v720 = vpop.f32.mrf.mxu0
  %721 = vdwg.mxu0
  %722 = vmatprep.subr.mxu0 0.0
  %v723 = vand.u32 %v45, 4294901760
  %v724 = vsub.f32 %v45, %v723
  %v725 = vand.u32 %v724, 4294901760
  %726 = vmatpush1.msra.mxu0 %v725
  %727 = vmatprep.subr.mxu0 0.0
  %v728 = vand.u32 %v44, 4294901760
  %v729 = vsub.f32 %v44, %v728
  %v730 = vand.u32 %v729, 4294901760
  %731 = vmatpush1.msra.mxu0 %v730
  %732 = vmatprep.subr.mxu0 0.0
  %v733 = vand.u32 %v43, 4294901760
  %v734 = vsub.f32 %v43, %v733
  %v735 = vand.u32 %v734, 4294901760
  %736 = vmatpush1.msra.mxu0 %v735
  %737 = vmatprep.subr.mxu0 0.0
  %v738 = vand.u32 %v42, 4294901760
  %v739 = vsub.f32 %v42, %v738
  %v740 = vand.u32 %v739, 4294901760
  %741 = vmatpush1.msra.mxu0 %v740
  %742 = vmatprep.subr.mxu0 0.0
  %v743 = vand.u32 %v41, 4294901760
  %v744 = vsub.f32 %v41, %v743
  %v745 = vand.u32 %v744, 4294901760
  %746 = vmatpush1.msra.mxu0 %v745
  %747 = vmatprep.subr.mxu0 0.0
  %v748 = vand.u32 %v40, 4294901760
  %v749 = vsub.f32 %v40, %v748
  %v750 = vand.u32 %v749, 4294901760
  %751 = vmatpush1.msra.mxu0 %v750
  %752 = vmatprep.subr.mxu0 0.0
  %v753 = vand.u32 %v39, 4294901760
  %v754 = vsub.f32 %v39, %v753
  %v755 = vand.u32 %v754, 4294901760
  %756 = vmatpush1.msra.mxu0 %v755
  %757 = vmatprep.subr.mxu0 0.0
  %v758 = vand.u32 %v38, 4294901760
  %v759 = vsub.f32 %v38, %v758
  %v760 = vand.u32 %v759, 4294901760
  %761 = vmatpush1.msra.mxu0 %v760
  %762 = vmatprep.subr.mxu0 0.0
  %v763 = vand.u32 %v37, 4294901760
  %v764 = vsub.f32 %v37, %v763
  %v765 = vand.u32 %v764, 4294901760
  %766 = vmatpush1.msra.mxu0 %v765
  %767 = vmatprep.subr.mxu0 0.0
  %v768 = vand.u32 %v36, 4294901760
  %v769 = vsub.f32 %v36, %v768
  %v770 = vand.u32 %v769, 4294901760
  %771 = vmatpush1.msra.mxu0 %v770
  %772 = vmatprep.subr.mxu0 0.0
  %v773 = vand.u32 %v35, 4294901760
  %v774 = vsub.f32 %v35, %v773
  %v775 = vand.u32 %v774, 4294901760
  %776 = vmatpush1.msra.mxu0 %v775
  %777 = vmatprep.subr.mxu0 0.0
  %v778 = vand.u32 %v34, 4294901760
  %v779 = vsub.f32 %v34, %v778
  %v780 = vand.u32 %v779, 4294901760
  %781 = vmatpush1.msra.mxu0 %v780
  %782 = vmatprep.subr.mxu0 0.0
  %v783 = vand.u32 %v33, 4294901760
  %v784 = vsub.f32 %v33, %v783
  %v785 = vand.u32 %v784, 4294901760
  %786 = vmatpush1.msra.mxu0 %v785
  %787 = vmatprep.subr.mxu0 0.0
  %v788 = vand.u32 %v32, 4294901760
  %v789 = vsub.f32 %v32, %v788
  %v790 = vand.u32 %v789, 4294901760
  %791 = vmatpush1.msra.mxu0 %v790
  %792 = vmatprep.subr.mxu0 0.0
  %v793 = vand.u32 %v31, 4294901760
  %v794 = vsub.f32 %v31, %v793
  %v795 = vand.u32 %v794, 4294901760
  %796 = vmatpush1.msra.mxu0 %v795
  %797 = vmatprep.subr.mxu0 0.0
  %v798 = vand.u32 %v30, 4294901760
  %v799 = vsub.f32 %v30, %v798
  %v800 = vand.u32 %v799, 4294901760
  %801 = vmatpush1.msra.mxu0 %v800
  %802 = vmatprep.subr.mxu0 0.0
  %v803 = vand.u32 %v61, 4294901760
  %v804 = vsub.f32 %v61, %v803
  %v805 = vand.u32 %v804, 4294901760
  %806 = vmatpush2.msra.mxu0 %v805
  %807 = vmatprep.subr.mxu0 0.0
  %v808 = vand.u32 %v60, 4294901760
  %v809 = vsub.f32 %v60, %v808
  %v810 = vand.u32 %v809, 4294901760
  %811 = vmatpush2.msra.mxu0 %v810
  %812 = vmatprep.subr.mxu0 0.0
  %v813 = vand.u32 %v59, 4294901760
  %v814 = vsub.f32 %v59, %v813
  %v815 = vand.u32 %v814, 4294901760
  %816 = vmatpush2.msra.mxu0 %v815
  %817 = vmatprep.subr.mxu0 0.0
  %v818 = vand.u32 %v58, 4294901760
  %v819 = vsub.f32 %v58, %v818
  %v820 = vand.u32 %v819, 4294901760
  %821 = vmatpush2.msra.mxu0 %v820
  %822 = vmatprep.subr.mxu0 0.0
  %v823 = vand.u32 %v57, 4294901760
  %v824 = vsub.f32 %v57, %v823
  %v825 = vand.u32 %v824, 4294901760
  %826 = vmatpush2.msra.mxu0 %v825
  %827 = vmatprep.subr.mxu0 0.0
  %v828 = vand.u32 %v56, 4294901760
  %v829 = vsub.f32 %v56, %v828
  %v830 = vand.u32 %v829, 4294901760
  %831 = vmatpush2.msra.mxu0 %v830
  %832 = vmatprep.subr.mxu0 0.0
  %v833 = vand.u32 %v55, 4294901760
  %v834 = vsub.f32 %v55, %v833
  %v835 = vand.u32 %v834, 4294901760
  %836 = vmatpush2.msra.mxu0 %v835
  %837 = vmatprep.subr.mxu0 0.0
  %v838 = vand.u32 %v54, 4294901760
  %v839 = vsub.f32 %v54, %v838
  %v840 = vand.u32 %v839, 4294901760
  %841 = vmatpush2.msra.mxu0 %v840
  %842 = vmatprep.subr.mxu0 0.0
  %v843 = vand.u32 %v53, 4294901760
  %v844 = vsub.f32 %v53, %v843
  %v845 = vand.u32 %v844, 4294901760
  %846 = vmatpush2.msra.mxu0 %v845
  %847 = vmatprep.subr.mxu0 0.0
  %v848 = vand.u32 %v52, 4294901760
  %v849 = vsub.f32 %v52, %v848
  %v850 = vand.u32 %v849, 4294901760
  %851 = vmatpush2.msra.mxu0 %v850
  %852 = vmatprep.subr.mxu0 0.0
  %v853 = vand.u32 %v51, 4294901760
  %v854 = vsub.f32 %v51, %v853
  %v855 = vand.u32 %v854, 4294901760
  %856 = vmatpush2.msra.mxu0 %v855
  %857 = vmatprep.subr.mxu0 0.0
  %v858 = vand.u32 %v50, 4294901760
  %v859 = vsub.f32 %v50, %v858
  %v860 = vand.u32 %v859, 4294901760
  %861 = vmatpush2.msra.mxu0 %v860
  %862 = vmatprep.subr.mxu0 0.0
  %v863 = vand.u32 %v49, 4294901760
  %v864 = vsub.f32 %v49, %v863
  %v865 = vand.u32 %v864, 4294901760
  %866 = vmatpush2.msra.mxu0 %v865
  %867 = vmatprep.subr.mxu0 0.0
  %v868 = vand.u32 %v48, 4294901760
  %v869 = vsub.f32 %v48, %v868
  %v870 = vand.u32 %v869, 4294901760
  %871 = vmatpush2.msra.mxu0 %v870
  %872 = vmatprep.subr.mxu0 0.0
  %v873 = vand.u32 %v47, 4294901760
  %v874 = vsub.f32 %v47, %v873
  %v875 = vand.u32 %v874, 4294901760
  %876 = vmatpush2.msra.mxu0 %v875
  %877 = vmatprep.subr.mxu0 0.0
  %v878 = vand.u32 %v46, 4294901760
  %v879 = vsub.f32 %v46, %v878
  %v880 = vand.u32 %v879, 4294901760
  %881 = vmatpush2.msra.mxu0 %v880
  %v882 = vand.u32 %v21, 4294901760
  %883 = vmatprep.mubr.f32.mxu0 %v882
  %v884 = vand.u32 %v20, 4294901760
  %885 = vmatmul.mubr.f32.gmra.mxu0 %v884
  %v886 = vpop.f32.mrf.mxu0
  %v887 = vadd.f32 %v719, %v886
  %v888 = vpop.f32.mrf.mxu0
  %889 = vdwg.mxu0
  %890 = vmatprep.subr.mxu0 0.0
  %v891 = vand.u32 %v45, 4294901760
  %892 = vmatpush1.msra.mxu0 %v891
  %893 = vmatprep.subr.mxu0 0.0
  %v894 = vand.u32 %v44, 4294901760
  %895 = vmatpush1.msra.mxu0 %v894
  %896 = vmatprep.subr.mxu0 0.0
  %v897 = vand.u32 %v43, 4294901760
  %898 = vmatpush1.msra.mxu0 %v897
  %899 = vmatprep.subr.mxu0 0.0
  %v900 = vand.u32 %v42, 4294901760
  %901 = vmatpush1.msra.mxu0 %v900
  %902 = vmatprep.subr.mxu0 0.0
  %v903 = vand.u32 %v41, 4294901760
  %904 = vmatpush1.msra.mxu0 %v903
  %905 = vmatprep.subr.mxu0 0.0
  %v906 = vand.u32 %v40, 4294901760
  %907 = vmatpush1.msra.mxu0 %v906
  %908 = vmatprep.subr.mxu0 0.0
  %v909 = vand.u32 %v39, 4294901760
  %910 = vmatpush1.msra.mxu0 %v909
  %911 = vmatprep.subr.mxu0 0.0
  %v912 = vand.u32 %v38, 4294901760
  %913 = vmatpush1.msra.mxu0 %v912
  %914 = vmatprep.subr.mxu0 0.0
  %v915 = vand.u32 %v37, 4294901760
  %916 = vmatpush1.msra.mxu0 %v915
  %917 = vmatprep.subr.mxu0 0.0
  %v918 = vand.u32 %v36, 4294901760
  %919 = vmatpush1.msra.mxu0 %v918
  %920 = vmatprep.subr.mxu0 0.0
  %v921 = vand.u32 %v35, 4294901760
  %922 = vmatpush1.msra.mxu0 %v921
  %923 = vmatprep.subr.mxu0 0.0
  %v924 = vand.u32 %v34, 4294901760
  %925 = vmatpush1.msra.mxu0 %v924
  %926 = vmatprep.subr.mxu0 0.0
  %v927 = vand.u32 %v33, 4294901760
  %928 = vmatpush1.msra.mxu0 %v927
  %929 = vmatprep.subr.mxu0 0.0
  %v930 = vand.u32 %v32, 4294901760
  %931 = vmatpush1.msra.mxu0 %v930
  %932 = vmatprep.subr.mxu0 0.0
  %v933 = vand.u32 %v31, 4294901760
  %934 = vmatpush1.msra.mxu0 %v933
  %935 = vmatprep.subr.mxu0 0.0
  %v936 = vand.u32 %v30, 4294901760
  %937 = vmatpush1.msra.mxu0 %v936
  %938 = vmatprep.subr.mxu0 0.0
  %v939 = vand.u32 %v61, 4294901760
  %940 = vmatpush2.msra.mxu0 %v939
  %941 = vmatprep.subr.mxu0 0.0
  %v942 = vand.u32 %v60, 4294901760
  %943 = vmatpush2.msra.mxu0 %v942
  %944 = vmatprep.subr.mxu0 0.0
  %v945 = vand.u32 %v59, 4294901760
  %946 = vmatpush2.msra.mxu0 %v945
  %947 = vmatprep.subr.mxu0 0.0
  %v948 = vand.u32 %v58, 4294901760
  %949 = vmatpush2.msra.mxu0 %v948
  %950 = vmatprep.subr.mxu0 0.0
  %v951 = vand.u32 %v57, 4294901760
  %952 = vmatpush2.msra.mxu0 %v951
  %953 = vmatprep.subr.mxu0 0.0
  %v954 = vand.u32 %v56, 4294901760
  %955 = vmatpush2.msra.mxu0 %v954
  %956 = vmatprep.subr.mxu0 0.0
  %v957 = vand.u32 %v55, 4294901760
  %958 = vmatpush2.msra.mxu0 %v957
  %959 = vmatprep.subr.mxu0 0.0
  %v960 = vand.u32 %v54, 4294901760
  %961 = vmatpush2.msra.mxu0 %v960
  %962 = vmatprep.subr.mxu0 0.0
  %v963 = vand.u32 %v53, 4294901760
  %964 = vmatpush2.msra.mxu0 %v963
  %965 = vmatprep.subr.mxu0 0.0
  %v966 = vand.u32 %v52, 4294901760
  %967 = vmatpush2.msra.mxu0 %v966
  %968 = vmatprep.subr.mxu0 0.0
  %v969 = vand.u32 %v51, 4294901760
  %970 = vmatpush2.msra.mxu0 %v969
  %971 = vmatprep.subr.mxu0 0.0
  %v972 = vand.u32 %v50, 4294901760
  %973 = vmatpush2.msra.mxu0 %v972
  %974 = vmatprep.subr.mxu0 0.0
  %v975 = vand.u32 %v49, 4294901760
  %976 = vmatpush2.msra.mxu0 %v975
  %977 = vmatprep.subr.mxu0 0.0
  %v978 = vand.u32 %v48, 4294901760
  %979 = vmatpush2.msra.mxu0 %v978
  %980 = vmatprep.subr.mxu0 0.0
  %v981 = vand.u32 %v47, 4294901760
  %982 = vmatpush2.msra.mxu0 %v981
  %983 = vmatprep.subr.mxu0 0.0
  %v984 = vand.u32 %v46, 4294901760
  %985 = vmatpush2.msra.mxu0 %v984
  %v986 = vand.u32 %v21, 4294901760
  %987 = vmatprep.mubr.f32.mxu0 %v986
  %v988 = vand.u32 %v20, 4294901760
  %989 = vmatmul.mubr.f32.gmra.mxu0 %v988
  %v990 = vpop.f32.mrf.mxu0
  %v991 = vadd.f32 %v887, %v990
  %v992 = vpop.f32.mrf.mxu0
  %993 = vdwg.mxu0
  %994 = vmatprep.subr.mxu0 0.0
  %v995 = vand.u32 %v77, 4294901760
  %996 = vmatpush1.msra.mxu0 %v995
  %997 = vmatprep.subr.mxu0 0.0
  %v998 = vand.u32 %v76, 4294901760
  %999 = vmatpush1.msra.mxu0 %v998
  %1000 = vmatprep.subr.mxu0 0.0
  %v1001 = vand.u32 %v75, 4294901760
  %1002 = vmatpush1.msra.mxu0 %v1001
  %1003 = vmatprep.subr.mxu0 0.0
  %v1004 = vand.u32 %v74, 4294901760
  %1005 = vmatpush1.msra.mxu0 %v1004
  %1006 = vmatprep.subr.mxu0 0.0
  %v1007 = vand.u32 %v73, 4294901760
  %1008 = vmatpush1.msra.mxu0 %v1007
  %1009 = vmatprep.subr.mxu0 0.0
  %v1010 = vand.u32 %v72, 4294901760
  %1011 = vmatpush1.msra.mxu0 %v1010
  %1012 = vmatprep.subr.mxu0 0.0
  %v1013 = vand.u32 %v71, 4294901760
  %1014 = vmatpush1.msra.mxu0 %v1013
  %1015 = vmatprep.subr.mxu0 0.0
  %v1016 = vand.u32 %v70, 4294901760
  %1017 = vmatpush1.msra.mxu0 %v1016
  %1018 = vmatprep.subr.mxu0 0.0
  %v1019 = vand.u32 %v69, 4294901760
  %1020 = vmatpush1.msra.mxu0 %v1019
  %1021 = vmatprep.subr.mxu0 0.0
  %v1022 = vand.u32 %v68, 4294901760
  %1023 = vmatpush1.msra.mxu0 %v1022
  %1024 = vmatprep.subr.mxu0 0.0
  %v1025 = vand.u32 %v67, 4294901760
  %1026 = vmatpush1.msra.mxu0 %v1025
  %1027 = vmatprep.subr.mxu0 0.0
  %v1028 = vand.u32 %v66, 4294901760
  %1029 = vmatpush1.msra.mxu0 %v1028
  %1030 = vmatprep.subr.mxu0 0.0
  %v1031 = vand.u32 %v65, 4294901760
  %1032 = vmatpush1.msra.mxu0 %v1031
  %1033 = vmatprep.subr.mxu0 0.0
  %v1034 = vand.u32 %v64, 4294901760
  %1035 = vmatpush1.msra.mxu0 %v1034
  %1036 = vmatprep.subr.mxu0 0.0
  %v1037 = vand.u32 %v63, 4294901760
  %1038 = vmatpush1.msra.mxu0 %v1037
  %1039 = vmatprep.subr.mxu0 0.0
  %v1040 = vand.u32 %v62, 4294901760
  %1041 = vmatpush1.msra.mxu0 %v1040
  %1042 = vmatprep.subr.mxu0 0.0
  %v1043 = vand.u32 %v93, 4294901760
  %1044 = vmatpush2.msra.mxu0 %v1043
  %1045 = vmatprep.subr.mxu0 0.0
  %v1046 = vand.u32 %v92, 4294901760
  %1047 = vmatpush2.msra.mxu0 %v1046
  %1048 = vmatprep.subr.mxu0 0.0
  %v1049 = vand.u32 %v91, 4294901760
  %1050 = vmatpush2.msra.mxu0 %v1049
  %1051 = vmatprep.subr.mxu0 0.0
  %v1052 = vand.u32 %v90, 4294901760
  %1053 = vmatpush2.msra.mxu0 %v1052
  %1054 = vmatprep.subr.mxu0 0.0
  %v1055 = vand.u32 %v89, 4294901760
  %1056 = vmatpush2.msra.mxu0 %v1055
  %1057 = vmatprep.subr.mxu0 0.0
  %v1058 = vand.u32 %v88, 4294901760
  %1059 = vmatpush2.msra.mxu0 %v1058
  %1060 = vmatprep.subr.mxu0 0.0
  %v1061 = vand.u32 %v87, 4294901760
  %1062 = vmatpush2.msra.mxu0 %v1061
  %1063 = vmatprep.subr.mxu0 0.0
  %v1064 = vand.u32 %v86, 4294901760
  %1065 = vmatpush2.msra.mxu0 %v1064
  %1066 = vmatprep.subr.mxu0 0.0
  %v1067 = vand.u32 %v85, 4294901760
  %1068 = vmatpush2.msra.mxu0 %v1067
  %1069 = vmatprep.subr.mxu0 0.0
  %v1070 = vand.u32 %v84, 4294901760
  %1071 = vmatpush2.msra.mxu0 %v1070
  %1072 = vmatprep.subr.mxu0 0.0
  %v1073 = vand.u32 %v83, 4294901760
  %1074 = vmatpush2.msra.mxu0 %v1073
  %1075 = vmatprep.subr.mxu0 0.0
  %v1076 = vand.u32 %v82, 4294901760
  %1077 = vmatpush2.msra.mxu0 %v1076
  %1078 = vmatprep.subr.mxu0 0.0
  %v1079 = vand.u32 %v81, 4294901760
  %1080 = vmatpush2.msra.mxu0 %v1079
  %1081 = vmatprep.subr.mxu0 0.0
  %v1082 = vand.u32 %v80, 4294901760
  %1083 = vmatpush2.msra.mxu0 %v1082
  %1084 = vmatprep.subr.mxu0 0.0
  %v1085 = vand.u32 %v79, 4294901760
  %1086 = vmatpush2.msra.mxu0 %v1085
  %1087 = vmatprep.subr.mxu0 0.0
  %v1088 = vand.u32 %v78, 4294901760
  %1089 = vmatpush2.msra.mxu0 %v1088
  %v1090 = vand.u32 %v23, 4294901760
  %v1091 = vsub.f32 %v23, %v1090
  %v1092 = vand.u32 %v1091, 4294901760
  %v1093 = vsub.f32 %v1091, %v1092
  %v1094 = vand.u32 %v1093, 4294901760
  %1095 = vmatprep.mubr.f32.mxu0 %v1094
  %v1096 = vand.u32 %v22, 4294901760
  %v1097 = vsub.f32 %v22, %v1096
  %v1098 = vand.u32 %v1097, 4294901760
  %v1099 = vsub.f32 %v1097, %v1098
  %v1100 = vand.u32 %v1099, 4294901760
  %1101 = vmatmul.mubr.f32.gmra.mxu0 %v1100
  %v1102 = vpop.f32.mrf.mxu0
  %v1103 = vadd.f32 %v991, %v1102
  %v1104 = vpop.f32.mrf.mxu0
  %1105 = vdwg.mxu0
  %1106 = vmatprep.subr.mxu0 0.0
  %v1107 = vand.u32 %v77, 4294901760
  %v1108 = vsub.f32 %v77, %v1107
  %v1109 = vand.u32 %v1108, 4294901760
  %v1110 = vsub.f32 %v1108, %v1109
  %v1111 = vand.u32 %v1110, 4294901760
  %1112 = vmatpush1.msra.mxu0 %v1111
  %1113 = vmatprep.subr.mxu0 0.0
  %v1114 = vand.u32 %v76, 4294901760
  %v1115 = vsub.f32 %v76, %v1114
  %v1116 = vand.u32 %v1115, 4294901760
  %v1117 = vsub.f32 %v1115, %v1116
  %v1118 = vand.u32 %v1117, 4294901760
  %1119 = vmatpush1.msra.mxu0 %v1118
  %1120 = vmatprep.subr.mxu0 0.0
  %v1121 = vand.u32 %v75, 4294901760
  %v1122 = vsub.f32 %v75, %v1121
  %v1123 = vand.u32 %v1122, 4294901760
  %v1124 = vsub.f32 %v1122, %v1123
  %v1125 = vand.u32 %v1124, 4294901760
  %1126 = vmatpush1.msra.mxu0 %v1125
  %1127 = vmatprep.subr.mxu0 0.0
  %v1128 = vand.u32 %v74, 4294901760
  %v1129 = vsub.f32 %v74, %v1128
  %v1130 = vand.u32 %v1129, 4294901760
  %v1131 = vsub.f32 %v1129, %v1130
  %v1132 = vand.u32 %v1131, 4294901760
  %1133 = vmatpush1.msra.mxu0 %v1132
  %1134 = vmatprep.subr.mxu0 0.0
  %v1135 = vand.u32 %v73, 4294901760
  %v1136 = vsub.f32 %v73, %v1135
  %v1137 = vand.u32 %v1136, 4294901760
  %v1138 = vsub.f32 %v1136, %v1137
  %v1139 = vand.u32 %v1138, 4294901760
  %1140 = vmatpush1.msra.mxu0 %v1139
  %1141 = vmatprep.subr.mxu0 0.0
  %v1142 = vand.u32 %v72, 4294901760
  %v1143 = vsub.f32 %v72, %v1142
  %v1144 = vand.u32 %v1143, 4294901760
  %v1145 = vsub.f32 %v1143, %v1144
  %v1146 = vand.u32 %v1145, 4294901760
  %1147 = vmatpush1.msra.mxu0 %v1146
  %1148 = vmatprep.subr.mxu0 0.0
  %v1149 = vand.u32 %v71, 4294901760
  %v1150 = vsub.f32 %v71, %v1149
  %v1151 = vand.u32 %v1150, 4294901760
  %v1152 = vsub.f32 %v1150, %v1151
  %v1153 = vand.u32 %v1152, 4294901760
  %1154 = vmatpush1.msra.mxu0 %v1153
  %1155 = vmatprep.subr.mxu0 0.0
  %v1156 = vand.u32 %v70, 4294901760
  %v1157 = vsub.f32 %v70, %v1156
  %v1158 = vand.u32 %v1157, 4294901760
  %v1159 = vsub.f32 %v1157, %v1158
  %v1160 = vand.u32 %v1159, 4294901760
  %1161 = vmatpush1.msra.mxu0 %v1160
  %1162 = vmatprep.subr.mxu0 0.0
  %v1163 = vand.u32 %v69, 4294901760
  %v1164 = vsub.f32 %v69, %v1163
  %v1165 = vand.u32 %v1164, 4294901760
  %v1166 = vsub.f32 %v1164, %v1165
  %v1167 = vand.u32 %v1166, 4294901760
  %1168 = vmatpush1.msra.mxu0 %v1167
  %1169 = vmatprep.subr.mxu0 0.0
  %v1170 = vand.u32 %v68, 4294901760
  %v1171 = vsub.f32 %v68, %v1170
  %v1172 = vand.u32 %v1171, 4294901760
  %v1173 = vsub.f32 %v1171, %v1172
  %v1174 = vand.u32 %v1173, 4294901760
  %1175 = vmatpush1.msra.mxu0 %v1174
  %1176 = vmatprep.subr.mxu0 0.0
  %v1177 = vand.u32 %v67, 4294901760
  %v1178 = vsub.f32 %v67, %v1177
  %v1179 = vand.u32 %v1178, 4294901760
  %v1180 = vsub.f32 %v1178, %v1179
  %v1181 = vand.u32 %v1180, 4294901760
  %1182 = vmatpush1.msra.mxu0 %v1181
  %1183 = vmatprep.subr.mxu0 0.0
  %v1184 = vand.u32 %v66, 4294901760
  %v1185 = vsub.f32 %v66, %v1184
  %v1186 = vand.u32 %v1185, 4294901760
  %v1187 = vsub.f32 %v1185, %v1186
  %v1188 = vand.u32 %v1187, 4294901760
  %1189 = vmatpush1.msra.mxu0 %v1188
  %1190 = vmatprep.subr.mxu0 0.0
  %v1191 = vand.u32 %v65, 4294901760
  %v1192 = vsub.f32 %v65, %v1191
  %v1193 = vand.u32 %v1192, 4294901760
  %v1194 = vsub.f32 %v1192, %v1193
  %v1195 = vand.u32 %v1194, 4294901760
  %1196 = vmatpush1.msra.mxu0 %v1195
  %1197 = vmatprep.subr.mxu0 0.0
  %v1198 = vand.u32 %v64, 4294901760
  %v1199 = vsub.f32 %v64, %v1198
  %v1200 = vand.u32 %v1199, 4294901760
  %v1201 = vsub.f32 %v1199, %v1200
  %v1202 = vand.u32 %v1201, 4294901760
  %1203 = vmatpush1.msra.mxu0 %v1202
  %1204 = vmatprep.subr.mxu0 0.0
  %v1205 = vand.u32 %v63, 4294901760
  %v1206 = vsub.f32 %v63, %v1205
  %v1207 = vand.u32 %v1206, 4294901760
  %v1208 = vsub.f32 %v1206, %v1207
  %v1209 = vand.u32 %v1208, 4294901760
  %1210 = vmatpush1.msra.mxu0 %v1209
  %1211 = vmatprep.subr.mxu0 0.0
  %v1212 = vand.u32 %v62, 4294901760
  %v1213 = vsub.f32 %v62, %v1212
  %v1214 = vand.u32 %v1213, 4294901760
  %v1215 = vsub.f32 %v1213, %v1214
  %v1216 = vand.u32 %v1215, 4294901760
  %1217 = vmatpush1.msra.mxu0 %v1216
  %1218 = vmatprep.subr.mxu0 0.0
  %v1219 = vand.u32 %v93, 4294901760
  %v1220 = vsub.f32 %v93, %v1219
  %v1221 = vand.u32 %v1220, 4294901760
  %v1222 = vsub.f32 %v1220, %v1221
  %v1223 = vand.u32 %v1222, 4294901760
  %1224 = vmatpush2.msra.mxu0 %v1223
  %1225 = vmatprep.subr.mxu0 0.0
  %v1226 = vand.u32 %v92, 4294901760
  %v1227 = vsub.f32 %v92, %v1226
  %v1228 = vand.u32 %v1227, 4294901760
  %v1229 = vsub.f32 %v1227, %v1228
  %v1230 = vand.u32 %v1229, 4294901760
  %1231 = vmatpush2.msra.mxu0 %v1230
  %1232 = vmatprep.subr.mxu0 0.0
  %v1233 = vand.u32 %v91, 4294901760
  %v1234 = vsub.f32 %v91, %v1233
  %v1235 = vand.u32 %v1234, 4294901760
  %v1236 = vsub.f32 %v1234, %v1235
  %v1237 = vand.u32 %v1236, 4294901760
  %1238 = vmatpush2.msra.mxu0 %v1237
  %1239 = vmatprep.subr.mxu0 0.0
  %v1240 = vand.u32 %v90, 4294901760
  %v1241 = vsub.f32 %v90, %v1240
  %v1242 = vand.u32 %v1241, 4294901760
  %v1243 = vsub.f32 %v1241, %v1242
  %v1244 = vand.u32 %v1243, 4294901760
  %1245 = vmatpush2.msra.mxu0 %v1244
  %1246 = vmatprep.subr.mxu0 0.0
  %v1247 = vand.u32 %v89, 4294901760
  %v1248 = vsub.f32 %v89, %v1247
  %v1249 = vand.u32 %v1248, 4294901760
  %v1250 = vsub.f32 %v1248, %v1249
  %v1251 = vand.u32 %v1250, 4294901760
  %1252 = vmatpush2.msra.mxu0 %v1251
  %1253 = vmatprep.subr.mxu0 0.0
  %v1254 = vand.u32 %v88, 4294901760
  %v1255 = vsub.f32 %v88, %v1254
  %v1256 = vand.u32 %v1255, 4294901760
  %v1257 = vsub.f32 %v1255, %v1256
  %v1258 = vand.u32 %v1257, 4294901760
  %1259 = vmatpush2.msra.mxu0 %v1258
  %1260 = vmatprep.subr.mxu0 0.0
  %v1261 = vand.u32 %v87, 4294901760
  %v1262 = vsub.f32 %v87, %v1261
  %v1263 = vand.u32 %v1262, 4294901760
  %v1264 = vsub.f32 %v1262, %v1263
  %v1265 = vand.u32 %v1264, 4294901760
  %1266 = vmatpush2.msra.mxu0 %v1265
  %1267 = vmatprep.subr.mxu0 0.0
  %v1268 = vand.u32 %v86, 4294901760
  %v1269 = vsub.f32 %v86, %v1268
  %v1270 = vand.u32 %v1269, 4294901760
  %v1271 = vsub.f32 %v1269, %v1270
  %v1272 = vand.u32 %v1271, 4294901760
  %1273 = vmatpush2.msra.mxu0 %v1272
  %1274 = vmatprep.subr.mxu0 0.0
  %v1275 = vand.u32 %v85, 4294901760
  %v1276 = vsub.f32 %v85, %v1275
  %v1277 = vand.u32 %v1276, 4294901760
  %v1278 = vsub.f32 %v1276, %v1277
  %v1279 = vand.u32 %v1278, 4294901760
  %1280 = vmatpush2.msra.mxu0 %v1279
  %1281 = vmatprep.subr.mxu0 0.0
  %v1282 = vand.u32 %v84, 4294901760
  %v1283 = vsub.f32 %v84, %v1282
  %v1284 = vand.u32 %v1283, 4294901760
  %v1285 = vsub.f32 %v1283, %v1284
  %v1286 = vand.u32 %v1285, 4294901760
  %1287 = vmatpush2.msra.mxu0 %v1286
  %1288 = vmatprep.subr.mxu0 0.0
  %v1289 = vand.u32 %v83, 4294901760
  %v1290 = vsub.f32 %v83, %v1289
  %v1291 = vand.u32 %v1290, 4294901760
  %v1292 = vsub.f32 %v1290, %v1291
  %v1293 = vand.u32 %v1292, 4294901760
  %1294 = vmatpush2.msra.mxu0 %v1293
  %1295 = vmatprep.subr.mxu0 0.0
  %v1296 = vand.u32 %v82, 4294901760
  %v1297 = vsub.f32 %v82, %v1296
  %v1298 = vand.u32 %v1297, 4294901760
  %v1299 = vsub.f32 %v1297, %v1298
  %v1300 = vand.u32 %v1299, 4294901760
  %1301 = vmatpush2.msra.mxu0 %v1300
  %1302 = vmatprep.subr.mxu0 0.0
  %v1303 = vand.u32 %v81, 4294901760
  %v1304 = vsub.f32 %v81, %v1303
  %v1305 = vand.u32 %v1304, 4294901760
  %v1306 = vsub.f32 %v1304, %v1305
  %v1307 = vand.u32 %v1306, 4294901760
  %1308 = vmatpush2.msra.mxu0 %v1307
  %1309 = vmatprep.subr.mxu0 0.0
  %v1310 = vand.u32 %v80, 4294901760
  %v1311 = vsub.f32 %v80, %v1310
  %v1312 = vand.u32 %v1311, 4294901760
  %v1313 = vsub.f32 %v1311, %v1312
  %v1314 = vand.u32 %v1313, 4294901760
  %1315 = vmatpush2.msra.mxu0 %v1314
  %1316 = vmatprep.subr.mxu0 0.0
  %v1317 = vand.u32 %v79, 4294901760
  %v1318 = vsub.f32 %v79, %v1317
  %v1319 = vand.u32 %v1318, 4294901760
  %v1320 = vsub.f32 %v1318, %v1319
  %v1321 = vand.u32 %v1320, 4294901760
  %1322 = vmatpush2.msra.mxu0 %v1321
  %1323 = vmatprep.subr.mxu0 0.0
  %v1324 = vand.u32 %v78, 4294901760
  %v1325 = vsub.f32 %v78, %v1324
  %v1326 = vand.u32 %v1325, 4294901760
  %v1327 = vsub.f32 %v1325, %v1326
  %v1328 = vand.u32 %v1327, 4294901760
  %1329 = vmatpush2.msra.mxu0 %v1328
  %v1330 = vand.u32 %v23, 4294901760
  %1331 = vmatprep.mubr.f32.mxu0 %v1330
  %v1332 = vand.u32 %v22, 4294901760
  %1333 = vmatmul.mubr.f32.gmra.mxu0 %v1332
  %v1334 = vpop.f32.mrf.mxu0
  %v1335 = vadd.f32 %v1103, %v1334
  %v1336 = vpop.f32.mrf.mxu0
  %1337 = vdwg.mxu0
  %1338 = vmatprep.subr.mxu0 0.0
  %v1339 = vand.u32 %v77, 4294901760
  %v1340 = vsub.f32 %v77, %v1339
  %1341 = vmatpush1.msra.mxu0 %v1340
  %1342 = vmatprep.subr.mxu0 0.0
  %v1343 = vand.u32 %v76, 4294901760
  %v1344 = vsub.f32 %v76, %v1343
  %1345 = vmatpush1.msra.mxu0 %v1344
  %1346 = vmatprep.subr.mxu0 0.0
  %v1347 = vand.u32 %v75, 4294901760
  %v1348 = vsub.f32 %v75, %v1347
  %1349 = vmatpush1.msra.mxu0 %v1348
  %1350 = vmatprep.subr.mxu0 0.0
  %v1351 = vand.u32 %v74, 4294901760
  %v1352 = vsub.f32 %v74, %v1351
  %1353 = vmatpush1.msra.mxu0 %v1352
  %1354 = vmatprep.subr.mxu0 0.0
  %v1355 = vand.u32 %v73, 4294901760
  %v1356 = vsub.f32 %v73, %v1355
  %1357 = vmatpush1.msra.mxu0 %v1356
  %1358 = vmatprep.subr.mxu0 0.0
  %v1359 = vand.u32 %v72, 4294901760
  %v1360 = vsub.f32 %v72, %v1359
  %1361 = vmatpush1.msra.mxu0 %v1360
  %1362 = vmatprep.subr.mxu0 0.0
  %v1363 = vand.u32 %v71, 4294901760
  %v1364 = vsub.f32 %v71, %v1363
  %1365 = vmatpush1.msra.mxu0 %v1364
  %1366 = vmatprep.subr.mxu0 0.0
  %v1367 = vand.u32 %v70, 4294901760
  %v1368 = vsub.f32 %v70, %v1367
  %1369 = vmatpush1.msra.mxu0 %v1368
  %1370 = vmatprep.subr.mxu0 0.0
  %v1371 = vand.u32 %v69, 4294901760
  %v1372 = vsub.f32 %v69, %v1371
  %1373 = vmatpush1.msra.mxu0 %v1372
  %1374 = vmatprep.subr.mxu0 0.0
  %v1375 = vand.u32 %v68, 4294901760
  %v1376 = vsub.f32 %v68, %v1375
  %1377 = vmatpush1.msra.mxu0 %v1376
  %1378 = vmatprep.subr.mxu0 0.0
  %v1379 = vand.u32 %v67, 4294901760
  %v1380 = vsub.f32 %v67, %v1379
  %1381 = vmatpush1.msra.mxu0 %v1380
  %1382 = vmatprep.subr.mxu0 0.0
  %v1383 = vand.u32 %v66, 4294901760
  %v1384 = vsub.f32 %v66, %v1383
  %1385 = vmatpush1.msra.mxu0 %v1384
  %1386 = vmatprep.subr.mxu0 0.0
  %v1387 = vand.u32 %v65, 4294901760
  %v1388 = vsub.f32 %v65, %v1387
  %1389 = vmatpush1.msra.mxu0 %v1388
  %1390 = vmatprep.subr.mxu0 0.0
  %v1391 = vand.u32 %v64, 4294901760
  %v1392 = vsub.f32 %v64, %v1391
  %1393 = vmatpush1.msra.mxu0 %v1392
  %1394 = vmatprep.subr.mxu0 0.0
  %v1395 = vand.u32 %v63, 4294901760
  %v1396 = vsub.f32 %v63, %v1395
  %1397 = vmatpush1.msra.mxu0 %v1396
  %1398 = vmatprep.subr.mxu0 0.0
  %v1399 = vand.u32 %v62, 4294901760
  %v1400 = vsub.f32 %v62, %v1399
  %1401 = vmatpush1.msra.mxu0 %v1400
  %1402 = vmatprep.subr.mxu0 0.0
  %v1403 = vand.u32 %v93, 4294901760
  %v1404 = vsub.f32 %v93, %v1403
  %1405 = vmatpush2.msra.mxu0 %v1404
  %1406 = vmatprep.subr.mxu0 0.0
  %v1407 = vand.u32 %v92, 4294901760
  %v1408 = vsub.f32 %v92, %v1407
  %1409 = vmatpush2.msra.mxu0 %v1408
  %1410 = vmatprep.subr.mxu0 0.0
  %v1411 = vand.u32 %v91, 4294901760
  %v1412 = vsub.f32 %v91, %v1411
  %1413 = vmatpush2.msra.mxu0 %v1412
  %1414 = vmatprep.subr.mxu0 0.0
  %v1415 = vand.u32 %v90, 4294901760
  %v1416 = vsub.f32 %v90, %v1415
  %1417 = vmatpush2.msra.mxu0 %v1416
  %1418 = vmatprep.subr.mxu0 0.0
  %v1419 = vand.u32 %v89, 4294901760
  %v1420 = vsub.f32 %v89, %v1419
  %1421 = vmatpush2.msra.mxu0 %v1420
  %1422 = vmatprep.subr.mxu0 0.0
  %v1423 = vand.u32 %v88, 4294901760
  %v1424 = vsub.f32 %v88, %v1423
  %1425 = vmatpush2.msra.mxu0 %v1424
  %1426 = vmatprep.subr.mxu0 0.0
  %v1427 = vand.u32 %v87, 4294901760
  %v1428 = vsub.f32 %v87, %v1427
  %1429 = vmatpush2.msra.mxu0 %v1428
  %1430 = vmatprep.subr.mxu0 0.0
  %v1431 = vand.u32 %v86, 4294901760
  %v1432 = vsub.f32 %v86, %v1431
  %1433 = vmatpush2.msra.mxu0 %v1432
  %1434 = vmatprep.subr.mxu0 0.0
  %v1435 = vand.u32 %v85, 4294901760
  %v1436 = vsub.f32 %v85, %v1435
  %1437 = vmatpush2.msra.mxu0 %v1436
  %1438 = vmatprep.subr.mxu0 0.0
  %v1439 = vand.u32 %v84, 4294901760
  %v1440 = vsub.f32 %v84, %v1439
  %1441 = vmatpush2.msra.mxu0 %v1440
  %1442 = vmatprep.subr.mxu0 0.0
  %v1443 = vand.u32 %v83, 4294901760
  %v1444 = vsub.f32 %v83, %v1443
  %1445 = vmatpush2.msra.mxu0 %v1444
  %1446 = vmatprep.subr.mxu0 0.0
  %v1447 = vand.u32 %v82, 4294901760
  %v1448 = vsub.f32 %v82, %v1447
  %1449 = vmatpush2.msra.mxu0 %v1448
  %1450 = vmatprep.subr.mxu0 0.0
  %v1451 = vand.u32 %v81, 4294901760
  %v1452 = vsub.f32 %v81, %v1451
  %1453 = vmatpush2.msra.mxu0 %v1452
  %1454 = vmatprep.subr.mxu0 0.0
  %v1455 = vand.u32 %v80, 4294901760
  %v1456 = vsub.f32 %v80, %v1455
  %1457 = vmatpush2.msra.mxu0 %v1456
  %1458 = vmatprep.subr.mxu0 0.0
  %v1459 = vand.u32 %v79, 4294901760
  %v1460 = vsub.f32 %v79, %v1459
  %1461 = vmatpush2.msra.mxu0 %v1460
  %1462 = vmatprep.subr.mxu0 0.0
  %v1463 = vand.u32 %v78, 4294901760
  %v1464 = vsub.f32 %v78, %v1463
  %1465 = vmatpush2.msra.mxu0 %v1464
  %v1466 = vand.u32 %v23, 4294901760
  %v1467 = vsub.f32 %v23, %v1466
  %1468 = vmatprep.mubr.f32.mxu0 %v1467
  %v1469 = vand.u32 %v22, 4294901760
  %v1470 = vsub.f32 %v22, %v1469
  %1471 = vmatmul.mubr.f32.gmra.mxu0 %v1470
  %v1472 = vpop.f32.mrf.mxu0
  %v1473 = vadd.f32 %v1335, %v1472
  %v1474 = vpop.f32.mrf.mxu0
  %1475 = vdwg.mxu0
  %1476 = vmatprep.subr.mxu0 0.0
  %v1477 = vand.u32 %v77, 4294901760
  %1478 = vmatpush1.msra.mxu0 %v1477
  %1479 = vmatprep.subr.mxu0 0.0
  %v1480 = vand.u32 %v76, 4294901760
  %1481 = vmatpush1.msra.mxu0 %v1480
  %1482 = vmatprep.subr.mxu0 0.0
  %v1483 = vand.u32 %v75, 4294901760
  %1484 = vmatpush1.msra.mxu0 %v1483
  %1485 = vmatprep.subr.mxu0 0.0
  %v1486 = vand.u32 %v74, 4294901760
  %1487 = vmatpush1.msra.mxu0 %v1486
  %1488 = vmatprep.subr.mxu0 0.0
  %v1489 = vand.u32 %v73, 4294901760
  %1490 = vmatpush1.msra.mxu0 %v1489
  %1491 = vmatprep.subr.mxu0 0.0
  %v1492 = vand.u32 %v72, 4294901760
  %1493 = vmatpush1.msra.mxu0 %v1492
  %1494 = vmatprep.subr.mxu0 0.0
  %v1495 = vand.u32 %v71, 4294901760
  %1496 = vmatpush1.msra.mxu0 %v1495
  %1497 = vmatprep.subr.mxu0 0.0
  %v1498 = vand.u32 %v70, 4294901760
  %1499 = vmatpush1.msra.mxu0 %v1498
  %1500 = vmatprep.subr.mxu0 0.0
  %v1501 = vand.u32 %v69, 4294901760
  %1502 = vmatpush1.msra.mxu0 %v1501
  %1503 = vmatprep.subr.mxu0 0.0
  %v1504 = vand.u32 %v68, 4294901760
  %1505 = vmatpush1.msra.mxu0 %v1504
  %1506 = vmatprep.subr.mxu0 0.0
  %v1507 = vand.u32 %v67, 4294901760
  %1508 = vmatpush1.msra.mxu0 %v1507
  %1509 = vmatprep.subr.mxu0 0.0
  %v1510 = vand.u32 %v66, 4294901760
  %1511 = vmatpush1.msra.mxu0 %v1510
  %1512 = vmatprep.subr.mxu0 0.0
  %v1513 = vand.u32 %v65, 4294901760
  %1514 = vmatpush1.msra.mxu0 %v1513
  %1515 = vmatprep.subr.mxu0 0.0
  %v1516 = vand.u32 %v64, 4294901760
  %1517 = vmatpush1.msra.mxu0 %v1516
  %1518 = vmatprep.subr.mxu0 0.0
  %v1519 = vand.u32 %v63, 4294901760
  %1520 = vmatpush1.msra.mxu0 %v1519
  %1521 = vmatprep.subr.mxu0 0.0
  %v1522 = vand.u32 %v62, 4294901760
  %1523 = vmatpush1.msra.mxu0 %v1522
  %1524 = vmatprep.subr.mxu0 0.0
  %v1525 = vand.u32 %v93, 4294901760
  %1526 = vmatpush2.msra.mxu0 %v1525
  %1527 = vmatprep.subr.mxu0 0.0
  %v1528 = vand.u32 %v92, 4294901760
  %1529 = vmatpush2.msra.mxu0 %v1528
  %1530 = vmatprep.subr.mxu0 0.0
  %v1531 = vand.u32 %v91, 4294901760
  %1532 = vmatpush2.msra.mxu0 %v1531
  %1533 = vmatprep.subr.mxu0 0.0
  %v1534 = vand.u32 %v90, 4294901760
  %1535 = vmatpush2.msra.mxu0 %v1534
  %1536 = vmatprep.subr.mxu0 0.0
  %v1537 = vand.u32 %v89, 4294901760
  %1538 = vmatpush2.msra.mxu0 %v1537
  %1539 = vmatprep.subr.mxu0 0.0
  %v1540 = vand.u32 %v88, 4294901760
  %1541 = vmatpush2.msra.mxu0 %v1540
  %1542 = vmatprep.subr.mxu0 0.0
  %v1543 = vand.u32 %v87, 4294901760
  %1544 = vmatpush2.msra.mxu0 %v1543
  %1545 = vmatprep.subr.mxu0 0.0
  %v1546 = vand.u32 %v86, 4294901760
  %1547 = vmatpush2.msra.mxu0 %v1546
  %1548 = vmatprep.subr.mxu0 0.0
  %v1549 = vand.u32 %v85, 4294901760
  %1550 = vmatpush2.msra.mxu0 %v1549
  %1551 = vmatprep.subr.mxu0 0.0
  %v1552 = vand.u32 %v84, 4294901760
  %1553 = vmatpush2.msra.mxu0 %v1552
  %1554 = vmatprep.subr.mxu0 0.0
  %v1555 = vand.u32 %v83, 4294901760
  %1556 = vmatpush2.msra.mxu0 %v1555
  %1557 = vmatprep.subr.mxu0 0.0
  %v1558 = vand.u32 %v82, 4294901760
  %1559 = vmatpush2.msra.mxu0 %v1558
  %1560 = vmatprep.subr.mxu0 0.0
  %v1561 = vand.u32 %v81, 4294901760
  %1562 = vmatpush2.msra.mxu0 %v1561
  %1563 = vmatprep.subr.mxu0 0.0
  %v1564 = vand.u32 %v80, 4294901760
  %1565 = vmatpush2.msra.mxu0 %v1564
  %1566 = vmatprep.subr.mxu0 0.0
  %v1567 = vand.u32 %v79, 4294901760
  %1568 = vmatpush2.msra.mxu0 %v1567
  %1569 = vmatprep.subr.mxu0 0.0
  %v1570 = vand.u32 %v78, 4294901760
  %1571 = vmatpush2.msra.mxu0 %v1570
  %v1572 = vand.u32 %v23, 4294901760
  %v1573 = vsub.f32 %v23, %v1572
  %v1574 = vand.u32 %v1573, 4294901760
  %1575 = vmatprep.mubr.f32.mxu0 %v1574
  %v1576 = vand.u32 %v22, 4294901760
  %v1577 = vsub.f32 %v22, %v1576
  %v1578 = vand.u32 %v1577, 4294901760
  %1579 = vmatmul.mubr.f32.gmra.mxu0 %v1578
  %v1580 = vpop.f32.mrf.mxu0
  %v1581 = vadd.f32 %v1473, %v1580
  %v1582 = vpop.f32.mrf.mxu0
  %1583 = vdwg.mxu0
  %1584 = vmatprep.subr.mxu0 0.0
  %v1585 = vand.u32 %v77, 4294901760
  %v1586 = vsub.f32 %v77, %v1585
  %v1587 = vand.u32 %v1586, 4294901760
  %1588 = vmatpush1.msra.mxu0 %v1587
  %1589 = vmatprep.subr.mxu0 0.0
  %v1590 = vand.u32 %v76, 4294901760
  %v1591 = vsub.f32 %v76, %v1590
  %v1592 = vand.u32 %v1591, 4294901760
  %1593 = vmatpush1.msra.mxu0 %v1592
  %1594 = vmatprep.subr.mxu0 0.0
  %v1595 = vand.u32 %v75, 4294901760
  %v1596 = vsub.f32 %v75, %v1595
  %v1597 = vand.u32 %v1596, 4294901760
  %1598 = vmatpush1.msra.mxu0 %v1597
  %1599 = vmatprep.subr.mxu0 0.0
  %v1600 = vand.u32 %v74, 4294901760
  %v1601 = vsub.f32 %v74, %v1600
  %v1602 = vand.u32 %v1601, 4294901760
  %1603 = vmatpush1.msra.mxu0 %v1602
  %1604 = vmatprep.subr.mxu0 0.0
  %v1605 = vand.u32 %v73, 4294901760
  %v1606 = vsub.f32 %v73, %v1605
  %v1607 = vand.u32 %v1606, 4294901760
  %1608 = vmatpush1.msra.mxu0 %v1607
  %1609 = vmatprep.subr.mxu0 0.0
  %v1610 = vand.u32 %v72, 4294901760
  %v1611 = vsub.f32 %v72, %v1610
  %v1612 = vand.u32 %v1611, 4294901760
  %1613 = vmatpush1.msra.mxu0 %v1612
  %1614 = vmatprep.subr.mxu0 0.0
  %v1615 = vand.u32 %v71, 4294901760
  %v1616 = vsub.f32 %v71, %v1615
  %v1617 = vand.u32 %v1616, 4294901760
  %1618 = vmatpush1.msra.mxu0 %v1617
  %1619 = vmatprep.subr.mxu0 0.0
  %v1620 = vand.u32 %v70, 4294901760
  %v1621 = vsub.f32 %v70, %v1620
  %v1622 = vand.u32 %v1621, 4294901760
  %1623 = vmatpush1.msra.mxu0 %v1622
  %1624 = vmatprep.subr.mxu0 0.0
  %v1625 = vand.u32 %v69, 4294901760
  %v1626 = vsub.f32 %v69, %v1625
  %v1627 = vand.u32 %v1626, 4294901760
  %1628 = vmatpush1.msra.mxu0 %v1627
  %1629 = vmatprep.subr.mxu0 0.0
  %v1630 = vand.u32 %v68, 4294901760
  %v1631 = vsub.f32 %v68, %v1630
  %v1632 = vand.u32 %v1631, 4294901760
  %1633 = vmatpush1.msra.mxu0 %v1632
  %1634 = vmatprep.subr.mxu0 0.0
  %v1635 = vand.u32 %v67, 4294901760
  %v1636 = vsub.f32 %v67, %v1635
  %v1637 = vand.u32 %v1636, 4294901760
  %1638 = vmatpush1.msra.mxu0 %v1637
  %1639 = vmatprep.subr.mxu0 0.0
  %v1640 = vand.u32 %v66, 4294901760
  %v1641 = vsub.f32 %v66, %v1640
  %v1642 = vand.u32 %v1641, 4294901760
  %1643 = vmatpush1.msra.mxu0 %v1642
  %1644 = vmatprep.subr.mxu0 0.0
  %v1645 = vand.u32 %v65, 4294901760
  %v1646 = vsub.f32 %v65, %v1645
  %v1647 = vand.u32 %v1646, 4294901760
  %1648 = vmatpush1.msra.mxu0 %v1647
  %1649 = vmatprep.subr.mxu0 0.0
  %v1650 = vand.u32 %v64, 4294901760
  %v1651 = vsub.f32 %v64, %v1650
  %v1652 = vand.u32 %v1651, 4294901760
  %1653 = vmatpush1.msra.mxu0 %v1652
  %1654 = vmatprep.subr.mxu0 0.0
  %v1655 = vand.u32 %v63, 4294901760
  %v1656 = vsub.f32 %v63, %v1655
  %v1657 = vand.u32 %v1656, 4294901760
  %1658 = vmatpush1.msra.mxu0 %v1657
  %1659 = vmatprep.subr.mxu0 0.0
  %v1660 = vand.u32 %v62, 4294901760
  %v1661 = vsub.f32 %v62, %v1660
  %v1662 = vand.u32 %v1661, 4294901760
  %1663 = vmatpush1.msra.mxu0 %v1662
  %1664 = vmatprep.subr.mxu0 0.0
  %v1665 = vand.u32 %v93, 4294901760
  %v1666 = vsub.f32 %v93, %v1665
  %v1667 = vand.u32 %v1666, 4294901760
  %1668 = vmatpush2.msra.mxu0 %v1667
  %1669 = vmatprep.subr.mxu0 0.0
  %v1670 = vand.u32 %v92, 4294901760
  %v1671 = vsub.f32 %v92, %v1670
  %v1672 = vand.u32 %v1671, 4294901760
  %1673 = vmatpush2.msra.mxu0 %v1672
  %1674 = vmatprep.subr.mxu0 0.0
  %v1675 = vand.u32 %v91, 4294901760
  %v1676 = vsub.f32 %v91, %v1675
  %v1677 = vand.u32 %v1676, 4294901760
  %1678 = vmatpush2.msra.mxu0 %v1677
  %1679 = vmatprep.subr.mxu0 0.0
  %v1680 = vand.u32 %v90, 4294901760
  %v1681 = vsub.f32 %v90, %v1680
  %v1682 = vand.u32 %v1681, 4294901760
  %1683 = vmatpush2.msra.mxu0 %v1682
  %1684 = vmatprep.subr.mxu0 0.0
  %v1685 = vand.u32 %v89, 4294901760
  %v1686 = vsub.f32 %v89, %v1685
  %v1687 = vand.u32 %v1686, 4294901760
  %1688 = vmatpush2.msra.mxu0 %v1687
  %1689 = vmatprep.subr.mxu0 0.0
  %v1690 = vand.u32 %v88, 4294901760
  %v1691 = vsub.f32 %v88, %v1690
  %v1692 = vand.u32 %v1691, 4294901760
  %1693 = vmatpush2.msra.mxu0 %v1692
  %1694 = vmatprep.subr.mxu0 0.0
  %v1695 = vand.u32 %v87, 4294901760
  %v1696 = vsub.f32 %v87, %v1695
  %v1697 = vand.u32 %v1696, 4294901760
  %1698 = vmatpush2.msra.mxu0 %v1697
  %1699 = vmatprep.subr.mxu0 0.0
  %v1700 = vand.u32 %v86, 4294901760
  %v1701 = vsub.f32 %v86, %v1700
  %v1702 = vand.u32 %v1701, 4294901760
  %1703 = vmatpush2.msra.mxu0 %v1702
  %1704 = vmatprep.subr.mxu0 0.0
  %v1705 = vand.u32 %v85, 4294901760
  %v1706 = vsub.f32 %v85, %v1705
  %v1707 = vand.u32 %v1706, 4294901760
  %1708 = vmatpush2.msra.mxu0 %v1707
  %1709 = vmatprep.subr.mxu0 0.0
  %v1710 = vand.u32 %v84, 4294901760
  %v1711 = vsub.f32 %v84, %v1710
  %v1712 = vand.u32 %v1711, 4294901760
  %1713 = vmatpush2.msra.mxu0 %v1712
  %1714 = vmatprep.subr.mxu0 0.0
  %v1715 = vand.u32 %v83, 4294901760
  %v1716 = vsub.f32 %v83, %v1715
  %v1717 = vand.u32 %v1716, 4294901760
  %1718 = vmatpush2.msra.mxu0 %v1717
  %1719 = vmatprep.subr.mxu0 0.0
  %v1720 = vand.u32 %v82, 4294901760
  %v1721 = vsub.f32 %v82, %v1720
  %v1722 = vand.u32 %v1721, 4294901760
  %1723 = vmatpush2.msra.mxu0 %v1722
  %1724 = vmatprep.subr.mxu0 0.0
  %v1725 = vand.u32 %v81, 4294901760
  %v1726 = vsub.f32 %v81, %v1725
  %v1727 = vand.u32 %v1726, 4294901760
  %1728 = vmatpush2.msra.mxu0 %v1727
  %1729 = vmatprep.subr.mxu0 0.0
  %v1730 = vand.u32 %v80, 4294901760
  %v1731 = vsub.f32 %v80, %v1730
  %v1732 = vand.u32 %v1731, 4294901760
  %1733 = vmatpush2.msra.mxu0 %v1732
  %1734 = vmatprep.subr.mxu0 0.0
  %v1735 = vand.u32 %v79, 4294901760
  %v1736 = vsub.f32 %v79, %v1735
  %v1737 = vand.u32 %v1736, 4294901760
  %1738 = vmatpush2.msra.mxu0 %v1737
  %1739 = vmatprep.subr.mxu0 0.0
  %v1740 = vand.u32 %v78, 4294901760
  %v1741 = vsub.f32 %v78, %v1740
  %v1742 = vand.u32 %v1741, 4294901760
  %1743 = vmatpush2.msra.mxu0 %v1742
  %v1744 = vand.u32 %v23, 4294901760
  %1745 = vmatprep.mubr.f32.mxu0 %v1744
  %v1746 = vand.u32 %v22, 4294901760
  %1747 = vmatmul.mubr.f32.gmra.mxu0 %v1746
  %v1748 = vpop.f32.mrf.mxu0
  %v1749 = vadd.f32 %v1581, %v1748
  %v1750 = vpop.f32.mrf.mxu0
  %1751 = vdwg.mxu0
  %1752 = vmatprep.subr.mxu0 0.0
  %v1753 = vand.u32 %v77, 4294901760
  %1754 = vmatpush1.msra.mxu0 %v1753
  %1755 = vmatprep.subr.mxu0 0.0
  %v1756 = vand.u32 %v76, 4294901760
  %1757 = vmatpush1.msra.mxu0 %v1756
  %1758 = vmatprep.subr.mxu0 0.0
  %v1759 = vand.u32 %v75, 4294901760
  %1760 = vmatpush1.msra.mxu0 %v1759
  %1761 = vmatprep.subr.mxu0 0.0
  %v1762 = vand.u32 %v74, 4294901760
  %1763 = vmatpush1.msra.mxu0 %v1762
  %1764 = vmatprep.subr.mxu0 0.0
  %v1765 = vand.u32 %v73, 4294901760
  %1766 = vmatpush1.msra.mxu0 %v1765
  %1767 = vmatprep.subr.mxu0 0.0
  %v1768 = vand.u32 %v72, 4294901760
  %1769 = vmatpush1.msra.mxu0 %v1768
  %1770 = vmatprep.subr.mxu0 0.0
  %v1771 = vand.u32 %v71, 4294901760
  %1772 = vmatpush1.msra.mxu0 %v1771
  %1773 = vmatprep.subr.mxu0 0.0
  %v1774 = vand.u32 %v70, 4294901760
  %1775 = vmatpush1.msra.mxu0 %v1774
  %1776 = vmatprep.subr.mxu0 0.0
  %v1777 = vand.u32 %v69, 4294901760
  %1778 = vmatpush1.msra.mxu0 %v1777
  %1779 = vmatprep.subr.mxu0 0.0
  %v1780 = vand.u32 %v68, 4294901760
  %1781 = vmatpush1.msra.mxu0 %v1780
  %1782 = vmatprep.subr.mxu0 0.0
  %v1783 = vand.u32 %v67, 4294901760
  %1784 = vmatpush1.msra.mxu0 %v1783
  %1785 = vmatprep.subr.mxu0 0.0
  %v1786 = vand.u32 %v66, 4294901760
  %1787 = vmatpush1.msra.mxu0 %v1786
  %1788 = vmatprep.subr.mxu0 0.0
  %v1789 = vand.u32 %v65, 4294901760
  %1790 = vmatpush1.msra.mxu0 %v1789
  %1791 = vmatprep.subr.mxu0 0.0
  %v1792 = vand.u32 %v64, 4294901760
  %1793 = vmatpush1.msra.mxu0 %v1792
  %1794 = vmatprep.subr.mxu0 0.0
  %v1795 = vand.u32 %v63, 4294901760
  %1796 = vmatpush1.msra.mxu0 %v1795
  %1797 = vmatprep.subr.mxu0 0.0
  %v1798 = vand.u32 %v62, 4294901760
  %1799 = vmatpush1.msra.mxu0 %v1798
  %1800 = vmatprep.subr.mxu0 0.0
  %v1801 = vand.u32 %v93, 4294901760
  %1802 = vmatpush2.msra.mxu0 %v1801
  %1803 = vmatprep.subr.mxu0 0.0
  %v1804 = vand.u32 %v92, 4294901760
  %1805 = vmatpush2.msra.mxu0 %v1804
  %1806 = vmatprep.subr.mxu0 0.0
  %v1807 = vand.u32 %v91, 4294901760
  %1808 = vmatpush2.msra.mxu0 %v1807
  %1809 = vmatprep.subr.mxu0 0.0
  %v1810 = vand.u32 %v90, 4294901760
  %1811 = vmatpush2.msra.mxu0 %v1810
  %1812 = vmatprep.subr.mxu0 0.0
  %v1813 = vand.u32 %v89, 4294901760
  %1814 = vmatpush2.msra.mxu0 %v1813
  %1815 = vmatprep.subr.mxu0 0.0
  %v1816 = vand.u32 %v88, 4294901760
  %1817 = vmatpush2.msra.mxu0 %v1816
  %1818 = vmatprep.subr.mxu0 0.0
  %v1819 = vand.u32 %v87, 4294901760
  %1820 = vmatpush2.msra.mxu0 %v1819
  %1821 = vmatprep.subr.mxu0 0.0
  %v1822 = vand.u32 %v86, 4294901760
  %1823 = vmatpush2.msra.mxu0 %v1822
  %1824 = vmatprep.subr.mxu0 0.0
  %v1825 = vand.u32 %v85, 4294901760
  %1826 = vmatpush2.msra.mxu0 %v1825
  %1827 = vmatprep.subr.mxu0 0.0
  %v1828 = vand.u32 %v84, 4294901760
  %1829 = vmatpush2.msra.mxu0 %v1828
  %1830 = vmatprep.subr.mxu0 0.0
  %v1831 = vand.u32 %v83, 4294901760
  %1832 = vmatpush2.msra.mxu0 %v1831
  %1833 = vmatprep.subr.mxu0 0.0
  %v1834 = vand.u32 %v82, 4294901760
  %1835 = vmatpush2.msra.mxu0 %v1834
  %1836 = vmatprep.subr.mxu0 0.0
  %v1837 = vand.u32 %v81, 4294901760
  %1838 = vmatpush2.msra.mxu0 %v1837
  %1839 = vmatprep.subr.mxu0 0.0
  %v1840 = vand.u32 %v80, 4294901760
  %1841 = vmatpush2.msra.mxu0 %v1840
  %1842 = vmatprep.subr.mxu0 0.0
  %v1843 = vand.u32 %v79, 4294901760
  %1844 = vmatpush2.msra.mxu0 %v1843
  %1845 = vmatprep.subr.mxu0 0.0
  %v1846 = vand.u32 %v78, 4294901760
  %1847 = vmatpush2.msra.mxu0 %v1846
  %v1848 = vand.u32 %v23, 4294901760
  %1849 = vmatprep.mubr.f32.mxu0 %v1848
  %v1850 = vand.u32 %v22, 4294901760
  %1851 = vmatmul.mubr.f32.gmra.mxu0 %v1850
  %v1852 = vpop.f32.mrf.mxu0
  %v1853 = vadd.f32 %v1749, %v1852
  %v1854 = vpop.f32.mrf.mxu0
  %1855 = vdwg.mxu0
  %1856 = vmatprep.subr.mxu0 0.0
  %v1857 = vand.u32 %v109, 4294901760
  %1858 = vmatpush1.msra.mxu0 %v1857
  %1859 = vmatprep.subr.mxu0 0.0
  %v1860 = vand.u32 %v108, 4294901760
  %1861 = vmatpush1.msra.mxu0 %v1860
  %1862 = vmatprep.subr.mxu0 0.0
  %v1863 = vand.u32 %v107, 4294901760
  %1864 = vmatpush1.msra.mxu0 %v1863
  %1865 = vmatprep.subr.mxu0 0.0
  %v1866 = vand.u32 %v106, 4294901760
  %1867 = vmatpush1.msra.mxu0 %v1866
  %1868 = vmatprep.subr.mxu0 0.0
  %v1869 = vand.u32 %v105, 4294901760
  %1870 = vmatpush1.msra.mxu0 %v1869
  %1871 = vmatprep.subr.mxu0 0.0
  %v1872 = vand.u32 %v104, 4294901760
  %1873 = vmatpush1.msra.mxu0 %v1872
  %1874 = vmatprep.subr.mxu0 0.0
  %v1875 = vand.u32 %v103, 4294901760
  %1876 = vmatpush1.msra.mxu0 %v1875
  %1877 = vmatprep.subr.mxu0 0.0
  %v1878 = vand.u32 %v102, 4294901760
  %1879 = vmatpush1.msra.mxu0 %v1878
  %1880 = vmatprep.subr.mxu0 0.0
  %v1881 = vand.u32 %v101, 4294901760
  %1882 = vmatpush1.msra.mxu0 %v1881
  %1883 = vmatprep.subr.mxu0 0.0
  %v1884 = vand.u32 %v100, 4294901760
  %1885 = vmatpush1.msra.mxu0 %v1884
  %1886 = vmatprep.subr.mxu0 0.0
  %v1887 = vand.u32 %v99, 4294901760
  %1888 = vmatpush1.msra.mxu0 %v1887
  %1889 = vmatprep.subr.mxu0 0.0
  %v1890 = vand.u32 %v98, 4294901760
  %1891 = vmatpush1.msra.mxu0 %v1890
  %1892 = vmatprep.subr.mxu0 0.0
  %v1893 = vand.u32 %v97, 4294901760
  %1894 = vmatpush1.msra.mxu0 %v1893
  %1895 = vmatprep.subr.mxu0 0.0
  %v1896 = vand.u32 %v96, 4294901760
  %1897 = vmatpush1.msra.mxu0 %v1896
  %1898 = vmatprep.subr.mxu0 0.0
  %v1899 = vand.u32 %v95, 4294901760
  %1900 = vmatpush1.msra.mxu0 %v1899
  %1901 = vmatprep.subr.mxu0 0.0
  %v1902 = vand.u32 %v94, 4294901760
  %1903 = vmatpush1.msra.mxu0 %v1902
  %1904 = vmatprep.subr.mxu0 0.0
  %v1905 = vand.u32 %v125, 4294901760
  %1906 = vmatpush2.msra.mxu0 %v1905
  %1907 = vmatprep.subr.mxu0 0.0
  %v1908 = vand.u32 %v124, 4294901760
  %1909 = vmatpush2.msra.mxu0 %v1908
  %1910 = vmatprep.subr.mxu0 0.0
  %v1911 = vand.u32 %v123, 4294901760
  %1912 = vmatpush2.msra.mxu0 %v1911
  %1913 = vmatprep.subr.mxu0 0.0
  %v1914 = vand.u32 %v122, 4294901760
  %1915 = vmatpush2.msra.mxu0 %v1914
  %1916 = vmatprep.subr.mxu0 0.0
  %v1917 = vand.u32 %v121, 4294901760
  %1918 = vmatpush2.msra.mxu0 %v1917
  %1919 = vmatprep.subr.mxu0 0.0
  %v1920 = vand.u32 %v120, 4294901760
  %1921 = vmatpush2.msra.mxu0 %v1920
  %1922 = vmatprep.subr.mxu0 0.0
  %v1923 = vand.u32 %v119, 4294901760
  %1924 = vmatpush2.msra.mxu0 %v1923
  %1925 = vmatprep.subr.mxu0 0.0
  %v1926 = vand.u32 %v118, 4294901760
  %1927 = vmatpush2.msra.mxu0 %v1926
  %1928 = vmatprep.subr.mxu0 0.0
  %v1929 = vand.u32 %v117, 4294901760
  %1930 = vmatpush2.msra.mxu0 %v1929
  %1931 = vmatprep.subr.mxu0 0.0
  %v1932 = vand.u32 %v116, 4294901760
  %1933 = vmatpush2.msra.mxu0 %v1932
  %1934 = vmatprep.subr.mxu0 0.0
  %v1935 = vand.u32 %v115, 4294901760
  %1936 = vmatpush2.msra.mxu0 %v1935
  %1937 = vmatprep.subr.mxu0 0.0
  %v1938 = vand.u32 %v114, 4294901760
  %1939 = vmatpush2.msra.mxu0 %v1938
  %1940 = vmatprep.subr.mxu0 0.0
  %v1941 = vand.u32 %v113, 4294901760
  %1942 = vmatpush2.msra.mxu0 %v1941
  %1943 = vmatprep.subr.mxu0 0.0
  %v1944 = vand.u32 %v112, 4294901760
  %1945 = vmatpush2.msra.mxu0 %v1944
  %1946 = vmatprep.subr.mxu0 0.0
  %v1947 = vand.u32 %v111, 4294901760
  %1948 = vmatpush2.msra.mxu0 %v1947
  %1949 = vmatprep.subr.mxu0 0.0
  %v1950 = vand.u32 %v110, 4294901760
  %1951 = vmatpush2.msra.mxu0 %v1950
  %v1952 = vand.u32 %v25, 4294901760
  %v1953 = vsub.f32 %v25, %v1952
  %v1954 = vand.u32 %v1953, 4294901760
  %v1955 = vsub.f32 %v1953, %v1954
  %v1956 = vand.u32 %v1955, 4294901760
  %1957 = vmatprep.mubr.f32.mxu0 %v1956
  %v1958 = vand.u32 %v24, 4294901760
  %v1959 = vsub.f32 %v24, %v1958
  %v1960 = vand.u32 %v1959, 4294901760
  %v1961 = vsub.f32 %v1959, %v1960
  %v1962 = vand.u32 %v1961, 4294901760
  %1963 = vmatmul.mubr.f32.gmra.mxu0 %v1962
  %v1964 = vpop.f32.mrf.mxu0
  %v1965 = vadd.f32 %v1853, %v1964
  %v1966 = vpop.f32.mrf.mxu0
  %1967 = vdwg.mxu0
  %1968 = vmatprep.subr.mxu0 0.0
  %v1969 = vand.u32 %v109, 4294901760
  %v1970 = vsub.f32 %v109, %v1969
  %v1971 = vand.u32 %v1970, 4294901760
  %v1972 = vsub.f32 %v1970, %v1971
  %v1973 = vand.u32 %v1972, 4294901760
  %1974 = vmatpush1.msra.mxu0 %v1973
  %1975 = vmatprep.subr.mxu0 0.0
  %v1976 = vand.u32 %v108, 4294901760
  %v1977 = vsub.f32 %v108, %v1976
  %v1978 = vand.u32 %v1977, 4294901760
  %v1979 = vsub.f32 %v1977, %v1978
  %v1980 = vand.u32 %v1979, 4294901760
  %1981 = vmatpush1.msra.mxu0 %v1980
  %1982 = vmatprep.subr.mxu0 0.0
  %v1983 = vand.u32 %v107, 4294901760
  %v1984 = vsub.f32 %v107, %v1983
  %v1985 = vand.u32 %v1984, 4294901760
  %v1986 = vsub.f32 %v1984, %v1985
  %v1987 = vand.u32 %v1986, 4294901760
  %1988 = vmatpush1.msra.mxu0 %v1987
  %1989 = vmatprep.subr.mxu0 0.0
  %v1990 = vand.u32 %v106, 4294901760
  %v1991 = vsub.f32 %v106, %v1990
  %v1992 = vand.u32 %v1991, 4294901760
  %v1993 = vsub.f32 %v1991, %v1992
  %v1994 = vand.u32 %v1993, 4294901760
  %1995 = vmatpush1.msra.mxu0 %v1994
  %1996 = vmatprep.subr.mxu0 0.0
  %v1997 = vand.u32 %v105, 4294901760
  %v1998 = vsub.f32 %v105, %v1997
  %v1999 = vand.u32 %v1998, 4294901760
  %v2000 = vsub.f32 %v1998, %v1999
  %v2001 = vand.u32 %v2000, 4294901760
  %2002 = vmatpush1.msra.mxu0 %v2001
  %2003 = vmatprep.subr.mxu0 0.0
  %v2004 = vand.u32 %v104, 4294901760
  %v2005 = vsub.f32 %v104, %v2004
  %v2006 = vand.u32 %v2005, 4294901760
  %v2007 = vsub.f32 %v2005, %v2006
  %v2008 = vand.u32 %v2007, 4294901760
  %2009 = vmatpush1.msra.mxu0 %v2008
  %2010 = vmatprep.subr.mxu0 0.0
  %v2011 = vand.u32 %v103, 4294901760
  %v2012 = vsub.f32 %v103, %v2011
  %v2013 = vand.u32 %v2012, 4294901760
  %v2014 = vsub.f32 %v2012, %v2013
  %v2015 = vand.u32 %v2014, 4294901760
  %2016 = vmatpush1.msra.mxu0 %v2015
  %2017 = vmatprep.subr.mxu0 0.0
  %v2018 = vand.u32 %v102, 4294901760
  %v2019 = vsub.f32 %v102, %v2018
  %v2020 = vand.u32 %v2019, 4294901760
  %v2021 = vsub.f32 %v2019, %v2020
  %v2022 = vand.u32 %v2021, 4294901760
  %2023 = vmatpush1.msra.mxu0 %v2022
  %2024 = vmatprep.subr.mxu0 0.0
  %v2025 = vand.u32 %v101, 4294901760
  %v2026 = vsub.f32 %v101, %v2025
  %v2027 = vand.u32 %v2026, 4294901760
  %v2028 = vsub.f32 %v2026, %v2027
  %v2029 = vand.u32 %v2028, 4294901760
  %2030 = vmatpush1.msra.mxu0 %v2029
  %2031 = vmatprep.subr.mxu0 0.0
  %v2032 = vand.u32 %v100, 4294901760
  %v2033 = vsub.f32 %v100, %v2032
  %v2034 = vand.u32 %v2033, 4294901760
  %v2035 = vsub.f32 %v2033, %v2034
  %v2036 = vand.u32 %v2035, 4294901760
  %2037 = vmatpush1.msra.mxu0 %v2036
  %2038 = vmatprep.subr.mxu0 0.0
  %v2039 = vand.u32 %v99, 4294901760
  %v2040 = vsub.f32 %v99, %v2039
  %v2041 = vand.u32 %v2040, 4294901760
  %v2042 = vsub.f32 %v2040, %v2041
  %v2043 = vand.u32 %v2042, 4294901760
  %2044 = vmatpush1.msra.mxu0 %v2043
  %2045 = vmatprep.subr.mxu0 0.0
  %v2046 = vand.u32 %v98, 4294901760
  %v2047 = vsub.f32 %v98, %v2046
  %v2048 = vand.u32 %v2047, 4294901760
  %v2049 = vsub.f32 %v2047, %v2048
  %v2050 = vand.u32 %v2049, 4294901760
  %2051 = vmatpush1.msra.mxu0 %v2050
  %2052 = vmatprep.subr.mxu0 0.0
  %v2053 = vand.u32 %v97, 4294901760
  %v2054 = vsub.f32 %v97, %v2053
  %v2055 = vand.u32 %v2054, 4294901760
  %v2056 = vsub.f32 %v2054, %v2055
  %v2057 = vand.u32 %v2056, 4294901760
  %2058 = vmatpush1.msra.mxu0 %v2057
  %2059 = vmatprep.subr.mxu0 0.0
  %v2060 = vand.u32 %v96, 4294901760
  %v2061 = vsub.f32 %v96, %v2060
  %v2062 = vand.u32 %v2061, 4294901760
  %v2063 = vsub.f32 %v2061, %v2062
  %v2064 = vand.u32 %v2063, 4294901760
  %2065 = vmatpush1.msra.mxu0 %v2064
  %2066 = vmatprep.subr.mxu0 0.0
  %v2067 = vand.u32 %v95, 4294901760
  %v2068 = vsub.f32 %v95, %v2067
  %v2069 = vand.u32 %v2068, 4294901760
  %v2070 = vsub.f32 %v2068, %v2069
  %v2071 = vand.u32 %v2070, 4294901760
  %2072 = vmatpush1.msra.mxu0 %v2071
  %2073 = vmatprep.subr.mxu0 0.0
  %v2074 = vand.u32 %v94, 4294901760
  %v2075 = vsub.f32 %v94, %v2074
  %v2076 = vand.u32 %v2075, 4294901760
  %v2077 = vsub.f32 %v2075, %v2076
  %v2078 = vand.u32 %v2077, 4294901760
  %2079 = vmatpush1.msra.mxu0 %v2078
  %2080 = vmatprep.subr.mxu0 0.0
  %v2081 = vand.u32 %v125, 4294901760
  %v2082 = vsub.f32 %v125, %v2081
  %v2083 = vand.u32 %v2082, 4294901760
  %v2084 = vsub.f32 %v2082, %v2083
  %v2085 = vand.u32 %v2084, 4294901760
  %2086 = vmatpush2.msra.mxu0 %v2085
  %2087 = vmatprep.subr.mxu0 0.0
  %v2088 = vand.u32 %v124, 4294901760
  %v2089 = vsub.f32 %v124, %v2088
  %v2090 = vand.u32 %v2089, 4294901760
  %v2091 = vsub.f32 %v2089, %v2090
  %v2092 = vand.u32 %v2091, 4294901760
  %2093 = vmatpush2.msra.mxu0 %v2092
  %2094 = vmatprep.subr.mxu0 0.0
  %v2095 = vand.u32 %v123, 4294901760
  %v2096 = vsub.f32 %v123, %v2095
  %v2097 = vand.u32 %v2096, 4294901760
  %v2098 = vsub.f32 %v2096, %v2097
  %v2099 = vand.u32 %v2098, 4294901760
  %2100 = vmatpush2.msra.mxu0 %v2099
  %2101 = vmatprep.subr.mxu0 0.0
  %v2102 = vand.u32 %v122, 4294901760
  %v2103 = vsub.f32 %v122, %v2102
  %v2104 = vand.u32 %v2103, 4294901760
  %v2105 = vsub.f32 %v2103, %v2104
  %v2106 = vand.u32 %v2105, 4294901760
  %2107 = vmatpush2.msra.mxu0 %v2106
  %2108 = vmatprep.subr.mxu0 0.0
  %v2109 = vand.u32 %v121, 4294901760
  %v2110 = vsub.f32 %v121, %v2109
  %v2111 = vand.u32 %v2110, 4294901760
  %v2112 = vsub.f32 %v2110, %v2111
  %v2113 = vand.u32 %v2112, 4294901760
  %2114 = vmatpush2.msra.mxu0 %v2113
  %2115 = vmatprep.subr.mxu0 0.0
  %v2116 = vand.u32 %v120, 4294901760
  %v2117 = vsub.f32 %v120, %v2116
  %v2118 = vand.u32 %v2117, 4294901760
  %v2119 = vsub.f32 %v2117, %v2118
  %v2120 = vand.u32 %v2119, 4294901760
  %2121 = vmatpush2.msra.mxu0 %v2120
  %2122 = vmatprep.subr.mxu0 0.0
  %v2123 = vand.u32 %v119, 4294901760
  %v2124 = vsub.f32 %v119, %v2123
  %v2125 = vand.u32 %v2124, 4294901760
  %v2126 = vsub.f32 %v2124, %v2125
  %v2127 = vand.u32 %v2126, 4294901760
  %2128 = vmatpush2.msra.mxu0 %v2127
  %2129 = vmatprep.subr.mxu0 0.0
  %v2130 = vand.u32 %v118, 4294901760
  %v2131 = vsub.f32 %v118, %v2130
  %v2132 = vand.u32 %v2131, 4294901760
  %v2133 = vsub.f32 %v2131, %v2132
  %v2134 = vand.u32 %v2133, 4294901760
  %2135 = vmatpush2.msra.mxu0 %v2134
  %2136 = vmatprep.subr.mxu0 0.0
  %v2137 = vand.u32 %v117, 4294901760
  %v2138 = vsub.f32 %v117, %v2137
  %v2139 = vand.u32 %v2138, 4294901760
  %v2140 = vsub.f32 %v2138, %v2139
  %v2141 = vand.u32 %v2140, 4294901760
  %2142 = vmatpush2.msra.mxu0 %v2141
  %2143 = vmatprep.subr.mxu0 0.0
  %v2144 = vand.u32 %v116, 4294901760
  %v2145 = vsub.f32 %v116, %v2144
  %v2146 = vand.u32 %v2145, 4294901760
  %v2147 = vsub.f32 %v2145, %v2146
  %v2148 = vand.u32 %v2147, 4294901760
  %2149 = vmatpush2.msra.mxu0 %v2148
  %2150 = vmatprep.subr.mxu0 0.0
  %v2151 = vand.u32 %v115, 4294901760
  %v2152 = vsub.f32 %v115, %v2151
  %v2153 = vand.u32 %v2152, 4294901760
  %v2154 = vsub.f32 %v2152, %v2153
  %v2155 = vand.u32 %v2154, 4294901760
  %2156 = vmatpush2.msra.mxu0 %v2155
  %2157 = vmatprep.subr.mxu0 0.0
  %v2158 = vand.u32 %v114, 4294901760
  %v2159 = vsub.f32 %v114, %v2158
  %v2160 = vand.u32 %v2159, 4294901760
  %v2161 = vsub.f32 %v2159, %v2160
  %v2162 = vand.u32 %v2161, 4294901760
  %2163 = vmatpush2.msra.mxu0 %v2162
  %2164 = vmatprep.subr.mxu0 0.0
  %v2165 = vand.u32 %v113, 4294901760
  %v2166 = vsub.f32 %v113, %v2165
  %v2167 = vand.u32 %v2166, 4294901760
  %v2168 = vsub.f32 %v2166, %v2167
  %v2169 = vand.u32 %v2168, 4294901760
  %2170 = vmatpush2.msra.mxu0 %v2169
  %2171 = vmatprep.subr.mxu0 0.0
  %v2172 = vand.u32 %v112, 4294901760
  %v2173 = vsub.f32 %v112, %v2172
  %v2174 = vand.u32 %v2173, 4294901760
  %v2175 = vsub.f32 %v2173, %v2174
  %v2176 = vand.u32 %v2175, 4294901760
  %2177 = vmatpush2.msra.mxu0 %v2176
  %2178 = vmatprep.subr.mxu0 0.0
  %v2179 = vand.u32 %v111, 4294901760
  %v2180 = vsub.f32 %v111, %v2179
  %v2181 = vand.u32 %v2180, 4294901760
  %v2182 = vsub.f32 %v2180, %v2181
  %v2183 = vand.u32 %v2182, 4294901760
  %2184 = vmatpush2.msra.mxu0 %v2183
  %2185 = vmatprep.subr.mxu0 0.0
  %v2186 = vand.u32 %v110, 4294901760
  %v2187 = vsub.f32 %v110, %v2186
  %v2188 = vand.u32 %v2187, 4294901760
  %v2189 = vsub.f32 %v2187, %v2188
  %v2190 = vand.u32 %v2189, 4294901760
  %2191 = vmatpush2.msra.mxu0 %v2190
  %v2192 = vand.u32 %v25, 4294901760
  %2193 = vmatprep.mubr.f32.mxu0 %v2192
  %v2194 = vand.u32 %v24, 4294901760
  %2195 = vmatmul.mubr.f32.gmra.mxu0 %v2194
  %v2196 = vpop.f32.mrf.mxu0
  %v2197 = vadd.f32 %v1965, %v2196
  %v2198 = vpop.f32.mrf.mxu0
  %2199 = vdwg.mxu0
  %2200 = vmatprep.subr.mxu0 0.0
  %v2201 = vand.u32 %v109, 4294901760
  %v2202 = vsub.f32 %v109, %v2201
  %2203 = vmatpush1.msra.mxu0 %v2202
  %2204 = vmatprep.subr.mxu0 0.0
  %v2205 = vand.u32 %v108, 4294901760
  %v2206 = vsub.f32 %v108, %v2205
  %2207 = vmatpush1.msra.mxu0 %v2206
  %2208 = vmatprep.subr.mxu0 0.0
  %v2209 = vand.u32 %v107, 4294901760
  %v2210 = vsub.f32 %v107, %v2209
  %2211 = vmatpush1.msra.mxu0 %v2210
  %2212 = vmatprep.subr.mxu0 0.0
  %v2213 = vand.u32 %v106, 4294901760
  %v2214 = vsub.f32 %v106, %v2213
  %2215 = vmatpush1.msra.mxu0 %v2214
  %2216 = vmatprep.subr.mxu0 0.0
  %v2217 = vand.u32 %v105, 4294901760
  %v2218 = vsub.f32 %v105, %v2217
  %2219 = vmatpush1.msra.mxu0 %v2218
  %2220 = vmatprep.subr.mxu0 0.0
  %v2221 = vand.u32 %v104, 4294901760
  %v2222 = vsub.f32 %v104, %v2221
  %2223 = vmatpush1.msra.mxu0 %v2222
  %2224 = vmatprep.subr.mxu0 0.0
  %v2225 = vand.u32 %v103, 4294901760
  %v2226 = vsub.f32 %v103, %v2225
  %2227 = vmatpush1.msra.mxu0 %v2226
  %2228 = vmatprep.subr.mxu0 0.0
  %v2229 = vand.u32 %v102, 4294901760
  %v2230 = vsub.f32 %v102, %v2229
  %2231 = vmatpush1.msra.mxu0 %v2230
  %2232 = vmatprep.subr.mxu0 0.0
  %v2233 = vand.u32 %v101, 4294901760
  %v2234 = vsub.f32 %v101, %v2233
  %2235 = vmatpush1.msra.mxu0 %v2234
  %2236 = vmatprep.subr.mxu0 0.0
  %v2237 = vand.u32 %v100, 4294901760
  %v2238 = vsub.f32 %v100, %v2237
  %2239 = vmatpush1.msra.mxu0 %v2238
  %2240 = vmatprep.subr.mxu0 0.0
  %v2241 = vand.u32 %v99, 4294901760
  %v2242 = vsub.f32 %v99, %v2241
  %2243 = vmatpush1.msra.mxu0 %v2242
  %2244 = vmatprep.subr.mxu0 0.0
  %v2245 = vand.u32 %v98, 4294901760
  %v2246 = vsub.f32 %v98, %v2245
  %2247 = vmatpush1.msra.mxu0 %v2246
  %2248 = vmatprep.subr.mxu0 0.0
  %v2249 = vand.u32 %v97, 4294901760
  %v2250 = vsub.f32 %v97, %v2249
  %2251 = vmatpush1.msra.mxu0 %v2250
  %2252 = vmatprep.subr.mxu0 0.0
  %v2253 = vand.u32 %v96, 4294901760
  %v2254 = vsub.f32 %v96, %v2253
  %2255 = vmatpush1.msra.mxu0 %v2254
  %2256 = vmatprep.subr.mxu0 0.0
  %v2257 = vand.u32 %v95, 4294901760
  %v2258 = vsub.f32 %v95, %v2257
  %2259 = vmatpush1.msra.mxu0 %v2258
  %2260 = vmatprep.subr.mxu0 0.0
  %v2261 = vand.u32 %v94, 4294901760
  %v2262 = vsub.f32 %v94, %v2261
  %2263 = vmatpush1.msra.mxu0 %v2262
  %2264 = vmatprep.subr.mxu0 0.0
  %v2265 = vand.u32 %v125, 4294901760
  %v2266 = vsub.f32 %v125, %v2265
  %2267 = vmatpush2.msra.mxu0 %v2266
  %2268 = vmatprep.subr.mxu0 0.0
  %v2269 = vand.u32 %v124, 4294901760
  %v2270 = vsub.f32 %v124, %v2269
  %2271 = vmatpush2.msra.mxu0 %v2270
  %2272 = vmatprep.subr.mxu0 0.0
  %v2273 = vand.u32 %v123, 4294901760
  %v2274 = vsub.f32 %v123, %v2273
  %2275 = vmatpush2.msra.mxu0 %v2274
  %2276 = vmatprep.subr.mxu0 0.0
  %v2277 = vand.u32 %v122, 4294901760
  %v2278 = vsub.f32 %v122, %v2277
  %2279 = vmatpush2.msra.mxu0 %v2278
  %2280 = vmatprep.subr.mxu0 0.0
  %v2281 = vand.u32 %v121, 4294901760
  %v2282 = vsub.f32 %v121, %v2281
  %2283 = vmatpush2.msra.mxu0 %v2282
  %2284 = vmatprep.subr.mxu0 0.0
  %v2285 = vand.u32 %v120, 4294901760
  %v2286 = vsub.f32 %v120, %v2285
  %2287 = vmatpush2.msra.mxu0 %v2286
  %2288 = vmatprep.subr.mxu0 0.0
  %v2289 = vand.u32 %v119, 4294901760
  %v2290 = vsub.f32 %v119, %v2289
  %2291 = vmatpush2.msra.mxu0 %v2290
  %2292 = vmatprep.subr.mxu0 0.0
  %v2293 = vand.u32 %v118, 4294901760
  %v2294 = vsub.f32 %v118, %v2293
  %2295 = vmatpush2.msra.mxu0 %v2294
  %2296 = vmatprep.subr.mxu0 0.0
  %v2297 = vand.u32 %v117, 4294901760
  %v2298 = vsub.f32 %v117, %v2297
  %2299 = vmatpush2.msra.mxu0 %v2298
  %2300 = vmatprep.subr.mxu0 0.0
  %v2301 = vand.u32 %v116, 4294901760
  %v2302 = vsub.f32 %v116, %v2301
  %2303 = vmatpush2.msra.mxu0 %v2302
  %2304 = vmatprep.subr.mxu0 0.0
  %v2305 = vand.u32 %v115, 4294901760
  %v2306 = vsub.f32 %v115, %v2305
  %2307 = vmatpush2.msra.mxu0 %v2306
  %2308 = vmatprep.subr.mxu0 0.0
  %v2309 = vand.u32 %v114, 4294901760
  %v2310 = vsub.f32 %v114, %v2309
  %2311 = vmatpush2.msra.mxu0 %v2310
  %2312 = vmatprep.subr.mxu0 0.0
  %v2313 = vand.u32 %v113, 4294901760
  %v2314 = vsub.f32 %v113, %v2313
  %2315 = vmatpush2.msra.mxu0 %v2314
  %2316 = vmatprep.subr.mxu0 0.0
  %v2317 = vand.u32 %v112, 4294901760
  %v2318 = vsub.f32 %v112, %v2317
  %2319 = vmatpush2.msra.mxu0 %v2318
  %2320 = vmatprep.subr.mxu0 0.0
  %v2321 = vand.u32 %v111, 4294901760
  %v2322 = vsub.f32 %v111, %v2321
  %2323 = vmatpush2.msra.mxu0 %v2322
  %2324 = vmatprep.subr.mxu0 0.0
  %v2325 = vand.u32 %v110, 4294901760
  %v2326 = vsub.f32 %v110, %v2325
  %2327 = vmatpush2.msra.mxu0 %v2326
  %v2328 = vand.u32 %v25, 4294901760
  %v2329 = vsub.f32 %v25, %v2328
  %2330 = vmatprep.mubr.f32.mxu0 %v2329
  %v2331 = vand.u32 %v24, 4294901760
  %v2332 = vsub.f32 %v24, %v2331
  %2333 = vmatmul.mubr.f32.gmra.mxu0 %v2332
  %v2334 = vpop.f32.mrf.mxu0
  %v2335 = vadd.f32 %v2197, %v2334
  %v2336 = vpop.f32.mrf.mxu0
  %2337 = vdwg.mxu0
  %2338 = vmatprep.subr.mxu0 0.0
  %v2339 = vand.u32 %v109, 4294901760
  %2340 = vmatpush1.msra.mxu0 %v2339
  %2341 = vmatprep.subr.mxu0 0.0
  %v2342 = vand.u32 %v108, 4294901760
  %2343 = vmatpush1.msra.mxu0 %v2342
  %2344 = vmatprep.subr.mxu0 0.0
  %v2345 = vand.u32 %v107, 4294901760
  %2346 = vmatpush1.msra.mxu0 %v2345
  %2347 = vmatprep.subr.mxu0 0.0
  %v2348 = vand.u32 %v106, 4294901760
  %2349 = vmatpush1.msra.mxu0 %v2348
  %2350 = vmatprep.subr.mxu0 0.0
  %v2351 = vand.u32 %v105, 4294901760
  %2352 = vmatpush1.msra.mxu0 %v2351
  %2353 = vmatprep.subr.mxu0 0.0
  %v2354 = vand.u32 %v104, 4294901760
  %2355 = vmatpush1.msra.mxu0 %v2354
  %2356 = vmatprep.subr.mxu0 0.0
  %v2357 = vand.u32 %v103, 4294901760
  %2358 = vmatpush1.msra.mxu0 %v2357
  %2359 = vmatprep.subr.mxu0 0.0
  %v2360 = vand.u32 %v102, 4294901760
  %2361 = vmatpush1.msra.mxu0 %v2360
  %2362 = vmatprep.subr.mxu0 0.0
  %v2363 = vand.u32 %v101, 4294901760
  %2364 = vmatpush1.msra.mxu0 %v2363
  %2365 = vmatprep.subr.mxu0 0.0
  %v2366 = vand.u32 %v100, 4294901760
  %2367 = vmatpush1.msra.mxu0 %v2366
  %2368 = vmatprep.subr.mxu0 0.0
  %v2369 = vand.u32 %v99, 4294901760
  %2370 = vmatpush1.msra.mxu0 %v2369
  %2371 = vmatprep.subr.mxu0 0.0
  %v2372 = vand.u32 %v98, 4294901760
  %2373 = vmatpush1.msra.mxu0 %v2372
  %2374 = vmatprep.subr.mxu0 0.0
  %v2375 = vand.u32 %v97, 4294901760
  %2376 = vmatpush1.msra.mxu0 %v2375
  %2377 = vmatprep.subr.mxu0 0.0
  %v2378 = vand.u32 %v96, 4294901760
  %2379 = vmatpush1.msra.mxu0 %v2378
  %2380 = vmatprep.subr.mxu0 0.0
  %v2381 = vand.u32 %v95, 4294901760
  %2382 = vmatpush1.msra.mxu0 %v2381
  %2383 = vmatprep.subr.mxu0 0.0
  %v2384 = vand.u32 %v94, 4294901760
  %2385 = vmatpush1.msra.mxu0 %v2384
  %2386 = vmatprep.subr.mxu0 0.0
  %v2387 = vand.u32 %v125, 4294901760
  %2388 = vmatpush2.msra.mxu0 %v2387
  %2389 = vmatprep.subr.mxu0 0.0
  %v2390 = vand.u32 %v124, 4294901760
  %2391 = vmatpush2.msra.mxu0 %v2390
  %2392 = vmatprep.subr.mxu0 0.0
  %v2393 = vand.u32 %v123, 4294901760
  %2394 = vmatpush2.msra.mxu0 %v2393
  %2395 = vmatprep.subr.mxu0 0.0
  %v2396 = vand.u32 %v122, 4294901760
  %2397 = vmatpush2.msra.mxu0 %v2396
  %2398 = vmatprep.subr.mxu0 0.0
  %v2399 = vand.u32 %v121, 4294901760
  %2400 = vmatpush2.msra.mxu0 %v2399
  %2401 = vmatprep.subr.mxu0 0.0
  %v2402 = vand.u32 %v120, 4294901760
  %2403 = vmatpush2.msra.mxu0 %v2402
  %2404 = vmatprep.subr.mxu0 0.0
  %v2405 = vand.u32 %v119, 4294901760
  %2406 = vmatpush2.msra.mxu0 %v2405
  %2407 = vmatprep.subr.mxu0 0.0
  %v2408 = vand.u32 %v118, 4294901760
  %2409 = vmatpush2.msra.mxu0 %v2408
  %2410 = vmatprep.subr.mxu0 0.0
  %v2411 = vand.u32 %v117, 4294901760
  %2412 = vmatpush2.msra.mxu0 %v2411
  %2413 = vmatprep.subr.mxu0 0.0
  %v2414 = vand.u32 %v116, 4294901760
  %2415 = vmatpush2.msra.mxu0 %v2414
  %2416 = vmatprep.subr.mxu0 0.0
  %v2417 = vand.u32 %v115, 4294901760
  %2418 = vmatpush2.msra.mxu0 %v2417
  %2419 = vmatprep.subr.mxu0 0.0
  %v2420 = vand.u32 %v114, 4294901760
  %2421 = vmatpush2.msra.mxu0 %v2420
  %2422 = vmatprep.subr.mxu0 0.0
  %v2423 = vand.u32 %v113, 4294901760
  %2424 = vmatpush2.msra.mxu0 %v2423
  %2425 = vmatprep.subr.mxu0 0.0
  %v2426 = vand.u32 %v112, 4294901760
  %2427 = vmatpush2.msra.mxu0 %v2426
  %2428 = vmatprep.subr.mxu0 0.0
  %v2429 = vand.u32 %v111, 4294901760
  %2430 = vmatpush2.msra.mxu0 %v2429
  %2431 = vmatprep.subr.mxu0 0.0
  %v2432 = vand.u32 %v110, 4294901760
  %2433 = vmatpush2.msra.mxu0 %v2432
  %v2434 = vand.u32 %v25, 4294901760
  %v2435 = vsub.f32 %v25, %v2434
  %v2436 = vand.u32 %v2435, 4294901760
  %2437 = vmatprep.mubr.f32.mxu0 %v2436
  %v2438 = vand.u32 %v24, 4294901760
  %v2439 = vsub.f32 %v24, %v2438
  %v2440 = vand.u32 %v2439, 4294901760
  %2441 = vmatmul.mubr.f32.gmra.mxu0 %v2440
  %v2442 = vpop.f32.mrf.mxu0
  %v2443 = vadd.f32 %v2335, %v2442
  %v2444 = vpop.f32.mrf.mxu0
  %2445 = vdwg.mxu0
  %2446 = vmatprep.subr.mxu0 0.0
  %v2447 = vand.u32 %v109, 4294901760
  %v2448 = vsub.f32 %v109, %v2447
  %v2449 = vand.u32 %v2448, 4294901760
  %2450 = vmatpush1.msra.mxu0 %v2449
  %2451 = vmatprep.subr.mxu0 0.0
  %v2452 = vand.u32 %v108, 4294901760
  %v2453 = vsub.f32 %v108, %v2452
  %v2454 = vand.u32 %v2453, 4294901760
  %2455 = vmatpush1.msra.mxu0 %v2454
  %2456 = vmatprep.subr.mxu0 0.0
  %v2457 = vand.u32 %v107, 4294901760
  %v2458 = vsub.f32 %v107, %v2457
  %v2459 = vand.u32 %v2458, 4294901760
  %2460 = vmatpush1.msra.mxu0 %v2459
  %2461 = vmatprep.subr.mxu0 0.0
  %v2462 = vand.u32 %v106, 4294901760
  %v2463 = vsub.f32 %v106, %v2462
  %v2464 = vand.u32 %v2463, 4294901760
  %2465 = vmatpush1.msra.mxu0 %v2464
  %2466 = vmatprep.subr.mxu0 0.0
  %v2467 = vand.u32 %v105, 4294901760
  %v2468 = vsub.f32 %v105, %v2467
  %v2469 = vand.u32 %v2468, 4294901760
  %2470 = vmatpush1.msra.mxu0 %v2469
  %2471 = vmatprep.subr.mxu0 0.0
  %v2472 = vand.u32 %v104, 4294901760
  %v2473 = vsub.f32 %v104, %v2472
  %v2474 = vand.u32 %v2473, 4294901760
  %2475 = vmatpush1.msra.mxu0 %v2474
  %2476 = vmatprep.subr.mxu0 0.0
  %v2477 = vand.u32 %v103, 4294901760
  %v2478 = vsub.f32 %v103, %v2477
  %v2479 = vand.u32 %v2478, 4294901760
  %2480 = vmatpush1.msra.mxu0 %v2479
  %2481 = vmatprep.subr.mxu0 0.0
  %v2482 = vand.u32 %v102, 4294901760
  %v2483 = vsub.f32 %v102, %v2482
  %v2484 = vand.u32 %v2483, 4294901760
  %2485 = vmatpush1.msra.mxu0 %v2484
  %2486 = vmatprep.subr.mxu0 0.0
  %v2487 = vand.u32 %v101, 4294901760
  %v2488 = vsub.f32 %v101, %v2487
  %v2489 = vand.u32 %v2488, 4294901760
  %2490 = vmatpush1.msra.mxu0 %v2489
  %2491 = vmatprep.subr.mxu0 0.0
  %v2492 = vand.u32 %v100, 4294901760
  %v2493 = vsub.f32 %v100, %v2492
  %v2494 = vand.u32 %v2493, 4294901760
  %2495 = vmatpush1.msra.mxu0 %v2494
  %2496 = vmatprep.subr.mxu0 0.0
  %v2497 = vand.u32 %v99, 4294901760
  %v2498 = vsub.f32 %v99, %v2497
  %v2499 = vand.u32 %v2498, 4294901760
  %2500 = vmatpush1.msra.mxu0 %v2499
  %2501 = vmatprep.subr.mxu0 0.0
  %v2502 = vand.u32 %v98, 4294901760
  %v2503 = vsub.f32 %v98, %v2502
  %v2504 = vand.u32 %v2503, 4294901760
  %2505 = vmatpush1.msra.mxu0 %v2504
  %2506 = vmatprep.subr.mxu0 0.0
  %v2507 = vand.u32 %v97, 4294901760
  %v2508 = vsub.f32 %v97, %v2507
  %v2509 = vand.u32 %v2508, 4294901760
  %2510 = vmatpush1.msra.mxu0 %v2509
  %2511 = vmatprep.subr.mxu0 0.0
  %v2512 = vand.u32 %v96, 4294901760
  %v2513 = vsub.f32 %v96, %v2512
  %v2514 = vand.u32 %v2513, 4294901760
  %2515 = vmatpush1.msra.mxu0 %v2514
  %2516 = vmatprep.subr.mxu0 0.0
  %v2517 = vand.u32 %v95, 4294901760
  %v2518 = vsub.f32 %v95, %v2517
  %v2519 = vand.u32 %v2518, 4294901760
  %2520 = vmatpush1.msra.mxu0 %v2519
  %2521 = vmatprep.subr.mxu0 0.0
  %v2522 = vand.u32 %v94, 4294901760
  %v2523 = vsub.f32 %v94, %v2522
  %v2524 = vand.u32 %v2523, 4294901760
  %2525 = vmatpush1.msra.mxu0 %v2524
  %2526 = vmatprep.subr.mxu0 0.0
  %v2527 = vand.u32 %v125, 4294901760
  %v2528 = vsub.f32 %v125, %v2527
  %v2529 = vand.u32 %v2528, 4294901760
  %2530 = vmatpush2.msra.mxu0 %v2529
  %2531 = vmatprep.subr.mxu0 0.0
  %v2532 = vand.u32 %v124, 4294901760
  %v2533 = vsub.f32 %v124, %v2532
  %v2534 = vand.u32 %v2533, 4294901760
  %2535 = vmatpush2.msra.mxu0 %v2534
  %2536 = vmatprep.subr.mxu0 0.0
  %v2537 = vand.u32 %v123, 4294901760
  %v2538 = vsub.f32 %v123, %v2537
  %v2539 = vand.u32 %v2538, 4294901760
  %2540 = vmatpush2.msra.mxu0 %v2539
  %2541 = vmatprep.subr.mxu0 0.0
  %v2542 = vand.u32 %v122, 4294901760
  %v2543 = vsub.f32 %v122, %v2542
  %v2544 = vand.u32 %v2543, 4294901760
  %2545 = vmatpush2.msra.mxu0 %v2544
  %2546 = vmatprep.subr.mxu0 0.0
  %v2547 = vand.u32 %v121, 4294901760
  %v2548 = vsub.f32 %v121, %v2547
  %v2549 = vand.u32 %v2548, 4294901760
  %2550 = vmatpush2.msra.mxu0 %v2549
  %2551 = vmatprep.subr.mxu0 0.0
  %v2552 = vand.u32 %v120, 4294901760
  %v2553 = vsub.f32 %v120, %v2552
  %v2554 = vand.u32 %v2553, 4294901760
  %2555 = vmatpush2.msra.mxu0 %v2554
  %2556 = vmatprep.subr.mxu0 0.0
  %v2557 = vand.u32 %v119, 4294901760
  %v2558 = vsub.f32 %v119, %v2557
  %v2559 = vand.u32 %v2558, 4294901760
  %2560 = vmatpush2.msra.mxu0 %v2559
  %2561 = vmatprep.subr.mxu0 0.0
  %v2562 = vand.u32 %v118, 4294901760
  %v2563 = vsub.f32 %v118, %v2562
  %v2564 = vand.u32 %v2563, 4294901760
  %2565 = vmatpush2.msra.mxu0 %v2564
  %2566 = vmatprep.subr.mxu0 0.0
  %v2567 = vand.u32 %v117, 4294901760
  %v2568 = vsub.f32 %v117, %v2567
  %v2569 = vand.u32 %v2568, 4294901760
  %2570 = vmatpush2.msra.mxu0 %v2569
  %2571 = vmatprep.subr.mxu0 0.0
  %v2572 = vand.u32 %v116, 4294901760
  %v2573 = vsub.f32 %v116, %v2572
  %v2574 = vand.u32 %v2573, 4294901760
  %2575 = vmatpush2.msra.mxu0 %v2574
  %2576 = vmatprep.subr.mxu0 0.0
  %v2577 = vand.u32 %v115, 4294901760
  %v2578 = vsub.f32 %v115, %v2577
  %v2579 = vand.u32 %v2578, 4294901760
  %2580 = vmatpush2.msra.mxu0 %v2579
  %2581 = vmatprep.subr.mxu0 0.0
  %v2582 = vand.u32 %v114, 4294901760
  %v2583 = vsub.f32 %v114, %v2582
  %v2584 = vand.u32 %v2583, 4294901760
  %2585 = vmatpush2.msra.mxu0 %v2584
  %2586 = vmatprep.subr.mxu0 0.0
  %v2587 = vand.u32 %v113, 4294901760
  %v2588 = vsub.f32 %v113, %v2587
  %v2589 = vand.u32 %v2588, 4294901760
  %2590 = vmatpush2.msra.mxu0 %v2589
  %2591 = vmatprep.subr.mxu0 0.0
  %v2592 = vand.u32 %v112, 4294901760
  %v2593 = vsub.f32 %v112, %v2592
  %v2594 = vand.u32 %v2593, 4294901760
  %2595 = vmatpush2.msra.mxu0 %v2594
  %2596 = vmatprep.subr.mxu0 0.0
  %v2597 = vand.u32 %v111, 4294901760
  %v2598 = vsub.f32 %v111, %v2597
  %v2599 = vand.u32 %v2598, 4294901760
  %2600 = vmatpush2.msra.mxu0 %v2599
  %2601 = vmatprep.subr.mxu0 0.0
  %v2602 = vand.u32 %v110, 4294901760
  %v2603 = vsub.f32 %v110, %v2602
  %v2604 = vand.u32 %v2603, 4294901760
  %2605 = vmatpush2.msra.mxu0 %v2604
  %v2606 = vand.u32 %v25, 4294901760
  %2607 = vmatprep.mubr.f32.mxu0 %v2606
  %v2608 = vand.u32 %v24, 4294901760
  %2609 = vmatmul.mubr.f32.gmra.mxu0 %v2608
  %v2610 = vpop.f32.mrf.mxu0
  %v2611 = vadd.f32 %v2443, %v2610
  %v2612 = vpop.f32.mrf.mxu0
  %2613 = vdwg.mxu0
  %2614 = vmatprep.subr.mxu0 0.0
  %v2615 = vand.u32 %v109, 4294901760
  %2616 = vmatpush1.msra.mxu0 %v2615
  %2617 = vmatprep.subr.mxu0 0.0
  %v2618 = vand.u32 %v108, 4294901760
  %2619 = vmatpush1.msra.mxu0 %v2618
  %2620 = vmatprep.subr.mxu0 0.0
  %v2621 = vand.u32 %v107, 4294901760
  %2622 = vmatpush1.msra.mxu0 %v2621
  %2623 = vmatprep.subr.mxu0 0.0
  %v2624 = vand.u32 %v106, 4294901760
  %2625 = vmatpush1.msra.mxu0 %v2624
  %2626 = vmatprep.subr.mxu0 0.0
  %v2627 = vand.u32 %v105, 4294901760
  %2628 = vmatpush1.msra.mxu0 %v2627
  %2629 = vmatprep.subr.mxu0 0.0
  %v2630 = vand.u32 %v104, 4294901760
  %2631 = vmatpush1.msra.mxu0 %v2630
  %2632 = vmatprep.subr.mxu0 0.0
  %v2633 = vand.u32 %v103, 4294901760
  %2634 = vmatpush1.msra.mxu0 %v2633
  %2635 = vmatprep.subr.mxu0 0.0
  %v2636 = vand.u32 %v102, 4294901760
  %2637 = vmatpush1.msra.mxu0 %v2636
  %2638 = vmatprep.subr.mxu0 0.0
  %v2639 = vand.u32 %v101, 4294901760
  %2640 = vmatpush1.msra.mxu0 %v2639
  %2641 = vmatprep.subr.mxu0 0.0
  %v2642 = vand.u32 %v100, 4294901760
  %2643 = vmatpush1.msra.mxu0 %v2642
  %2644 = vmatprep.subr.mxu0 0.0
  %v2645 = vand.u32 %v99, 4294901760
  %2646 = vmatpush1.msra.mxu0 %v2645
  %2647 = vmatprep.subr.mxu0 0.0
  %v2648 = vand.u32 %v98, 4294901760
  %2649 = vmatpush1.msra.mxu0 %v2648
  %2650 = vmatprep.subr.mxu0 0.0
  %v2651 = vand.u32 %v97, 4294901760
  %2652 = vmatpush1.msra.mxu0 %v2651
  %2653 = vmatprep.subr.mxu0 0.0
  %v2654 = vand.u32 %v96, 4294901760
  %2655 = vmatpush1.msra.mxu0 %v2654
  %2656 = vmatprep.subr.mxu0 0.0
  %v2657 = vand.u32 %v95, 4294901760
  %2658 = vmatpush1.msra.mxu0 %v2657
  %2659 = vmatprep.subr.mxu0 0.0
  %v2660 = vand.u32 %v94, 4294901760
  %2661 = vmatpush1.msra.mxu0 %v2660
  %2662 = vmatprep.subr.mxu0 0.0
  %v2663 = vand.u32 %v125, 4294901760
  %2664 = vmatpush2.msra.mxu0 %v2663
  %2665 = vmatprep.subr.mxu0 0.0
  %v2666 = vand.u32 %v124, 4294901760
  %2667 = vmatpush2.msra.mxu0 %v2666
  %2668 = vmatprep.subr.mxu0 0.0
  %v2669 = vand.u32 %v123, 4294901760
  %2670 = vmatpush2.msra.mxu0 %v2669
  %2671 = vmatprep.subr.mxu0 0.0
  %v2672 = vand.u32 %v122, 4294901760
  %2673 = vmatpush2.msra.mxu0 %v2672
  %2674 = vmatprep.subr.mxu0 0.0
  %v2675 = vand.u32 %v121, 4294901760
  %2676 = vmatpush2.msra.mxu0 %v2675
  %2677 = vmatprep.subr.mxu0 0.0
  %v2678 = vand.u32 %v120, 4294901760
  %2679 = vmatpush2.msra.mxu0 %v2678
  %2680 = vmatprep.subr.mxu0 0.0
  %v2681 = vand.u32 %v119, 4294901760
  %2682 = vmatpush2.msra.mxu0 %v2681
  %2683 = vmatprep.subr.mxu0 0.0
  %v2684 = vand.u32 %v118, 4294901760
  %2685 = vmatpush2.msra.mxu0 %v2684
  %2686 = vmatprep.subr.mxu0 0.0
  %v2687 = vand.u32 %v117, 4294901760
  %2688 = vmatpush2.msra.mxu0 %v2687
  %2689 = vmatprep.subr.mxu0 0.0
  %v2690 = vand.u32 %v116, 4294901760
  %2691 = vmatpush2.msra.mxu0 %v2690
  %2692 = vmatprep.subr.mxu0 0.0
  %v2693 = vand.u32 %v115, 4294901760
  %2694 = vmatpush2.msra.mxu0 %v2693
  %2695 = vmatprep.subr.mxu0 0.0
  %v2696 = vand.u32 %v114, 4294901760
  %2697 = vmatpush2.msra.mxu0 %v2696
  %2698 = vmatprep.subr.mxu0 0.0
  %v2699 = vand.u32 %v113, 4294901760
  %2700 = vmatpush2.msra.mxu0 %v2699
  %2701 = vmatprep.subr.mxu0 0.0
  %v2702 = vand.u32 %v112, 4294901760
  %2703 = vmatpush2.msra.mxu0 %v2702
  %2704 = vmatprep.subr.mxu0 0.0
  %v2705 = vand.u32 %v111, 4294901760
  %2706 = vmatpush2.msra.mxu0 %v2705
  %2707 = vmatprep.subr.mxu0 0.0
  %v2708 = vand.u32 %v110, 4294901760
  %2709 = vmatpush2.msra.mxu0 %v2708
  %v2710 = vand.u32 %v25, 4294901760
  %2711 = vmatprep.mubr.f32.mxu0 %v2710
  %v2712 = vand.u32 %v24, 4294901760
  %2713 = vmatmul.mubr.f32.gmra.mxu0 %v2712
  %v2714 = vpop.f32.mrf.mxu0
  %v2715 = vadd.f32 %v2611, %v2714
  %v2716 = vpop.f32.mrf.mxu0
  %2717 = vdwg.mxu0
  %2718 = vmatprep.subr.mxu0 0.0
  %2719 = vmatpush1.msra.mxu0 0.0
  %2720 = vmatprep.subr.mxu0 0.0
  %2721 = vmatpush1.msra.mxu0 0.0
  %2722 = vmatprep.subr.mxu0 0.0
  %2723 = vmatpush1.msra.mxu0 0.0
  %2724 = vmatprep.subr.mxu0 0.0
  %2725 = vmatpush1.msra.mxu0 0.0
  %2726 = vmatprep.subr.mxu0 0.0
  %2727 = vmatpush1.msra.mxu0 0.0
  %2728 = vmatprep.subr.mxu0 0.0
  %2729 = vmatpush1.msra.mxu0 0.0
  %2730 = vmatprep.subr.mxu0 0.0
  %2731 = vmatpush1.msra.mxu0 0.0
  %2732 = vmatprep.subr.mxu0 0.0
  %2733 = vmatpush1.msra.mxu0 0.0
  %2734 = vmatprep.subr.mxu0 0.0
  %2735 = vmatpush1.msra.mxu0 0.0
  %2736 = vmatprep.subr.mxu0 0.0
  %2737 = vmatpush1.msra.mxu0 0.0
  %2738 = vmatprep.subr.mxu0 0.0
  %2739 = vmatpush1.msra.mxu0 0.0
  %2740 = vmatprep.subr.mxu0 0.0
  %2741 = vmatpush1.msra.mxu0 0.0
  %2742 = vmatprep.subr.mxu0 0.0
  %2743 = vmatpush1.msra.mxu0 0.0
  %2744 = vmatprep.subr.mxu0 0.0
  %2745 = vmatpush1.msra.mxu0 0.0
  %2746 = vmatprep.subr.mxu0 0.0
  %v2747 = vand.u32 %v127, 4294901760
  %2748 = vmatpush1.msra.mxu0 %v2747
  %2749 = vmatprep.subr.mxu0 0.0
  %v2750 = vand.u32 %v126, 4294901760
  %2751 = vmatpush1.msra.mxu0 %v2750
  %2752 = vmatprep.subr.mxu0 0.0
  %2753 = vmatpush2.msra.mxu0 0.0
  %2754 = vmatprep.subr.mxu0 0.0
  %2755 = vmatpush2.msra.mxu0 0.0
  %2756 = vmatprep.subr.mxu0 0.0
  %2757 = vmatpush2.msra.mxu0 0.0
  %2758 = vmatprep.subr.mxu0 0.0
  %2759 = vmatpush2.msra.mxu0 0.0
  %2760 = vmatprep.subr.mxu0 0.0
  %2761 = vmatpush2.msra.mxu0 0.0
  %2762 = vmatprep.subr.mxu0 0.0
  %2763 = vmatpush2.msra.mxu0 0.0
  %2764 = vmatprep.subr.mxu0 0.0
  %2765 = vmatpush2.msra.mxu0 0.0
  %2766 = vmatprep.subr.mxu0 0.0
  %2767 = vmatpush2.msra.mxu0 0.0
  %2768 = vmatprep.subr.mxu0 0.0
  %2769 = vmatpush2.msra.mxu0 0.0
  %2770 = vmatprep.subr.mxu0 0.0
  %2771 = vmatpush2.msra.mxu0 0.0
  %2772 = vmatprep.subr.mxu0 0.0
  %2773 = vmatpush2.msra.mxu0 0.0
  %2774 = vmatprep.subr.mxu0 0.0
  %2775 = vmatpush2.msra.mxu0 0.0
  %2776 = vmatprep.subr.mxu0 0.0
  %2777 = vmatpush2.msra.mxu0 0.0
  %2778 = vmatprep.subr.mxu0 0.0
  %2779 = vmatpush2.msra.mxu0 0.0
  %2780 = vmatprep.subr.mxu0 0.0
  %2781 = vmatpush2.msra.mxu0 0.0
  %2782 = vmatprep.subr.mxu0 0.0
  %2783 = vmatpush2.msra.mxu0 0.0
  %2784 = vmatprep.mubr.f32.mxu0 0.0
  %v2785 = vand.u32 %v130, 4294901760
  %v2786 = vsub.f32 %v130, %v2785
  %v2787 = vand.u32 %v2786, 4294901760
  %v2788 = vsub.f32 %v2786, %v2787
  %v2789 = vand.u32 %v2788, 4294901760
  %2790 = vmatmul.mubr.f32.gmra.mxu0 %v2789
  %v2791 = vpop.f32.mrf.mxu0
  %v2792 = vadd.f32 %v2715, %v2791
  %v2793 = vpop.f32.mrf.mxu0
  %2794 = vdwg.mxu0
  %2795 = vmatprep.subr.mxu0 0.0
  %2796 = vmatpush1.msra.mxu0 0.0
  %2797 = vmatprep.subr.mxu0 0.0
  %2798 = vmatpush1.msra.mxu0 0.0
  %2799 = vmatprep.subr.mxu0 0.0
  %2800 = vmatpush1.msra.mxu0 0.0
  %2801 = vmatprep.subr.mxu0 0.0
  %2802 = vmatpush1.msra.mxu0 0.0
  %2803 = vmatprep.subr.mxu0 0.0
  %2804 = vmatpush1.msra.mxu0 0.0
  %2805 = vmatprep.subr.mxu0 0.0
  %2806 = vmatpush1.msra.mxu0 0.0
  %2807 = vmatprep.subr.mxu0 0.0
  %2808 = vmatpush1.msra.mxu0 0.0
  %2809 = vmatprep.subr.mxu0 0.0
  %2810 = vmatpush1.msra.mxu0 0.0
  %2811 = vmatprep.subr.mxu0 0.0
  %2812 = vmatpush1.msra.mxu0 0.0
  %2813 = vmatprep.subr.mxu0 0.0
  %2814 = vmatpush1.msra.mxu0 0.0
  %2815 = vmatprep.subr.mxu0 0.0
  %2816 = vmatpush1.msra.mxu0 0.0
  %2817 = vmatprep.subr.mxu0 0.0
  %2818 = vmatpush1.msra.mxu0 0.0
  %2819 = vmatprep.subr.mxu0 0.0
  %2820 = vmatpush1.msra.mxu0 0.0
  %2821 = vmatprep.subr.mxu0 0.0
  %2822 = vmatpush1.msra.mxu0 0.0
  %2823 = vmatprep.subr.mxu0 0.0
  %v2824 = vand.u32 %v127, 4294901760
  %v2825 = vsub.f32 %v127, %v2824
  %v2826 = vand.u32 %v2825, 4294901760
  %v2827 = vsub.f32 %v2825, %v2826
  %v2828 = vand.u32 %v2827, 4294901760
  %2829 = vmatpush1.msra.mxu0 %v2828
  %2830 = vmatprep.subr.mxu0 0.0
  %v2831 = vand.u32 %v126, 4294901760
  %v2832 = vsub.f32 %v126, %v2831
  %v2833 = vand.u32 %v2832, 4294901760
  %v2834 = vsub.f32 %v2832, %v2833
  %v2835 = vand.u32 %v2834, 4294901760
  %2836 = vmatpush1.msra.mxu0 %v2835
  %2837 = vmatprep.subr.mxu0 0.0
  %2838 = vmatpush2.msra.mxu0 0.0
  %2839 = vmatprep.subr.mxu0 0.0
  %2840 = vmatpush2.msra.mxu0 0.0
  %2841 = vmatprep.subr.mxu0 0.0
  %2842 = vmatpush2.msra.mxu0 0.0
  %2843 = vmatprep.subr.mxu0 0.0
  %2844 = vmatpush2.msra.mxu0 0.0
  %2845 = vmatprep.subr.mxu0 0.0
  %2846 = vmatpush2.msra.mxu0 0.0
  %2847 = vmatprep.subr.mxu0 0.0
  %2848 = vmatpush2.msra.mxu0 0.0
  %2849 = vmatprep.subr.mxu0 0.0
  %2850 = vmatpush2.msra.mxu0 0.0
  %2851 = vmatprep.subr.mxu0 0.0
  %2852 = vmatpush2.msra.mxu0 0.0
  %2853 = vmatprep.subr.mxu0 0.0
  %2854 = vmatpush2.msra.mxu0 0.0
  %2855 = vmatprep.subr.mxu0 0.0
  %2856 = vmatpush2.msra.mxu0 0.0
  %2857 = vmatprep.subr.mxu0 0.0
  %2858 = vmatpush2.msra.mxu0 0.0
  %2859 = vmatprep.subr.mxu0 0.0
  %2860 = vmatpush2.msra.mxu0 0.0
  %2861 = vmatprep.subr.mxu0 0.0
  %2862 = vmatpush2.msra.mxu0 0.0
  %2863 = vmatprep.subr.mxu0 0.0
  %2864 = vmatpush2.msra.mxu0 0.0
  %2865 = vmatprep.subr.mxu0 0.0
  %2866 = vmatpush2.msra.mxu0 0.0
  %2867 = vmatprep.subr.mxu0 0.0
  %2868 = vmatpush2.msra.mxu0 0.0
  %2869 = vmatprep.mubr.f32.mxu0 0.0
  %v2870 = vand.u32 %v130, 4294901760
  %2871 = vmatmul.mubr.f32.gmra.mxu0 %v2870
  %v2872 = vpop.f32.mrf.mxu0
  %v2873 = vadd.f32 %v2792, %v2872
  %v2874 = vpop.f32.mrf.mxu0
  %2875 = vdwg.mxu0
  %2876 = vmatprep.subr.mxu0 0.0
  %2877 = vmatpush1.msra.mxu0 0.0
  %2878 = vmatprep.subr.mxu0 0.0
  %2879 = vmatpush1.msra.mxu0 0.0
  %2880 = vmatprep.subr.mxu0 0.0
  %2881 = vmatpush1.msra.mxu0 0.0
  %2882 = vmatprep.subr.mxu0 0.0
  %2883 = vmatpush1.msra.mxu0 0.0
  %2884 = vmatprep.subr.mxu0 0.0
  %2885 = vmatpush1.msra.mxu0 0.0
  %2886 = vmatprep.subr.mxu0 0.0
  %2887 = vmatpush1.msra.mxu0 0.0
  %2888 = vmatprep.subr.mxu0 0.0
  %2889 = vmatpush1.msra.mxu0 0.0
  %2890 = vmatprep.subr.mxu0 0.0
  %2891 = vmatpush1.msra.mxu0 0.0
  %2892 = vmatprep.subr.mxu0 0.0
  %2893 = vmatpush1.msra.mxu0 0.0
  %2894 = vmatprep.subr.mxu0 0.0
  %2895 = vmatpush1.msra.mxu0 0.0
  %2896 = vmatprep.subr.mxu0 0.0
  %2897 = vmatpush1.msra.mxu0 0.0
  %2898 = vmatprep.subr.mxu0 0.0
  %2899 = vmatpush1.msra.mxu0 0.0
  %2900 = vmatprep.subr.mxu0 0.0
  %2901 = vmatpush1.msra.mxu0 0.0
  %2902 = vmatprep.subr.mxu0 0.0
  %2903 = vmatpush1.msra.mxu0 0.0
  %2904 = vmatprep.subr.mxu0 0.0
  %v2905 = vand.u32 %v127, 4294901760
  %v2906 = vsub.f32 %v127, %v2905
  %2907 = vmatpush1.msra.mxu0 %v2906
  %2908 = vmatprep.subr.mxu0 0.0
  %v2909 = vand.u32 %v126, 4294901760
  %v2910 = vsub.f32 %v126, %v2909
  %2911 = vmatpush1.msra.mxu0 %v2910
  %2912 = vmatprep.subr.mxu0 0.0
  %2913 = vmatpush2.msra.mxu0 0.0
  %2914 = vmatprep.subr.mxu0 0.0
  %2915 = vmatpush2.msra.mxu0 0.0
  %2916 = vmatprep.subr.mxu0 0.0
  %2917 = vmatpush2.msra.mxu0 0.0
  %2918 = vmatprep.subr.mxu0 0.0
  %2919 = vmatpush2.msra.mxu0 0.0
  %2920 = vmatprep.subr.mxu0 0.0
  %2921 = vmatpush2.msra.mxu0 0.0
  %2922 = vmatprep.subr.mxu0 0.0
  %2923 = vmatpush2.msra.mxu0 0.0
  %2924 = vmatprep.subr.mxu0 0.0
  %2925 = vmatpush2.msra.mxu0 0.0
  %2926 = vmatprep.subr.mxu0 0.0
  %2927 = vmatpush2.msra.mxu0 0.0
  %2928 = vmatprep.subr.mxu0 0.0
  %2929 = vmatpush2.msra.mxu0 0.0
  %2930 = vmatprep.subr.mxu0 0.0
  %2931 = vmatpush2.msra.mxu0 0.0
  %2932 = vmatprep.subr.mxu0 0.0
  %2933 = vmatpush2.msra.mxu0 0.0
  %2934 = vmatprep.subr.mxu0 0.0
  %2935 = vmatpush2.msra.mxu0 0.0
  %2936 = vmatprep.subr.mxu0 0.0
  %2937 = vmatpush2.msra.mxu0 0.0
  %2938 = vmatprep.subr.mxu0 0.0
  %2939 = vmatpush2.msra.mxu0 0.0
  %2940 = vmatprep.subr.mxu0 0.0
  %2941 = vmatpush2.msra.mxu0 0.0
  %2942 = vmatprep.subr.mxu0 0.0
  %2943 = vmatpush2.msra.mxu0 0.0
  %2944 = vmatprep.mubr.f32.mxu0 0.0
  %v2945 = vand.u32 %v130, 4294901760
  %v2946 = vsub.f32 %v130, %v2945
  %2947 = vmatmul.mubr.f32.gmra.mxu0 %v2946
  %v2948 = vpop.f32.mrf.mxu0
  %v2949 = vadd.f32 %v2873, %v2948
  %v2950 = vpop.f32.mrf.mxu0
  %2951 = vdwg.mxu0
  %2952 = vmatprep.subr.mxu0 0.0
  %2953 = vmatpush1.msra.mxu0 0.0
  %2954 = vmatprep.subr.mxu0 0.0
  %2955 = vmatpush1.msra.mxu0 0.0
  %2956 = vmatprep.subr.mxu0 0.0
  %2957 = vmatpush1.msra.mxu0 0.0
  %2958 = vmatprep.subr.mxu0 0.0
  %2959 = vmatpush1.msra.mxu0 0.0
  %2960 = vmatprep.subr.mxu0 0.0
  %2961 = vmatpush1.msra.mxu0 0.0
  %2962 = vmatprep.subr.mxu0 0.0
  %2963 = vmatpush1.msra.mxu0 0.0
  %2964 = vmatprep.subr.mxu0 0.0
  %2965 = vmatpush1.msra.mxu0 0.0
  %2966 = vmatprep.subr.mxu0 0.0
  %2967 = vmatpush1.msra.mxu0 0.0
  %2968 = vmatprep.subr.mxu0 0.0
  %2969 = vmatpush1.msra.mxu0 0.0
  %2970 = vmatprep.subr.mxu0 0.0
  %2971 = vmatpush1.msra.mxu0 0.0
  %2972 = vmatprep.subr.mxu0 0.0
  %2973 = vmatpush1.msra.mxu0 0.0
  %2974 = vmatprep.subr.mxu0 0.0
  %2975 = vmatpush1.msra.mxu0 0.0
  %2976 = vmatprep.subr.mxu0 0.0
  %2977 = vmatpush1.msra.mxu0 0.0
  %2978 = vmatprep.subr.mxu0 0.0
  %2979 = vmatpush1.msra.mxu0 0.0
  %2980 = vmatprep.subr.mxu0 0.0
  %v2981 = vand.u32 %v127, 4294901760
  %2982 = vmatpush1.msra.mxu0 %v2981
  %2983 = vmatprep.subr.mxu0 0.0
  %v2984 = vand.u32 %v126, 4294901760
  %2985 = vmatpush1.msra.mxu0 %v2984
  %2986 = vmatprep.subr.mxu0 0.0
  %2987 = vmatpush2.msra.mxu0 0.0
  %2988 = vmatprep.subr.mxu0 0.0
  %2989 = vmatpush2.msra.mxu0 0.0
  %2990 = vmatprep.subr.mxu0 0.0
  %2991 = vmatpush2.msra.mxu0 0.0
  %2992 = vmatprep.subr.mxu0 0.0
  %2993 = vmatpush2.msra.mxu0 0.0
  %2994 = vmatprep.subr.mxu0 0.0
  %2995 = vmatpush2.msra.mxu0 0.0
  %2996 = vmatprep.subr.mxu0 0.0
  %2997 = vmatpush2.msra.mxu0 0.0
  %2998 = vmatprep.subr.mxu0 0.0
  %2999 = vmatpush2.msra.mxu0 0.0
  %3000 = vmatprep.subr.mxu0 0.0
  %3001 = vmatpush2.msra.mxu0 0.0
  %3002 = vmatprep.subr.mxu0 0.0
  %3003 = vmatpush2.msra.mxu0 0.0
  %3004 = vmatprep.subr.mxu0 0.0
  %3005 = vmatpush2.msra.mxu0 0.0
  %3006 = vmatprep.subr.mxu0 0.0
  %3007 = vmatpush2.msra.mxu0 0.0
  %3008 = vmatprep.subr.mxu0 0.0
  %3009 = vmatpush2.msra.mxu0 0.0
  %3010 = vmatprep.subr.mxu0 0.0
  %3011 = vmatpush2.msra.mxu0 0.0
  %3012 = vmatprep.subr.mxu0 0.0
  %3013 = vmatpush2.msra.mxu0 0.0
  %3014 = vmatprep.subr.mxu0 0.0
  %3015 = vmatpush2.msra.mxu0 0.0
  %3016 = vmatprep.subr.mxu0 0.0
  %3017 = vmatpush2.msra.mxu0 0.0
  %3018 = vmatprep.mubr.f32.mxu0 0.0
  %v3019 = vand.u32 %v130, 4294901760
  %v3020 = vsub.f32 %v130, %v3019
  %v3021 = vand.u32 %v3020, 4294901760
  %3022 = vmatmul.mubr.f32.gmra.mxu0 %v3021
  %v3023 = vpop.f32.mrf.mxu0
  %v3024 = vadd.f32 %v2949, %v3023
  %v3025 = vpop.f32.mrf.mxu0
  %3026 = vdwg.mxu0
  %3027 = vmatprep.subr.mxu0 0.0
  %3028 = vmatpush1.msra.mxu0 0.0
  %3029 = vmatprep.subr.mxu0 0.0
  %3030 = vmatpush1.msra.mxu0 0.0
  %3031 = vmatprep.subr.mxu0 0.0
  %3032 = vmatpush1.msra.mxu0 0.0
  %3033 = vmatprep.subr.mxu0 0.0
  %3034 = vmatpush1.msra.mxu0 0.0
  %3035 = vmatprep.subr.mxu0 0.0
  %3036 = vmatpush1.msra.mxu0 0.0
  %3037 = vmatprep.subr.mxu0 0.0
  %3038 = vmatpush1.msra.mxu0 0.0
  %3039 = vmatprep.subr.mxu0 0.0
  %3040 = vmatpush1.msra.mxu0 0.0
  %3041 = vmatprep.subr.mxu0 0.0
  %3042 = vmatpush1.msra.mxu0 0.0
  %3043 = vmatprep.subr.mxu0 0.0
  %3044 = vmatpush1.msra.mxu0 0.0
  %3045 = vmatprep.subr.mxu0 0.0
  %3046 = vmatpush1.msra.mxu0 0.0
  %3047 = vmatprep.subr.mxu0 0.0
  %3048 = vmatpush1.msra.mxu0 0.0
  %3049 = vmatprep.subr.mxu0 0.0
  %3050 = vmatpush1.msra.mxu0 0.0
  %3051 = vmatprep.subr.mxu0 0.0
  %3052 = vmatpush1.msra.mxu0 0.0
  %3053 = vmatprep.subr.mxu0 0.0
  %3054 = vmatpush1.msra.mxu0 0.0
  %3055 = vmatprep.subr.mxu0 0.0
  %v3056 = vand.u32 %v127, 4294901760
  %v3057 = vsub.f32 %v127, %v3056
  %v3058 = vand.u32 %v3057, 4294901760
  %3059 = vmatpush1.msra.mxu0 %v3058
  %3060 = vmatprep.subr.mxu0 0.0
  %v3061 = vand.u32 %v126, 4294901760
  %v3062 = vsub.f32 %v126, %v3061
  %v3063 = vand.u32 %v3062, 4294901760
  %3064 = vmatpush1.msra.mxu0 %v3063
  %3065 = vmatprep.subr.mxu0 0.0
  %3066 = vmatpush2.msra.mxu0 0.0
  %3067 = vmatprep.subr.mxu0 0.0
  %3068 = vmatpush2.msra.mxu0 0.0
  %3069 = vmatprep.subr.mxu0 0.0
  %3070 = vmatpush2.msra.mxu0 0.0
  %3071 = vmatprep.subr.mxu0 0.0
  %3072 = vmatpush2.msra.mxu0 0.0
  %3073 = vmatprep.subr.mxu0 0.0
  %3074 = vmatpush2.msra.mxu0 0.0
  %3075 = vmatprep.subr.mxu0 0.0
  %3076 = vmatpush2.msra.mxu0 0.0
  %3077 = vmatprep.subr.mxu0 0.0
  %3078 = vmatpush2.msra.mxu0 0.0
  %3079 = vmatprep.subr.mxu0 0.0
  %3080 = vmatpush2.msra.mxu0 0.0
  %3081 = vmatprep.subr.mxu0 0.0
  %3082 = vmatpush2.msra.mxu0 0.0
  %3083 = vmatprep.subr.mxu0 0.0
  %3084 = vmatpush2.msra.mxu0 0.0
  %3085 = vmatprep.subr.mxu0 0.0
  %3086 = vmatpush2.msra.mxu0 0.0
  %3087 = vmatprep.subr.mxu0 0.0
  %3088 = vmatpush2.msra.mxu0 0.0
  %3089 = vmatprep.subr.mxu0 0.0
  %3090 = vmatpush2.msra.mxu0 0.0
  %3091 = vmatprep.subr.mxu0 0.0
  %3092 = vmatpush2.msra.mxu0 0.0
  %3093 = vmatprep.subr.mxu0 0.0
  %3094 = vmatpush2.msra.mxu0 0.0
  %3095 = vmatprep.subr.mxu0 0.0
  %3096 = vmatpush2.msra.mxu0 0.0
  %3097 = vmatprep.mubr.f32.mxu0 0.0
  %v3098 = vand.u32 %v130, 4294901760
  %3099 = vmatmul.mubr.f32.gmra.mxu0 %v3098
  %v3100 = vpop.f32.mrf.mxu0
  %v3101 = vadd.f32 %v3024, %v3100
  %v3102 = vpop.f32.mrf.mxu0
  %3103 = vdwg.mxu0
  %3104 = vmatprep.subr.mxu0 0.0
  %3105 = vmatpush1.msra.mxu0 0.0
  %3106 = vmatprep.subr.mxu0 0.0
  %3107 = vmatpush1.msra.mxu0 0.0
  %3108 = vmatprep.subr.mxu0 0.0
  %3109 = vmatpush1.msra.mxu0 0.0
  %3110 = vmatprep.subr.mxu0 0.0
  %3111 = vmatpush1.msra.mxu0 0.0
  %3112 = vmatprep.subr.mxu0 0.0
  %3113 = vmatpush1.msra.mxu0 0.0
  %3114 = vmatprep.subr.mxu0 0.0
  %3115 = vmatpush1.msra.mxu0 0.0
  %3116 = vmatprep.subr.mxu0 0.0
  %3117 = vmatpush1.msra.mxu0 0.0
  %3118 = vmatprep.subr.mxu0 0.0
  %3119 = vmatpush1.msra.mxu0 0.0
  %3120 = vmatprep.subr.mxu0 0.0
  %3121 = vmatpush1.msra.mxu0 0.0
  %3122 = vmatprep.subr.mxu0 0.0
  %3123 = vmatpush1.msra.mxu0 0.0
  %3124 = vmatprep.subr.mxu0 0.0
  %3125 = vmatpush1.msra.mxu0 0.0
  %3126 = vmatprep.subr.mxu0 0.0
  %3127 = vmatpush1.msra.mxu0 0.0
  %3128 = vmatprep.subr.mxu0 0.0
  %3129 = vmatpush1.msra.mxu0 0.0
  %3130 = vmatprep.subr.mxu0 0.0
  %3131 = vmatpush1.msra.mxu0 0.0
  %3132 = vmatprep.subr.mxu0 0.0
  %v3133 = vand.u32 %v127, 4294901760
  %3134 = vmatpush1.msra.mxu0 %v3133
  %3135 = vmatprep.subr.mxu0 0.0
  %v3136 = vand.u32 %v126, 4294901760
  %3137 = vmatpush1.msra.mxu0 %v3136
  %3138 = vmatprep.subr.mxu0 0.0
  %3139 = vmatpush2.msra.mxu0 0.0
  %3140 = vmatprep.subr.mxu0 0.0
  %3141 = vmatpush2.msra.mxu0 0.0
  %3142 = vmatprep.subr.mxu0 0.0
  %3143 = vmatpush2.msra.mxu0 0.0
  %3144 = vmatprep.subr.mxu0 0.0
  %3145 = vmatpush2.msra.mxu0 0.0
  %3146 = vmatprep.subr.mxu0 0.0
  %3147 = vmatpush2.msra.mxu0 0.0
  %3148 = vmatprep.subr.mxu0 0.0
  %3149 = vmatpush2.msra.mxu0 0.0
  %3150 = vmatprep.subr.mxu0 0.0
  %3151 = vmatpush2.msra.mxu0 0.0
  %3152 = vmatprep.subr.mxu0 0.0
  %3153 = vmatpush2.msra.mxu0 0.0
  %3154 = vmatprep.subr.mxu0 0.0
  %3155 = vmatpush2.msra.mxu0 0.0
  %3156 = vmatprep.subr.mxu0 0.0
  %3157 = vmatpush2.msra.mxu0 0.0
  %3158 = vmatprep.subr.mxu0 0.0
  %3159 = vmatpush2.msra.mxu0 0.0
  %3160 = vmatprep.subr.mxu0 0.0
  %3161 = vmatpush2.msra.mxu0 0.0
  %3162 = vmatprep.subr.mxu0 0.0
  %3163 = vmatpush2.msra.mxu0 0.0
  %3164 = vmatprep.subr.mxu0 0.0
  %3165 = vmatpush2.msra.mxu0 0.0
  %3166 = vmatprep.subr.mxu0 0.0
  %3167 = vmatpush2.msra.mxu0 0.0
  %3168 = vmatprep.subr.mxu0 0.0
  %3169 = vmatpush2.msra.mxu0 0.0
  %3170 = vmatprep.mubr.f32.mxu0 0.0
  %v3171 = vand.u32 %v130, 4294901760
  %3172 = vmatmul.mubr.f32.gmra.mxu0 %v3171
  %v3173 = vpop.f32.mrf.mxu0
  %v3174 = vadd.f32 %v3101, %v3173
  %v3175 = vpop.f32.mrf.mxu0
  %3176 = vdwg.mxu0
  %v3177 = vmul.f32 %v20, %v20
  %v3178 = vmul.f32 %v21, %v21
  %v3179 = vmul.f32 %v22, %v22
  %v3180 = vmul.f32 %v23, %v23
  %v3181 = vmul.f32 %v24, %v24
  %v3182 = vmul.f32 %v25, %v25
  %v3183 = vmul.f32 %v26, %v26
  %v3184 = vadd.f32 %v3177, %v3178
  %v3185 = vadd.f32 %v3184, %v3179
  %v3186 = vadd.f32 %v3185, %v3180
  %v3187 = vadd.f32 %v3186, %v3181
  %v3188 = vadd.f32 %v3187, %v3182
  %v3189 = vsel %vm128, %v3183, 0.0
  %v3190 = vadd.f32 %v3188, %v3189
  %3191 = vadd.xlane.f32.xlu0 %v3190
  %v3192 = vpop.xlane.xlu0 %3191
  %v3193 = vmul.f32 %v3192, 0.5
  %v3194 = vsub.f32 %v3174, %v3193
  %v3196 = vlaneseq
  %v3197 = vshrl.u32 %v3196, 7
  %v3198 = vsub.s32 0, %v3197
  %v3199 = vrot.slane %v28, %v3198
  %v3201 = vadd.f32 %v3194, %v3199
  %v3203 = vlaneseq
  %v3204 = vshrl.u32 %v3203, 7
  %v3205 = vsub.s32 0, %v3204
  %v3206 = vrot.slane %v29, %v3205
  %v3208 = vadd.f32 %v3201, %v3206
  %3209 = vmax.xlane.f32.xlu0 %v3208
  %v3210 = vpop.xlane.xlu0 %3209
  %v3211 = vsub.f32 %v3208, %v3210
  %v3212 = vmul.f32 %v3211, 1.442695
  %v3213 = vpow.pop %v3212
  %3214 = vadd.xlane.f32.xlu0 %v3213
  %v3215 = vpop.xlane.xlu0 %3214
  %v3216 = vlog2.pop %v3215
  %v3217 = vmul.f32 %v3216, 0.6931472
  %v3218 = vadd.f32 %v3217, %v3210
  %v3219 = vlaneseq
  %v3220 = vand.u32 %v3219, 127
  %3221 = vset.pattern.permute.xlu0 0
  %3222 = vperm.xlu0 %3221, %v27
  %v3223 = vpop.permute.xlu0 %3222
  %vm3224 = vcmp.eq.s32.totalorder %v3220, %v3223
  %v3225 = vsel %vm3224, %v3201, 0.0
  %3226 = vadd.xlane.f32.xlu0 %v3225
  %v3227 = vpop.xlane.xlu0 %3226
  %v3228 = vsub.f32 0.0, %v3218
  %v3229 = vmul.f32 %v3228, 0.0012755102
  %v3230 = vsub.f32 0.0, %v3227
  %v3231 = vmul.f32 %v3230, 0.0012755102
  %v3232 = vsub.f32 %v3227, %v3218
  %vm3233 = vcmp.lt.s32.totalorder %v3220, 10
  %vm3234 = vcmp.eq.s32.totalorder %v3220, 10
  %vm3235 = vcmp.eq.s32.totalorder %v3220, 11
  %vm3236 = vcmp.eq.s32.totalorder %v3220, 12
  %v3237 = vsel %vm3236, %v3232, 0.0
  %v3238 = vsel %vm3235, %v3231, %v3237
  %v3239 = vsel %vm3234, %v3229, %v3238
  %v3240 = vsel %vm3233, %v3201, %v3239
  %3241 = vst [vmem:[%s5] sm:$0xff] %v3240
  // Predicated region
  $region22: #{generative_classifier_forward.1} parent=0 // pred_check
    _
  $region23: #{generative_classifier_forward.1} parent=0 // pred_check_branch
    %3243 = sbr.rel (0) target = $region25
  $region24: #{generative_classifier_forward.1} parent=0 // pred_region
    _
  $region25: #{generative_classifier_forward.1} parent=0 // pred_fallthru
    _
  // Predicated region
  $region26: #{generative_classifier_forward.1} parent=0 // pred_check
    _
  $region27: #{generative_classifier_forward.1} parent=0 // pred_check_branch
    %3245 = sbr.rel (0) target = $region29
  $region28: #{generative_classifier_forward.1} parent=0 // pred_region
    _
  $region29: #{generative_classifier_forward.1} parent=0 // pred_fallthru
    _

</llo_original>
